<compile_context>
chip_gen: v6e
topology: v6e:2x2x1
jax: 0.10.0
libtpu: 0.0.40
codegen_flags: <defaults>
</compile_context>

<pallas_src>
import functools

import jax
import jax.numpy as jnp
from jax.experimental import pallas as pl
from jax.experimental.pallas import tpu as pltpu

VMEM = pltpu.MemorySpace.VMEM
BN_EPS = 1e-5
KD_FOLD = 11                       # all depth branches fold into 11 taps
MXU_DTYPE = jnp.float32            # set jnp.bfloat16 for large inputs
TILE_M_MAX = 1024                  # max streamed M tile (lane-aligned)
_VMEM_LIMIT = 32 * 1024 * 1024
_SQRT1_2 = 0.7071067811865476


def _round_up(x, m):
    return ((x + m - 1) // m) * m


def _pick_tile_m(M):
    """Pick an M tile: single block for small M, otherwise a 128-aligned tile
    that splits M into (ideally 2) balanced pieces for megacore."""
    if M <= 512:
        return M, M
    tm = min(TILE_M_MAX, _round_up((M + 1) // 2, 128))
    return tm, _round_up(M, tm)


# ----------------------------------------------------------------------------
# Pallas kernel 1: gridded, lane-dense matmul  o = act(W @ P + b)
#   W: (C, K) resident, P: (K, tm) streamed over M, o: (C, tm)
# ----------------------------------------------------------------------------
def _mm_bias_act_kernel(w_ref, b_ref, p_ref, o_ref, *, act):
    acc = jnp.dot(w_ref[...], p_ref[...], preferred_element_type=jnp.float32)
    acc = acc + b_ref[...]
    if act == "relu":
        acc = jnp.maximum(acc, 0.0)
    o_ref[...] = acc.astype(o_ref.dtype)


def conv_matmul(w_mat, bias, patches, act="none"):
    C, K = w_mat.shape
    M = patches.shape[1]
    tm, m_pad = _pick_tile_m(M)
    if m_pad != M:
        patches = jnp.pad(patches, ((0, 0), (0, m_pad - M)))
    out = pl.pallas_call(
        functools.partial(_mm_bias_act_kernel, act=act),
        out_shape=jax.ShapeDtypeStruct((C, m_pad), jnp.float32),
        grid=(m_pad // tm,),
        in_specs=[
            pl.BlockSpec((C, K), lambda i: (0, 0)),    # weights: resident
            pl.BlockSpec((C, 1), lambda i: (0, 0)),    # bias:    resident
            pl.BlockSpec((K, tm), lambda i: (0, i)),   # patches: streamed over M
        ],
        out_specs=pl.BlockSpec((C, tm), lambda i: (0, i)),
        compiler_params=pltpu.CompilerParams(
            dimension_semantics=("parallel",),
            vmem_limit_bytes=_VMEM_LIMIT,
        ),
    )(w_mat.astype(MXU_DTYPE),
      bias.reshape(C, 1).astype(jnp.float32),
      patches.astype(MXU_DTYPE))
    return out[:, :M] if m_pad != M else out


# ----------------------------------------------------------------------------
# Pallas kernels 2/3: folded depth-conv matmul + BatchNorm (training-mode
# batch stats: one-pass sum / sum-of-squares) + ReLU, optionally followed by
# the fused 1x1x1 conv4 + exact-erf GELU tail.  Single full-M block because
# the batch statistics need the whole extent; layout stays lane-dense (C, M).
# TODO(synk): for production-scale M, split into a gridded matmul pass with a
# (C, 2) stats accumulator followed by a gridded normalize pass.
# ----------------------------------------------------------------------------
def _bn_stats(s):
    m = s.shape[1]
    mean = jnp.sum(s, axis=1, keepdims=True) * (1.0 / m)
    ex2 = jnp.sum(s * s, axis=1, keepdims=True) * (1.0 / m)
    var = ex2 - mean * mean          # biased (training-mode) variance
    return mean, var


def _fold_bn_relu_kernel(w_ref, b_ref, g_ref, be_ref, p_ref, o_ref):
    s = jnp.dot(w_ref[...], p_ref[...], preferred_element_type=jnp.float32)
    s = s + b_ref[...]
    mean, var = _bn_stats(s)
    scale = jax.lax.rsqrt(var + BN_EPS) * g_ref[...]
    s = (s - mean) * scale + be_ref[...]
    o_ref[...] = jnp.maximum(s, 0.0).astype(o_ref.dtype)


def _erf_poly(z):
    # Abramowitz & Stegun 7.1.26 (|err| <= 1.5e-7): exact-erf GELU in-kernel
    # using only mul/add/exp (EUP slot) — lax.erf has no guaranteed Mosaic
    # lowering on all TPU generations.
    az = jnp.abs(z)
    t = 1.0 / (1.0 + 0.3275911 * az)
    poly = t * (0.254829592 + t * (-0.284496736 + t * (1.421413741
               + t * (-1.453152027 + t * 1.061405429))))
    e = 1.0 - poly * jnp.exp(-az * az)
    return jnp.where(z >= 0.0, e, -e)


def _fold_bn_relu_conv_gelu_kernel(w_ref, b_ref, g_ref, be_ref,
                                   w2_ref, b2_ref, p_ref, o_ref):
    s = jnp.dot(w_ref[...], p_ref[...], preferred_element_type=jnp.float32)
    s = s + b_ref[...]
    mean, var = _bn_stats(s)
    scale = jax.lax.rsqrt(var + BN_EPS) * g_ref[...]
    s = jnp.maximum((s - mean) * scale + be_ref[...], 0.0)
    y = jnp.dot(w2_ref[...], s, preferred_element_type=jnp.float32) + b2_ref[...]
    o_ref[...] = (0.5 * y * (1.0 + _erf_poly(y * _SQRT1_2))).astype(o_ref.dtype)


def fold_bn_relu(w_mat, bias, gamma, beta, patches):
    C = w_mat.shape[0]
    M = patches.shape[1]
    return pl.pallas_call(
        _fold_bn_relu_kernel,
        out_shape=jax.ShapeDtypeStruct((C, M), jnp.float32),
        in_specs=[pl.BlockSpec(memory_space=VMEM)] * 5,
        out_specs=pl.BlockSpec(memory_space=VMEM),
        compiler_params=pltpu.CompilerParams(vmem_limit_bytes=_VMEM_LIMIT),
    )(w_mat.astype(MXU_DTYPE), bias.reshape(C, 1).astype(jnp.float32),
      gamma.reshape(C, 1).astype(jnp.float32),
      beta.reshape(C, 1).astype(jnp.float32),
      patches.astype(MXU_DTYPE))


def fold_bn_relu_conv_gelu(w_mat, bias, gamma, beta, w2, b2, patches):
    C = w_mat.shape[0]
    C2 = w2.shape[0]
    M = patches.shape[1]
    return pl.pallas_call(
        _fold_bn_relu_conv_gelu_kernel,
        out_shape=jax.ShapeDtypeStruct((C2, M), jnp.float32),
        in_specs=[pl.BlockSpec(memory_space=VMEM)] * 7,
        out_specs=pl.BlockSpec(memory_space=VMEM),
        compiler_params=pltpu.CompilerParams(vmem_limit_bytes=_VMEM_LIMIT),
    )(w_mat.astype(MXU_DTYPE), bias.reshape(C, 1).astype(jnp.float32),
      gamma.reshape(C, 1).astype(jnp.float32),
      beta.reshape(C, 1).astype(jnp.float32),
      w2.astype(jnp.float32), b2.reshape(C2, 1).astype(jnp.float32),
      patches.astype(MXU_DTYPE))


# ----------------------------------------------------------------------------
# Plain-JAX glue: transposed (K, M) im2col and algebraic branch folding.
# TODO(synk): move the strided window extraction of conv1/conv_add into the
# Pallas kernels (grid over output positions) to avoid the im2col expansion
# at large inputs; at these shapes the XLA-glue im2col is a few hundred KB.
# ----------------------------------------------------------------------------
def im2col3d_T(x, ksize, stride, pad):
    """x: (Cin, B, D, H, W) -> patches (kd*kh*kw*Cin, B*Do*Ho*Wo)."""
    Cin, B, D, H, W = x.shape
    kd, kh, kw = ksize
    sd, sh, sw = stride
    pd, ph, pw = pad
    xp = jnp.pad(x, ((0, 0), (0, 0), (pd, pd), (ph, ph), (pw, pw)))
    Do = (D + 2 * pd - kd) // sd + 1
    Ho = (H + 2 * ph - kh) // sh + 1
    Wo = (W + 2 * pw - kw) // sw + 1
    cols = []
    for i in range(kd):
        for j in range(kh):
            for k in range(kw):
                cols.append(xp[:, :, i:i + (Do - 1) * sd + 1:sd,
                                     j:j + (Ho - 1) * sh + 1:sh,
                                     k:k + (Wo - 1) * sw + 1:sw])
    p = jnp.stack(cols, axis=0)                # (taps, Cin, B, Do, Ho, Wo)
    return p.reshape(kd * kh * kw * Cin, B * Do * Ho * Wo), (B, Do, Ho, Wo)


def depth_im2col_T(x, kd, pad):
    """Depth-only windows: x (C, B, D, H, W) -> (kd*C, B*D*H*W)."""
    C, B, D, H, W = x.shape
    xp = jnp.pad(x, ((0, 0), (0, 0), (pad, pad), (0, 0), (0, 0)))
    cols = [xp[:, :, t:t + D] for t in range(kd)]
    p = jnp.stack(cols, axis=0)                # (kd, C, B, D, H, W)
    return p.reshape(kd * C, B * D * H * W)


def conv3d_weight_matrix(w):
    """PyTorch (Cout,Cin,kd,kh,kw) -> (Cout, kd*kh*kw*Cin), matching im2col3d_T."""
    Cout = w.shape[0]
    return jnp.transpose(w, (0, 2, 3, 4, 1)).reshape(Cout, -1)


def fold_depth_branches(params, names, C):
    """Exactly fold the summed 1/3/5/11-tap depth convs + identity residual
    into ONE 11-tap depth conv (linear ops commute with summation)."""
    w = jnp.zeros((C, C, KD_FOLD), jnp.float32)
    b = jnp.zeros((C,), jnp.float32)
    for n in names:
        wn = params[n]["w"]                    # (C, C, kd, 1, 1)
        kd = wn.shape[2]
        off = (KD_FOLD - kd) // 2
        w = w.at[:, :, off:off + kd].add(wn[:, :, :, 0, 0])
        b = b + params[n]["b"]
    w = w.at[:, :, KD_FOLD // 2].add(jnp.eye(C, dtype=jnp.float32))  # + residual
    w_mat = jnp.transpose(w, (0, 2, 1)).reshape(C, KD_FOLD * C)      # (Cout, kd*Cin)
    return w_mat, b


# ----------------------------------------------------------------------------
# Parameter init (deterministic, mirrors MSCP.__init__ / weight_init).
# ----------------------------------------------------------------------------
_CONV_SHAPES = {
    "conv1":    (4, 1, 11, 3, 3),
    "conv2_1":  (4, 4, 1, 1, 1),
    "conv2_2":  (4, 4, 3, 1, 1),
    "conv2_3":  (4, 4, 5, 1, 1),
    "conv2_4":  (4, 4, 11, 1, 1),
    "conv_add": (8, 4, 9, 3, 3),
    "conv3_1":  (8, 8, 1, 1, 1),
    "conv3_2":  (8, 8, 3, 1, 1),
    "conv3_3":  (8, 8, 5, 1, 1),
    "conv3_4":  (8, 8, 11, 1, 1),
    "conv3_5":  (8, 8, 1, 1, 1),
    "conv3_6":  (8, 8, 3, 1, 1),
    "conv3_7":  (8, 8, 5, 1, 1),
    "conv3_8":  (8, 8, 11, 1, 1),
    "conv4":    (8, 8, 1, 1, 1),
}


def _kaiming_uniform(key, shape):
    # init.kaiming_uniform(weight) with a=0 -> bound = sqrt(6 / fan_in)
    fan_in = shape[1] * shape[2] * shape[3] * shape[4]
    bound = (6.0 / fan_in) ** 0.5
    return jax.random.uniform(key, shape, jnp.float32, -bound, bound)


def init_params(key):
    params = {}
    keys = jax.random.split(key, len(_CONV_SHAPES))
    for k, (name, shape) in zip(keys, _CONV_SHAPES.items()):
        params[name] = {"w": _kaiming_uniform(k, shape),
                        "b": jnp.zeros((shape[0],), jnp.float32)}
    params["bn1"] = {"gamma": jnp.ones((4,), jnp.float32),
                     "beta": jnp.zeros((4,), jnp.float32)}
    params["bn2"] = {"gamma": jnp.ones((8,), jnp.float32),
                     "beta": jnp.zeros((8,), jnp.float32)}
    return params


# ----------------------------------------------------------------------------
# Forward pass (matches MSCP.forward; PyTorch training-mode BatchNorm).
# ----------------------------------------------------------------------------
def mscp_forward(params, x_ncdhw):
    p = params

    # NCDHW -> channel-first (Cin, B, D, H, W); activations stay lane-dense (C, M).
    x = jnp.transpose(x_ncdhw, (1, 0, 2, 3, 4)).astype(jnp.float32)

    # conv1 + ReLU  (kernel (11,3,3), stride (2,2,2), pad 1)
    patches, (B, D, H, W) = im2col3d_T(x, (11, 3, 3), (2, 2, 2), (1, 1, 1))
    x = conv_matmul(conv3d_weight_matrix(p["conv1"]["w"]), p["conv1"]["b"],
                    patches, act="relu")
    x = x.reshape(4, B, D, H, W)

    # block 1: (conv2_1..4 + residual) folded into one depth conv, then BN1 + ReLU.
    w_mat, b = fold_depth_branches(p, ("conv2_1", "conv2_2", "conv2_3", "conv2_4"), 4)
    x = fold_bn_relu(w_mat, b, p["bn1"]["gamma"], p["bn1"]["beta"],
                     depth_im2col_T(x, KD_FOLD, KD_FOLD // 2))
    x = x.reshape(4, B, D, H, W)

    # conv_add + ReLU  (kernel (9,3,3), stride (2,1,1), pad 1)
    patches, (B, D, H, W) = im2col3d_T(x, (9, 3, 3), (2, 1, 1), (1, 1, 1))
    x = conv_matmul(conv3d_weight_matrix(p["conv_add"]["w"]), p["conv_add"]["b"],
                    patches, act="relu")
    x = x.reshape(8, B, D, H, W)

    # block 2: (conv3_1..4 + residual) folded, ReLU (no BN).
    w_mat, b = fold_depth_branches(p, ("conv3_1", "conv3_2", "conv3_3", "conv3_4"), 8)
    x = conv_matmul(w_mat, b, depth_im2col_T(x, KD_FOLD, KD_FOLD // 2), act="relu")
    x = x.reshape(8, B, D, H, W)

    # block 3: (conv3_5..8 + residual) folded + BN2 + ReLU + conv4(1x1x1) + GELU,
    # all fused into a single kernel.
    w_mat, b = fold_depth_branches(p, ("conv3_5", "conv3_6", "conv3_7", "conv3_8"), 8)
    x = fold_bn_relu_conv_gelu(w_mat, b, p["bn2"]["gamma"], p["bn2"]["beta"],
                               p["conv4"]["w"][:, :, 0, 0, 0], p["conv4"]["b"],
                               depth_im2col_T(x, KD_FOLD, KD_FOLD // 2))
    x = x.reshape(8, B, D, H, W)

    # PyTorch tail: NCDHW-contiguous tensor reshaped to (B, C*D, H, W).
    return jnp.transpose(x, (1, 0, 2, 3, 4)).reshape(B, 8 * D, H, W)


if __name__ == "__main__":
    key = jax.random.PRNGKey(0)
    pkey, xkey = jax.random.split(key)
    params = init_params(pkey)

    # Small hyperspectral-cube style input: (B, 1, bands, img, img)
    B, Cin, D, H, W = 2, 1, 30, 15, 15
    x = jax.random.normal(xkey, (B, Cin, D, H, W), jnp.float32)

    out = jax.jit(mscp_forward)(params, x)
    out = jax.block_until_ready(out)

    # conv1: D 30->11, HW 15->8 ; conv_add: D 11->3, HW 8->8 ; final merge 8*3
    assert out.shape == (B, 24, 8, 8), out.shape
    assert bool(jnp.all(jnp.isfinite(out)))
    print("KERNEL_OK")
</pallas_src>

<mosaic_0001>
module attributes {stable_mosaic.version = 11 : i64} {
  func.func @_mm_bias_act_kernel(%arg0: i32, %arg1: memref<4x99xf32, #tpu.memory_space<vmem>>, %arg2: memref<4x1xf32, #tpu.memory_space<vmem>>, %arg3: memref<99x768xf32, #tpu.memory_space<vmem>>, %arg4: memref<4x768xf32, #tpu.memory_space<vmem>>) attributes {dimension_semantics = [#tpu.dimension_semantics<parallel>], iteration_bounds = array<i64: 2>, scalar_prefetch = 0 : i64, scratch_operands = 0 : i64, tpu.core_type = #tpu.core_type<tc>, window_params = [{pipeline_mode = #tpu.pipeline_mode<synchronous>, transform_indices = @transform_0, window_bounds = array<i64: 4, 99>}, {pipeline_mode = #tpu.pipeline_mode<synchronous>, transform_indices = @transform_1, window_bounds = array<i64: 4, 1>}, {transform_indices = @transform_2, window_bounds = array<i64: 99, 768>}, {transform_indices = @transform_3, window_bounds = array<i64: 4, 768>}]} {
    %c0 = arith.constant 0 : index
    %c0_0 = arith.constant 0 : index
    %0 = vector.load %arg1[%c0, %c0_0] : memref<4x99xf32, #tpu.memory_space<vmem>>, vector<4x99xf32>
    %c0_1 = arith.constant 0 : index
    %c0_2 = arith.constant 0 : index
    %1 = vector.load %arg3[%c0_1, %c0_2] : memref<99x768xf32, #tpu.memory_space<vmem>>, vector<99x768xf32>
    %cst = arith.constant dense<0.000000e+00> : vector<4x768xf32>
    %2 = tpu.matmul %0, %1, %cst {dimension_numbers = #tpu.dot_dimension_numbers<[1], [0], [0], [1], [0, 0, 1, 1], [], []>} : vector<4x99xf32>, vector<99x768xf32>, vector<4x768xf32> -> vector<4x768xf32>
    %c0_3 = arith.constant 0 : index
    %c0_4 = arith.constant 0 : index
    %3 = vector.load %arg2[%c0_3, %c0_4] : memref<4x1xf32, #tpu.memory_space<vmem>>, vector<4x1xf32>
    %4 = vector.broadcast %3 : vector<4x1xf32> to vector<4x768xf32>
    %5 = arith.addf %2, %4 : vector<4x768xf32>
    %cst_5 = arith.constant 0.000000e+00 : f32
    %6 = vector.broadcast %cst_5 : f32 to vector<4x768xf32>
    %7 = arith.maximumf %5, %6 : vector<4x768xf32>
    %c0_6 = arith.constant 0 : index
    %c0_7 = arith.constant 0 : index
    %8 = vector.load %arg4[%c0_6, %c0_7] : memref<4x768xf32, #tpu.memory_space<vmem>>, vector<4x768xf32>
    tpu.vector_store %arg4[%c0_6, %c0_7], %7 {strides = array<i32>} : memref<4x768xf32, #tpu.memory_space<vmem>>, vector<4x768xf32>,
    return
  }
  func.func @transform_0(%arg0: i32) -> (i32, i32) {
    %c0_i32 = arith.constant 0 : i32
    %c0_i32_0 = arith.constant 0 : i32
    %c0_i32_1 = arith.constant 0 : i32
    return %c0_i32, %c0_i32_0 : i32, i32
  }
  func.func @transform_1(%arg0: i32) -> (i32, i32) {
    %c0_i32 = arith.constant 0 : i32
    %c0_i32_0 = arith.constant 0 : i32
    %c0_i32_1 = arith.constant 0 : i32
    return %c0_i32, %c0_i32_0 : i32, i32
  }
  func.func @transform_2(%arg0: i32) -> (i32, i32) {
    %c0_i32 = arith.constant 0 : i32
    %c0_i32_0 = arith.constant 0 : i32
    return %c0_i32, %arg0 : i32, i32
  }
  func.func @transform_3(%arg0: i32) -> (i32, i32) {
    %c0_i32 = arith.constant 0 : i32
    %c0_i32_0 = arith.constant 0 : i32
    return %c0_i32, %arg0 : i32, i32
  }
}

module attributes {stable_mosaic.version = 11 : i64} {
  func.func @_fold_bn_relu_kernel(%arg0: memref<4x44xf32, #tpu.memory_space<vmem>>, %arg1: memref<4x1xf32, #tpu.memory_space<vmem>>, %arg2: memref<4x1xf32, #tpu.memory_space<vmem>>, %arg3: memref<4x1xf32, #tpu.memory_space<vmem>>, %arg4: memref<44x1408xf32, #tpu.memory_space<vmem>>, %arg5: memref<4x1408xf32, #tpu.memory_space<vmem>>) attributes {dimension_semantics = [], scalar_prefetch = 0 : i64, scratch_operands = 0 : i64, tpu.core_type = #tpu.core_type<tc>} {
    %c0 = arith.constant 0 : index
    %c0_0 = arith.constant 0 : index
    %0 = vector.load %arg0[%c0, %c0_0] : memref<4x44xf32, #tpu.memory_space<vmem>>, vector<4x44xf32>
    %c0_1 = arith.constant 0 : index
    %c0_2 = arith.constant 0 : index
    %1 = vector.load %arg4[%c0_1, %c0_2] : memref<44x1408xf32, #tpu.memory_space<vmem>>, vector<44x1408xf32>
    %cst = arith.constant dense<0.000000e+00> : vector<4x1408xf32>
    %2 = tpu.matmul %0, %1, %cst {dimension_numbers = #tpu.dot_dimension_numbers<[1], [0], [0], [1], [0, 0, 1, 1], [], []>} : vector<4x44xf32>, vector<44x1408xf32>, vector<4x1408xf32> -> vector<4x1408xf32>
    %c0_3 = arith.constant 0 : index
    %c0_4 = arith.constant 0 : index
    %3 = vector.load %arg1[%c0_3, %c0_4] : memref<4x1xf32, #tpu.memory_space<vmem>>, vector<4x1xf32>
    %4 = vector.broadcast %3 : vector<4x1xf32> to vector<4x1408xf32>
    %5 = arith.addf %2, %4 : vector<4x1408xf32>
    %cst_5 = arith.constant dense<0.000000e+00> : vector<4xf32>
    %6 = vector.multi_reduction <add>, %5, %cst_5 [1] : vector<4x1408xf32> to vector<4xf32>
    %7 = vector.shape_cast %6 : vector<4xf32> to vector<4x1xf32>
    %cst_6 = arith.constant 7.10227294E-4 : f32
    %8 = vector.broadcast %cst_6 : f32 to vector<4x1xf32>
    %9 = arith.mulf %7, %8 : vector<4x1xf32>
    %10 = arith.mulf %5, %5 : vector<4x1408xf32>
    %cst_7 = arith.constant dense<0.000000e+00> : vector<4xf32>
    %11 = vector.multi_reduction <add>, %10, %cst_7 [1] : vector<4x1408xf32> to vector<4xf32>
    %12 = vector.shape_cast %11 : vector<4xf32> to vector<4x1xf32>
    %cst_8 = arith.constant 7.10227294E-4 : f32
    %13 = vector.broadcast %cst_8 : f32 to vector<4x1xf32>
    %14 = arith.mulf %12, %13 : vector<4x1xf32>
    %15 = arith.mulf %9, %9 : vector<4x1xf32>
    %16 = arith.subf %14, %15 : vector<4x1xf32>
    %cst_9 = arith.constant 9.99999974E-6 : f32
    %17 = vector.broadcast %cst_9 : f32 to vector<4x1xf32>
    %18 = arith.addf %16, %17 : vector<4x1xf32>
    %19 = math.rsqrt %18 : vector<4x1xf32>
    %c0_10 = arith.constant 0 : index
    %c0_11 = arith.constant 0 : index
    %20 = vector.load %arg2[%c0_10, %c0_11] : memref<4x1xf32, #tpu.memory_space<vmem>>, vector<4x1xf32>
    %21 = arith.mulf %19, %20 : vector<4x1xf32>
    %22 = vector.broadcast %9 : vector<4x1xf32> to vector<4x1408xf32>
    %23 = arith.subf %5, %22 : vector<4x1408xf32>
    %24 = vector.broadcast %21 : vector<4x1xf32> to vector<4x1408xf32>
    %25 = arith.mulf %23, %24 : vector<4x1408xf32>
    %c0_12 = arith.constant 0 : index
    %c0_13 = arith.constant 0 : index
    %26 = vector.load %arg3[%c0_12, %c0_13] : memref<4x1xf32, #tpu.memory_space<vmem>>, vector<4x1xf32>
    %27 = vector.broadcast %26 : vector<4x1xf32> to vector<4x1408xf32>
    %28 = arith.addf %25, %27 : vector<4x1408xf32>
    %cst_14 = arith.constant 0.000000e+00 : f32
    %29 = vector.broadcast %cst_14 : f32 to vector<4x1408xf32>
    %30 = arith.maximumf %28, %29 : vector<4x1408xf32>
    %c0_15 = arith.constant 0 : index
    %c0_16 = arith.constant 0 : index
    %31 = vector.load %arg5[%c0_15, %c0_16] : memref<4x1408xf32, #tpu.memory_space<vmem>>, vector<4x1408xf32>
    tpu.vector_store %arg5[%c0_15, %c0_16], %30 {strides = array<i32>} : memref<4x1408xf32, #tpu.memory_space<vmem>>, vector<4x1408xf32>,
    return
  }
}

module attributes {stable_mosaic.version = 11 : i64} {
  func.func @_mm_bias_act_kernel(%arg0: i32, %arg1: memref<8x324xf32, #tpu.memory_space<vmem>>, %arg2: memref<8x1xf32, #tpu.memory_space<vmem>>, %arg3: memref<324x384xf32, #tpu.memory_space<vmem>>, %arg4: memref<8x384xf32, #tpu.memory_space<vmem>>) attributes {dimension_semantics = [#tpu.dimension_semantics<parallel>], iteration_bounds = array<i64: 1>, scalar_prefetch = 0 : i64, scratch_operands = 0 : i64, tpu.core_type = #tpu.core_type<tc>, window_params = [{pipeline_mode = #tpu.pipeline_mode<synchronous>, transform_indices = @transform_0, window_bounds = array<i64: 8, 324>}, {pipeline_mode = #tpu.pipeline_mode<synchronous>, transform_indices = @transform_1, window_bounds = array<i64: 8, 1>}, {transform_indices = @transform_2, window_bounds = array<i64: 324, 384>}, {transform_indices = @transform_3, window_bounds = array<i64: 8, 384>}]} {
    %c0 = arith.constant 0 : index
    %c0_0 = arith.constant 0 : index
    %0 = vector.load %arg1[%c0, %c0_0] : memref<8x324xf32, #tpu.memory_space<vmem>>, vector<8x324xf32>
    %c0_1 = arith.constant 0 : index
    %c0_2 = arith.constant 0 : index
    %1 = vector.load %arg3[%c0_1, %c0_2] : memref<324x384xf32, #tpu.memory_space<vmem>>, vector<324x384xf32>
    %cst = arith.constant dense<0.000000e+00> : vector<8x384xf32>
    %2 = tpu.matmul %0, %1, %cst {dimension_numbers = #tpu.dot_dimension_numbers<[1], [0], [0], [1], [0, 0, 1, 1], [], []>} : vector<8x324xf32>, vector<324x384xf32>, vector<8x384xf32> -> vector<8x384xf32>
    %c0_3 = arith.constant 0 : index
    %c0_4 = arith.constant 0 : index
    %3 = vector.load %arg2[%c0_3, %c0_4] : memref<8x1xf32, #tpu.memory_space<vmem>>, vector<8x1xf32>
    %4 = vector.broadcast %3 : vector<8x1xf32> to vector<8x384xf32>
    %5 = arith.addf %2, %4 : vector<8x384xf32>
    %cst_5 = arith.constant 0.000000e+00 : f32
    %6 = vector.broadcast %cst_5 : f32 to vector<8x384xf32>
    %7 = arith.maximumf %5, %6 : vector<8x384xf32>
    %c0_6 = arith.constant 0 : index
    %c0_7 = arith.constant 0 : index
    %8 = vector.load %arg4[%c0_6, %c0_7] : memref<8x384xf32, #tpu.memory_space<vmem>>, vector<8x384xf32>
    tpu.vector_store %arg4[%c0_6, %c0_7], %7 {strides = array<i32>} : memref<8x384xf32, #tpu.memory_space<vmem>>, vector<8x384xf32>,
    return
  }
  func.func @transform_0(%arg0: i32) -> (i32, i32) {
    %c0_i32 = arith.constant 0 : i32
    %c0_i32_0 = arith.constant 0 : i32
    %c0_i32_1 = arith.constant 0 : i32
    return %c0_i32, %c0_i32_0 : i32, i32
  }
  func.func @transform_1(%arg0: i32) -> (i32, i32) {
    %c0_i32 = arith.constant 0 : i32
    %c0_i32_0 = arith.constant 0 : i32
    %c0_i32_1 = arith.constant 0 : i32
    return %c0_i32, %c0_i32_0 : i32, i32
  }
  func.func @transform_2(%arg0: i32) -> (i32, i32) {
    %c0_i32 = arith.constant 0 : i32
    %c0_i32_0 = arith.constant 0 : i32
    return %c0_i32, %arg0 : i32, i32
  }
  func.func @transform_3(%arg0: i32) -> (i32, i32) {
    %c0_i32 = arith.constant 0 : i32
    %c0_i32_0 = arith.constant 0 : i32
    return %c0_i32, %arg0 : i32, i32
  }
}

module attributes {stable_mosaic.version = 11 : i64} {
  func.func @_mm_bias_act_kernel(%arg0: i32, %arg1: memref<8x88xf32, #tpu.memory_space<vmem>>, %arg2: memref<8x1xf32, #tpu.memory_space<vmem>>, %arg3: memref<88x384xf32, #tpu.memory_space<vmem>>, %arg4: memref<8x384xf32, #tpu.memory_space<vmem>>) attributes {dimension_semantics = [#tpu.dimension_semantics<parallel>], iteration_bounds = array<i64: 1>, scalar_prefetch = 0 : i64, scratch_operands = 0 : i64, tpu.core_type = #tpu.core_type<tc>, window_params = [{pipeline_mode = #tpu.pipeline_mode<synchronous>, transform_indices = @transform_0, window_bounds = array<i64: 8, 88>}, {pipeline_mode = #tpu.pipeline_mode<synchronous>, transform_indices = @transform_1, window_bounds = array<i64: 8, 1>}, {transform_indices = @transform_2, window_bounds = array<i64: 88, 384>}, {transform_indices = @transform_3, window_bounds = array<i64: 8, 384>}]} {
    %c0 = arith.constant 0 : index
    %c0_0 = arith.constant 0 : index
    %0 = vector.load %arg1[%c0, %c0_0] : memref<8x88xf32, #tpu.memory_space<vmem>>, vector<8x88xf32>
    %c0_1 = arith.constant 0 : index
    %c0_2 = arith.constant 0 : index
    %1 = vector.load %arg3[%c0_1, %c0_2] : memref<88x384xf32, #tpu.memory_space<vmem>>, vector<88x384xf32>
    %cst = arith.constant dense<0.000000e+00> : vector<8x384xf32>
    %2 = tpu.matmul %0, %1, %cst {dimension_numbers = #tpu.dot_dimension_numbers<[1], [0], [0], [1], [0, 0, 1, 1], [], []>} : vector<8x88xf32>, vector<88x384xf32>, vector<8x384xf32> -> vector<8x384xf32>
    %c0_3 = arith.constant 0 : index
    %c0_4 = arith.constant 0 : index
    %3 = vector.load %arg2[%c0_3, %c0_4] : memref<8x1xf32, #tpu.memory_space<vmem>>, vector<8x1xf32>
    %4 = vector.broadcast %3 : vector<8x1xf32> to vector<8x384xf32>
    %5 = arith.addf %2, %4 : vector<8x384xf32>
    %cst_5 = arith.constant 0.000000e+00 : f32
    %6 = vector.broadcast %cst_5 : f32 to vector<8x384xf32>
    %7 = arith.maximumf %5, %6 : vector<8x384xf32>
    %c0_6 = arith.constant 0 : index
    %c0_7 = arith.constant 0 : index
    %8 = vector.load %arg4[%c0_6, %c0_7] : memref<8x384xf32, #tpu.memory_space<vmem>>, vector<8x384xf32>
    tpu.vector_store %arg4[%c0_6, %c0_7], %7 {strides = array<i32>} : memref<8x384xf32, #tpu.memory_space<vmem>>, vector<8x384xf32>,
    return
  }
  func.func @transform_0(%arg0: i32) -> (i32, i32) {
    %c0_i32 = arith.constant 0 : i32
    %c0_i32_0 = arith.constant 0 : i32
    %c0_i32_1 = arith.constant 0 : i32
    return %c0_i32, %c0_i32_0 : i32, i32
  }
  func.func @transform_1(%arg0: i32) -> (i32, i32) {
    %c0_i32 = arith.constant 0 : i32
    %c0_i32_0 = arith.constant 0 : i32
    %c0_i32_1 = arith.constant 0 : i32
    return %c0_i32, %c0_i32_0 : i32, i32
  }
  func.func @transform_2(%arg0: i32) -> (i32, i32) {
    %c0_i32 = arith.constant 0 : i32
    %c0_i32_0 = arith.constant 0 : i32
    return %c0_i32, %arg0 : i32, i32
  }
  func.func @transform_3(%arg0: i32) -> (i32, i32) {
    %c0_i32 = arith.constant 0 : i32
    %c0_i32_0 = arith.constant 0 : i32
    return %c0_i32, %arg0 : i32, i32
  }
}

module attributes {stable_mosaic.version = 11 : i64} {
  func.func @_fold_bn_relu_conv_gelu_kernel(%arg0: memref<8x88xf32, #tpu.memory_space<vmem>>, %arg1: memref<8x1xf32, #tpu.memory_space<vmem>>, %arg2: memref<8x1xf32, #tpu.memory_space<vmem>>, %arg3: memref<8x1xf32, #tpu.memory_space<vmem>>, %arg4: memref<8x8xf32, #tpu.memory_space<vmem>>, %arg5: memref<8x1xf32, #tpu.memory_space<vmem>>, %arg6: memref<88x384xf32, #tpu.memory_space<vmem>>, %arg7: memref<8x384xf32, #tpu.memory_space<vmem>>) attributes {dimension_semantics = [], scalar_prefetch = 0 : i64, scratch_operands = 0 : i64, tpu.core_type = #tpu.core_type<tc>} {
    %c0 = arith.constant 0 : index
    %c0_0 = arith.constant 0 : index
    %0 = vector.load %arg0[%c0, %c0_0] : memref<8x88xf32, #tpu.memory_space<vmem>>, vector<8x88xf32>
    %c0_1 = arith.constant 0 : index
    %c0_2 = arith.constant 0 : index
    %1 = vector.load %arg6[%c0_1, %c0_2] : memref<88x384xf32, #tpu.memory_space<vmem>>, vector<88x384xf32>
    %cst = arith.constant dense<0.000000e+00> : vector<8x384xf32>
    %2 = tpu.matmul %0, %1, %cst {dimension_numbers = #tpu.dot_dimension_numbers<[1], [0], [0], [1], [0, 0, 1, 1], [], []>} : vector<8x88xf32>, vector<88x384xf32>, vector<8x384xf32> -> vector<8x384xf32>
    %c0_3 = arith.constant 0 : index
    %c0_4 = arith.constant 0 : index
    %3 = vector.load %arg1[%c0_3, %c0_4] : memref<8x1xf32, #tpu.memory_space<vmem>>, vector<8x1xf32>
    %4 = vector.broadcast %3 : vector<8x1xf32> to vector<8x384xf32>
    %5 = arith.addf %2, %4 : vector<8x384xf32>
    %cst_5 = arith.constant dense<0.000000e+00> : vector<8xf32>
    %6 = vector.multi_reduction <add>, %5, %cst_5 [1] : vector<8x384xf32> to vector<8xf32>
    %7 = vector.shape_cast %6 : vector<8xf32> to vector<8x1xf32>
    %cst_6 = arith.constant 0.00260416674 : f32
    %8 = vector.broadcast %cst_6 : f32 to vector<8x1xf32>
    %9 = arith.mulf %7, %8 : vector<8x1xf32>
    %10 = arith.mulf %5, %5 : vector<8x384xf32>
    %cst_7 = arith.constant dense<0.000000e+00> : vector<8xf32>
    %11 = vector.multi_reduction <add>, %10, %cst_7 [1] : vector<8x384xf32> to vector<8xf32>
    %12 = vector.shape_cast %11 : vector<8xf32> to vector<8x1xf32>
    %cst_8 = arith.constant 0.00260416674 : f32
    %13 = vector.broadcast %cst_8 : f32 to vector<8x1xf32>
    %14 = arith.mulf %12, %13 : vector<8x1xf32>
    %15 = arith.mulf %9, %9 : vector<8x1xf32>
    %16 = arith.subf %14, %15 : vector<8x1xf32>
    %cst_9 = arith.constant 9.99999974E-6 : f32
    %17 = vector.broadcast %cst_9 : f32 to vector<8x1xf32>
    %18 = arith.addf %16, %17 : vector<8x1xf32>
    %19 = math.rsqrt %18 : vector<8x1xf32>
    %c0_10 = arith.constant 0 : index
    %c0_11 = arith.constant 0 : index
    %20 = vector.load %arg2[%c0_10, %c0_11] : memref<8x1xf32, #tpu.memory_space<vmem>>, vector<8x1xf32>
    %21 = arith.mulf %19, %20 : vector<8x1xf32>
    %22 = vector.broadcast %9 : vector<8x1xf32> to vector<8x384xf32>
    %23 = arith.subf %5, %22 : vector<8x384xf32>
    %24 = vector.broadcast %21 : vector<8x1xf32> to vector<8x384xf32>
    %25 = arith.mulf %23, %24 : vector<8x384xf32>
    %c0_12 = arith.constant 0 : index
    %c0_13 = arith.constant 0 : index
    %26 = vector.load %arg3[%c0_12, %c0_13] : memref<8x1xf32, #tpu.memory_space<vmem>>, vector<8x1xf32>
    %27 = vector.broadcast %26 : vector<8x1xf32> to vector<8x384xf32>
    %28 = arith.addf %25, %27 : vector<8x384xf32>
    %cst_14 = arith.constant 0.000000e+00 : f32
    %29 = vector.broadcast %cst_14 : f32 to vector<8x384xf32>
    %30 = arith.maximumf %28, %29 : vector<8x384xf32>
    %c0_15 = arith.constant 0 : index
    %c0_16 = arith.constant 0 : index
    %31 = vector.load %arg4[%c0_15, %c0_16] : memref<8x8xf32, #tpu.memory_space<vmem>>, vector<8x8xf32>
    %cst_17 = arith.constant dense<0.000000e+00> : vector<8x384xf32>
    %32 = tpu.matmul %31, %30, %cst_17 {dimension_numbers = #tpu.dot_dimension_numbers<[1], [0], [0], [1], [0, 0, 1, 1], [], []>} : vector<8x8xf32>, vector<8x384xf32>, vector<8x384xf32> -> vector<8x384xf32>
    %c0_18 = arith.constant 0 : index
    %c0_19 = arith.constant 0 : index
    %33 = vector.load %arg5[%c0_18, %c0_19] : memref<8x1xf32, #tpu.memory_space<vmem>>, vector<8x1xf32>
    %34 = vector.broadcast %33 : vector<8x1xf32> to vector<8x384xf32>
    %35 = arith.addf %32, %34 : vector<8x384xf32>
    %cst_20 = arith.constant 5.000000e-01 : f32
    %36 = vector.broadcast %cst_20 : f32 to vector<8x384xf32>
    %37 = arith.mulf %36, %35 : vector<8x384xf32>
    %cst_21 = arith.constant 0.707106769 : f32
    %38 = vector.broadcast %cst_21 : f32 to vector<8x384xf32>
    %39 = arith.mulf %35, %38 : vector<8x384xf32>
    %40 = math.absf %39 : vector<8x384xf32>
    %cst_22 = arith.constant 0.327591091 : f32
    %41 = vector.broadcast %cst_22 : f32 to vector<8x384xf32>
    %42 = arith.mulf %41, %40 : vector<8x384xf32>
    %cst_23 = arith.constant 1.000000e+00 : f32
    %43 = vector.broadcast %cst_23 : f32 to vector<8x384xf32>
    %44 = arith.addf %43, %42 : vector<8x384xf32>
    %cst_24 = arith.constant 1.000000e+00 : f32
    %45 = vector.broadcast %cst_24 : f32 to vector<8x384xf32>
    %46 = arith.divf %45, %44 : vector<8x384xf32>
    %cst_25 = arith.constant 1.06140542 : f32
    %47 = vector.broadcast %cst_25 : f32 to vector<8x384xf32>
    %48 = arith.mulf %46, %47 : vector<8x384xf32>
    %cst_26 = arith.constant -1.45315206 : f32
    %49 = vector.broadcast %cst_26 : f32 to vector<8x384xf32>
    %50 = arith.addf %49, %48 : vector<8x384xf32>
    %51 = arith.mulf %46, %50 : vector<8x384xf32>
    %cst_27 = arith.constant 1.42141378 : f32
    %52 = vector.broadcast %cst_27 : f32 to vector<8x384xf32>
    %53 = arith.addf %52, %51 : vector<8x384xf32>
    %54 = arith.mulf %46, %53 : vector<8x384xf32>
    %cst_28 = arith.constant -0.284496725 : f32
    %55 = vector.broadcast %cst_28 : f32 to vector<8x384xf32>
    %56 = arith.addf %55, %54 : vector<8x384xf32>
    %57 = arith.mulf %46, %56 : vector<8x384xf32>
    %cst_29 = arith.constant 0.254829586 : f32
    %58 = vector.broadcast %cst_29 : f32 to vector<8x384xf32>
    %59 = arith.addf %58, %57 : vector<8x384xf32>
    %60 = arith.mulf %46, %59 : vector<8x384xf32>
    %cst_30 = arith.constant 0.000000e+00 : f32
    %61 = vector.broadcast %cst_30 : f32 to vector<8x384xf32>
    %62 = arith.subf %61, %40 : vector<8x384xf32>
    %63 = arith.mulf %62, %40 : vector<8x384xf32>
    %64 = math.exp %63 : vector<8x384xf32>
    %65 = arith.mulf %60, %64 : vector<8x384xf32>
    %cst_31 = arith.constant 1.000000e+00 : f32
    %66 = vector.broadcast %cst_31 : f32 to vector<8x384xf32>
    %67 = arith.subf %66, %65 : vector<8x384xf32>
    %cst_32 = arith.constant 0.000000e+00 : f32
    %68 = vector.broadcast %cst_32 : f32 to vector<8x384xf32>
    %69 = arith.cmpf oge, %39, %68 : vector<8x384xf32>
    %cst_33 = arith.constant 0.000000e+00 : f32
    %70 = vector.broadcast %cst_33 : f32 to vector<8x384xf32>
    %71 = arith.subf %70, %67 : vector<8x384xf32>
    %72 = arith.select %69, %67, %71 : vector<8x384xi1>, vector<8x384xf32>
    %cst_34 = arith.constant 1.000000e+00 : f32
    %73 = vector.broadcast %cst_34 : f32 to vector<8x384xf32>
    %74 = arith.addf %73, %72 : vector<8x384xf32>
    %75 = arith.mulf %37, %74 : vector<8x384xf32>
    %c0_35 = arith.constant 0 : index
    %c0_36 = arith.constant 0 : index
    %76 = vector.load %arg7[%c0_35, %c0_36] : memref<8x384xf32, #tpu.memory_space<vmem>>, vector<8x384xf32>
    tpu.vector_store %arg7[%c0_35, %c0_36], %75 {strides = array<i32>} : memref<8x384xf32, #tpu.memory_space<vmem>>, vector<8x384xf32>,
    return
  }
}

</mosaic_0001>

<llo_original>
// kernel: mscp_forward.5
$region0: #{mscp_forward.5}
  #allocation0 [shape = 'u32[]', space=smem, size = 0x4, offset = 0x4, fixed_abs, tag = 'smem constant byte address 0x4 - core index']
  #allocation1 [shape = 'u32[144,128]{1,0:T(1,128)}', space=vmem, size = 0x12000, scoped, tag = 'internal scratch']
  %s0 = inlined_call_operand.vmem [shape: f32[4,99], index: 0, kind: input, shape index: {}]
  %s1 = inlined_call_operand.vmem [shape: f32[4,1], index: 1, kind: input, shape index: {}]
  %s2 = inlined_call_operand.vmem [shape: f32[99,1536], index: 2, kind: input, shape index: {}]
  %s3 = inlined_call_operand.vmem [shape: f32[4,1536], index: 3, kind: output, shape index: {}]
  %s4 = sld [smem:[#allocation0]]
  $region68: #{mscp_forward.5} parent=0
    _
  %s6 = ssub.s32 1, %s4
  %s7 = scalar_select 0, %s6, %s4
  $region1: #{mscp_forward.5} parent=0
    #allocation2 [shape = 'u8[638976]{0}', space=vmem, size = 0x9c000, scoped, tag = 'input window, operand 2']
    loop: start=0, step=1, limit=4
    $region2: #{mscp_forward.5} parent=1 // loop_pre_header
      _
    $region3: #{mscp_forward.5} parent=1 // loop_header
      %s9 = sphi 0, %s13
      %p10 = scmp.ge.s32.totalorder %s9, 4
      %s17 = sphi 0, %s17
      %s19 = sphi 0, %s17
      %s20 = sphi 0, %s19
      %s34 = sphi 0, %s20
      %s38 = sphi 0, %s38
      %s40 = sphi 0, %s38
      %s41 = sphi 0, %s40
      %s55 = sphi 0, %s41
      %s61 = sphi 0, %s63
      %s64 = sphi 0, %s61
      %s65 = sphi 0, %s64
      %s81 = sphi 0, %s65
      %s87 = sphi 0, %s89
      %s90 = sphi 0, %s87
      %s91 = sphi 0, %s90
      %s107 = sphi 0, %s91
    $region4: #{mscp_forward.5} parent=1 // loop_header_branch
      %12 = sbr.rel (%p10) target = $region8
    $region5: #{mscp_forward.5} parent=1 // loop_body
      %s14 = ssub.s32 %s9, 1
      %s15 = ssub.s32 %s9, 2
      %s16 = sadd.s32 %s9, 1
      %s18 = sadd.s32 %s17, 1
      %p21 = scmp.eq.s32.totalorder %s9, 1
      %p22 = scmp.ne.s32.totalorder %s17, %s19
      %p23 = scmp.eq.s32.totalorder %s9, 0
      %p24 = por %p22, %p23
      %p25 = scmp.ne.s32.totalorder %s17, %s19
      %p26 = scmp.eq.s32.totalorder %s14, 1
      %p27 = por %p25, %p26
      %p28 = scmp.ne.s32.totalorder %s19, %s20
      %p29 = scmp.eq.s32.totalorder %s14, 0
      %p30 = por %p28, %p29
      %p31 = scmp.ne.s32.totalorder %s19, %s20
      %p32 = scmp.eq.s32.totalorder %s15, 1
      %p33 = por %p31, %p32
      %p35 = scmp.ne.s32.totalorder %s20, %s34
      %p36 = scmp.eq.s32.totalorder %s15, 0
      %p37 = por %p35, %p36
      %s39 = sadd.s32 %s38, 1
      %p42 = scmp.eq.s32.totalorder %s9, 1
      %p43 = scmp.ne.s32.totalorder %s38, %s40
      %p44 = scmp.eq.s32.totalorder %s9, 0
      %p45 = por %p43, %p44
      %p46 = scmp.ne.s32.totalorder %s38, %s40
      %p47 = scmp.eq.s32.totalorder %s14, 1
      %p48 = por %p46, %p47
      %p49 = scmp.ne.s32.totalorder %s40, %s41
      %p50 = scmp.eq.s32.totalorder %s14, 0
      %p51 = por %p49, %p50
      %p52 = scmp.ne.s32.totalorder %s40, %s41
      %p53 = scmp.eq.s32.totalorder %s15, 1
      %p54 = por %p52, %p53
      %p56 = scmp.ne.s32.totalorder %s41, %s55
      %p57 = scmp.eq.s32.totalorder %s15, 0
      %p58 = por %p56, %p57
      %s59 = ssub.s32 %s9, %s16
      %p60 = scmp.eq.s32.totalorder %s59, 0
      %s62 = sadd.s32 %s61, 1
      %s63 = scalar_select %p60, %s61, %s62
      %p66 = pneg %p60
      %p67 = scmp.eq.s32.totalorder %s9, 1
      %p68 = por %p66, %p67
      %p69 = scmp.ne.s32.totalorder %s61, %s64
      %p70 = scmp.eq.s32.totalorder %s9, 0
      %p71 = por %p69, %p70
      %p72 = scmp.ne.s32.totalorder %s61, %s64
      %p73 = scmp.eq.s32.totalorder %s14, 1
      %p74 = por %p72, %p73
      %p75 = scmp.ne.s32.totalorder %s64, %s65
      %p76 = scmp.eq.s32.totalorder %s14, 0
      %p77 = por %p75, %p76
      %p78 = scmp.ne.s32.totalorder %s64, %s65
      %p79 = scmp.eq.s32.totalorder %s15, 1
      %p80 = por %p78, %p79
      %p82 = scmp.ne.s32.totalorder %s65, %s81
      %p83 = scmp.eq.s32.totalorder %s15, 0
      %p84 = por %p82, %p83
      %s85 = ssub.s32 %s9, %s16
      %p86 = scmp.eq.s32.totalorder %s85, 0
      %s88 = sadd.s32 %s87, 1
      %s89 = scalar_select %p86, %s87, %s88
      %p92 = pneg %p86
      %p93 = scmp.eq.s32.totalorder %s9, 1
      %p94 = por %p92, %p93
      %p95 = scmp.ne.s32.totalorder %s87, %s90
      %p96 = scmp.eq.s32.totalorder %s9, 0
      %p97 = por %p95, %p96
      %p98 = scmp.ne.s32.totalorder %s87, %s90
      %p99 = scmp.eq.s32.totalorder %s14, 1
      %p100 = por %p98, %p99
      %p101 = scmp.ne.s32.totalorder %s90, %s91
      %p102 = scmp.eq.s32.totalorder %s14, 0
      %p103 = por %p101, %p102
      %p104 = scmp.ne.s32.totalorder %s90, %s91
      %p105 = scmp.eq.s32.totalorder %s15, 1
      %p106 = por %p104, %p105
      %p108 = scmp.ne.s32.totalorder %s91, %s107
      %p109 = scmp.eq.s32.totalorder %s15, 0
      %p110 = por %p108, %p109
      %p111 = scmp.le.s32.totalorder 1, %s9
      %p112 = scmp.lt.s32.totalorder %s9, 3
      %p113 = pnand %p111, %p112
      %p114 = pneg %p113
      // Predicated region
      $region9: #{mscp_forward.5} parent=5 // pred_check
        _
      $region10: #{mscp_forward.5} parent=5 // pred_check_branch
        %116 = sbr.rel (%p113) target = $region12
      $region11: #{mscp_forward.5} parent=5 // pred_region
        %s117 = ssub.s32 %s9, 1
        // Predicated region
        $region13: #{mscp_forward.5} parent=11 // pred_check
          %p118 = pneg %p30
        $region14: #{mscp_forward.5} parent=11 // pred_check_branch
          %120 = sbr.rel (%p118) target = $region16
        $region15: #{mscp_forward.5} parent=11 // pred_region
          _
        $region16: #{mscp_forward.5} parent=11 // pred_fallthru
          _
        // Predicated region
        $region17: #{mscp_forward.5} parent=11 // pred_check
          %p121 = pneg %p51
        $region18: #{mscp_forward.5} parent=11 // pred_check_branch
          %123 = sbr.rel (%p121) target = $region20
        $region19: #{mscp_forward.5} parent=11 // pred_region
          _
        $region20: #{mscp_forward.5} parent=11 // pred_fallthru
          _
      $region12: #{mscp_forward.5} parent=5 // pred_fallthru
        _
      %p124 = scmp.lt.s32.totalorder %s9, 2
      // Predicated region
      $region21: #{mscp_forward.5} parent=5 // pred_check
        %p125 = pneg %p124
      $region22: #{mscp_forward.5} parent=5 // pred_check_branch
        %127 = sbr.rel (%p125) target = $region24
      $region23: #{mscp_forward.5} parent=5 // pred_region
        // Predicated region
        $region25: #{mscp_forward.5} parent=23 // pred_check
          %p128 = pneg %p71
        $region26: #{mscp_forward.5} parent=23 // pred_check_branch
          %130 = sbr.rel (%p128) target = $region28
        $region27: #{mscp_forward.5} parent=23 // pred_region
          %s131 = sand.u32 %s61, 1
          %s132 = sand.u32 %s61, 1
          %s133 = smul.addr %s132, 624
          %s134 = scalar_lea.vmem [#allocation2], %s133
          %s135 = smul.u32 6, %s9
          %s136 = smul.addr %s135, 8
          %s137 = scalar_lea.vmem %s2, %s136
          // Predicated region
          $region29: #{mscp_forward.5} parent=27 // pred_check
            _
          $region30: #{mscp_forward.5} parent=27 // pred_check_branch
            %139 = sbr.rel (0) target = $region32
          $region31: #{mscp_forward.5} parent=27 // pred_region
            // Predicated region
            $region33: #{mscp_forward.5} parent=31 // pred_check
              _
            $region34: #{mscp_forward.5} parent=31 // pred_check_branch
              %141 = sbr.rel (0) target = $region36
            $region35: #{mscp_forward.5} parent=31 // pred_region
              loop: start=0, step=1, limit=1
              $region37: #{mscp_forward.5} parent=35 // loop_pre_header
                _
              $region38: #{mscp_forward.5} parent=35 // loop_header
                %s143 = sphi 0, %s147
                %p144 = scmp.ge.s32.totalorder %s143, 1
                %s148 = sphi %s137, %s137
                %s149 = sphi %s134, %s134
              $region39: #{mscp_forward.5} parent=35 // loop_header_branch
                %146 = sbr.rel (%p144) target = $region43
              $region40: #{mscp_forward.5} parent=35 // loop_body
                %v150 = vld [vmem:[%s148] sm:$0xff]
                %151 = vst [vmem:[%s149] sm:$0xff] %v150
                %v152 = vld [vmem:[%s148 + $0x8] sm:$0xff]
                %153 = vst [vmem:[%s149 + $0x8] sm:$0xff] %v152
                %v154 = vld [vmem:[%s148 + $0x10] sm:$0xff]
                %155 = vst [vmem:[%s149 + $0x10] sm:$0xff] %v154
                %v156 = vld [vmem:[%s148 + $0x18] sm:$0xff]
                %157 = vst [vmem:[%s149 + $0x18] sm:$0xff] %v156
                %v158 = vld [vmem:[%s148 + $0x20] sm:$0xff]
                %159 = vst [vmem:[%s149 + $0x20] sm:$0xff] %v158
                %v160 = vld [vmem:[%s148 + $0x28] sm:$0xff]
                %161 = vst [vmem:[%s149 + $0x28] sm:$0xff] %v160
                %v162 = vld [vmem:[%s148 + $0x60] sm:$0xff]
                %163 = vst [vmem:[%s149 + $0x30] sm:$0xff] %v162
                %v164 = vld [vmem:[%s148 + $0x68] sm:$0xff]
                %165 = vst [vmem:[%s149 + $0x38] sm:$0xff] %v164
                %v166 = vld [vmem:[%s148 + $0x70] sm:$0xff]
                %167 = vst [vmem:[%s149 + $0x40] sm:$0xff] %v166
                %v168 = vld [vmem:[%s148 + $0x78] sm:$0xff]
                %169 = vst [vmem:[%s149 + $0x48] sm:$0xff] %v168
                %v170 = vld [vmem:[%s148 + $0x80] sm:$0xff]
                %171 = vst [vmem:[%s149 + $0x50] sm:$0xff] %v170
                %v172 = vld [vmem:[%s148 + $0x88] sm:$0xff]
                %173 = vst [vmem:[%s149 + $0x58] sm:$0xff] %v172
                %v174 = vld [vmem:[%s148 + $0xc0] sm:$0xff]
                %175 = vst [vmem:[%s149 + $0x60] sm:$0xff] %v174
                %v176 = vld [vmem:[%s148 + $0xc8] sm:$0xff]
                %177 = vst [vmem:[%s149 + $0x68] sm:$0xff] %v176
                %v178 = vld [vmem:[%s148 + $0xd0] sm:$0xff]
                %179 = vst [vmem:[%s149 + $0x70] sm:$0xff] %v178
                %v180 = vld [vmem:[%s148 + $0xd8] sm:$0xff]
                %181 = vst [vmem:[%s149 + $0x78] sm:$0xff] %v180
                %v182 = vld [vmem:[%s148 + $0xe0] sm:$0xff]
                %183 = vst [vmem:[%s149 + $0x80] sm:$0xff] %v182
                %v184 = vld [vmem:[%s148 + $0xe8] sm:$0xff]
                %185 = vst [vmem:[%s149 + $0x88] sm:$0xff] %v184
                %v186 = vld [vmem:[%s148 + $0x120] sm:$0xff]
                %187 = vst [vmem:[%s149 + $0x90] sm:$0xff] %v186
                %v188 = vld [vmem:[%s148 + $0x128] sm:$0xff]
                %189 = vst [vmem:[%s149 + $0x98] sm:$0xff] %v188
                %v190 = vld [vmem:[%s148 + $0x130] sm:$0xff]
                %191 = vst [vmem:[%s149 + $0xa0] sm:$0xff] %v190
                %v192 = vld [vmem:[%s148 + $0x138] sm:$0xff]
                %193 = vst [vmem:[%s149 + $0xa8] sm:$0xff] %v192
                %v194 = vld [vmem:[%s148 + $0x140] sm:$0xff]
                %195 = vst [vmem:[%s149 + $0xb0] sm:$0xff] %v194
                %v196 = vld [vmem:[%s148 + $0x148] sm:$0xff]
                %197 = vst [vmem:[%s149 + $0xb8] sm:$0xff] %v196
                %v198 = vld [vmem:[%s148 + $0x180] sm:$0xff]
                %199 = vst [vmem:[%s149 + $0xc0] sm:$0xff] %v198
                %v200 = vld [vmem:[%s148 + $0x188] sm:$0xff]
                %201 = vst [vmem:[%s149 + $0xc8] sm:$0xff] %v200
                %v202 = vld [vmem:[%s148 + $0x190] sm:$0xff]
                %203 = vst [vmem:[%s149 + $0xd0] sm:$0xff] %v202
                %v204 = vld [vmem:[%s148 + $0x198] sm:$0xff]
                %205 = vst [vmem:[%s149 + $0xd8] sm:$0xff] %v204
                %v206 = vld [vmem:[%s148 + $0x1a0] sm:$0xff]
                %207 = vst [vmem:[%s149 + $0xe0] sm:$0xff] %v206
                %v208 = vld [vmem:[%s148 + $0x1a8] sm:$0xff]
                %209 = vst [vmem:[%s149 + $0xe8] sm:$0xff] %v208
                %v210 = vld [vmem:[%s148 + $0x1e0] sm:$0xff]
                %211 = vst [vmem:[%s149 + $0xf0] sm:$0xff] %v210
                %v212 = vld [vmem:[%s148 + $0x1e8] sm:$0xff]
                %213 = vst [vmem:[%s149 + $0xf8] sm:$0xff] %v212
                %v214 = vld [vmem:[%s148 + $0x1f0] sm:$0xff]
                %215 = vst [vmem:[%s149 + $0x100] sm:$0xff] %v214
                %v216 = vld [vmem:[%s148 + $0x1f8] sm:$0xff]
                %217 = vst [vmem:[%s149 + $0x108] sm:$0xff] %v216
                %v218 = vld [vmem:[%s148 + $0x200] sm:$0xff]
                %219 = vst [vmem:[%s149 + $0x110] sm:$0xff] %v218
                %v220 = vld [vmem:[%s148 + $0x208] sm:$0xff]
                %221 = vst [vmem:[%s149 + $0x118] sm:$0xff] %v220
                %v222 = vld [vmem:[%s148 + $0x240] sm:$0xff]
                %223 = vst [vmem:[%s149 + $0x120] sm:$0xff] %v222
                %v224 = vld [vmem:[%s148 + $0x248] sm:$0xff]
                %225 = vst [vmem:[%s149 + $0x128] sm:$0xff] %v224
                %v226 = vld [vmem:[%s148 + $0x250] sm:$0xff]
                %227 = vst [vmem:[%s149 + $0x130] sm:$0xff] %v226
                %v228 = vld [vmem:[%s148 + $0x258] sm:$0xff]
                %229 = vst [vmem:[%s149 + $0x138] sm:$0xff] %v228
                %v230 = vld [vmem:[%s148 + $0x260] sm:$0xff]
                %231 = vst [vmem:[%s149 + $0x140] sm:$0xff] %v230
                %v232 = vld [vmem:[%s148 + $0x268] sm:$0xff]
                %233 = vst [vmem:[%s149 + $0x148] sm:$0xff] %v232
                %v234 = vld [vmem:[%s148 + $0x2a0] sm:$0xff]
                %235 = vst [vmem:[%s149 + $0x150] sm:$0xff] %v234
                %v236 = vld [vmem:[%s148 + $0x2a8] sm:$0xff]
                %237 = vst [vmem:[%s149 + $0x158] sm:$0xff] %v236
                %v238 = vld [vmem:[%s148 + $0x2b0] sm:$0xff]
                %239 = vst [vmem:[%s149 + $0x160] sm:$0xff] %v238
                %v240 = vld [vmem:[%s148 + $0x2b8] sm:$0xff]
                %241 = vst [vmem:[%s149 + $0x168] sm:$0xff] %v240
                %v242 = vld [vmem:[%s148 + $0x2c0] sm:$0xff]
                %243 = vst [vmem:[%s149 + $0x170] sm:$0xff] %v242
                %v244 = vld [vmem:[%s148 + $0x2c8] sm:$0xff]
                %245 = vst [vmem:[%s149 + $0x178] sm:$0xff] %v244
                %v246 = vld [vmem:[%s148 + $0x300] sm:$0xff]
                %247 = vst [vmem:[%s149 + $0x180] sm:$0xff] %v246
                %v248 = vld [vmem:[%s148 + $0x308] sm:$0xff]
                %249 = vst [vmem:[%s149 + $0x188] sm:$0xff] %v248
                %v250 = vld [vmem:[%s148 + $0x310] sm:$0xff]
                %251 = vst [vmem:[%s149 + $0x190] sm:$0xff] %v250
                %v252 = vld [vmem:[%s148 + $0x318] sm:$0xff]
                %253 = vst [vmem:[%s149 + $0x198] sm:$0xff] %v252
                %v254 = vld [vmem:[%s148 + $0x320] sm:$0xff]
                %255 = vst [vmem:[%s149 + $0x1a0] sm:$0xff] %v254
                %v256 = vld [vmem:[%s148 + $0x328] sm:$0xff]
                %257 = vst [vmem:[%s149 + $0x1a8] sm:$0xff] %v256
                %v258 = vld [vmem:[%s148 + $0x360] sm:$0xff]
                %259 = vst [vmem:[%s149 + $0x1b0] sm:$0xff] %v258
                %v260 = vld [vmem:[%s148 + $0x368] sm:$0xff]
                %261 = vst [vmem:[%s149 + $0x1b8] sm:$0xff] %v260
                %v262 = vld [vmem:[%s148 + $0x370] sm:$0xff]
                %263 = vst [vmem:[%s149 + $0x1c0] sm:$0xff] %v262
                %v264 = vld [vmem:[%s148 + $0x378] sm:$0xff]
                %265 = vst [vmem:[%s149 + $0x1c8] sm:$0xff] %v264
                %v266 = vld [vmem:[%s148 + $0x380] sm:$0xff]
                %267 = vst [vmem:[%s149 + $0x1d0] sm:$0xff] %v266
                %v268 = vld [vmem:[%s148 + $0x388] sm:$0xff]
                %269 = vst [vmem:[%s149 + $0x1d8] sm:$0xff] %v268
                %v270 = vld [vmem:[%s148 + $0x3c0] sm:$0xff]
                %271 = vst [vmem:[%s149 + $0x1e0] sm:$0xff] %v270
                %v272 = vld [vmem:[%s148 + $0x3c8] sm:$0xff]
                %273 = vst [vmem:[%s149 + $0x1e8] sm:$0xff] %v272
                %v274 = vld [vmem:[%s148 + $0x3d0] sm:$0xff]
                %275 = vst [vmem:[%s149 + $0x1f0] sm:$0xff] %v274
                %v276 = vld [vmem:[%s148 + $0x3d8] sm:$0xff]
                %277 = vst [vmem:[%s149 + $0x1f8] sm:$0xff] %v276
                %v278 = vld [vmem:[%s148 + $0x3e0] sm:$0xff]
                %279 = vst [vmem:[%s149 + $0x200] sm:$0xff] %v278
                %v280 = vld [vmem:[%s148 + $0x3e8] sm:$0xff]
                %281 = vst [vmem:[%s149 + $0x208] sm:$0xff] %v280
                %v282 = vld [vmem:[%s148 + $0x420] sm:$0xff]
                %283 = vst [vmem:[%s149 + $0x210] sm:$0xff] %v282
                %v284 = vld [vmem:[%s148 + $0x428] sm:$0xff]
                %285 = vst [vmem:[%s149 + $0x218] sm:$0xff] %v284
                %v286 = vld [vmem:[%s148 + $0x430] sm:$0xff]
                %287 = vst [vmem:[%s149 + $0x220] sm:$0xff] %v286
                %v288 = vld [vmem:[%s148 + $0x438] sm:$0xff]
                %289 = vst [vmem:[%s149 + $0x228] sm:$0xff] %v288
                %v290 = vld [vmem:[%s148 + $0x440] sm:$0xff]
                %291 = vst [vmem:[%s149 + $0x230] sm:$0xff] %v290
                %v292 = vld [vmem:[%s148 + $0x448] sm:$0xff]
                %293 = vst [vmem:[%s149 + $0x238] sm:$0xff] %v292
                %v294 = vld [vmem:[%s148 + $0x480] sm:$0xff]
                %295 = vst [vmem:[%s149 + $0x240] sm:$0xff] %v294
                %v296 = vld [vmem:[%s148 + $0x488] sm:$0xff]
                %297 = vst [vmem:[%s149 + $0x248] sm:$0xff] %v296
                %v298 = vld [vmem:[%s148 + $0x490] sm:$0xff]
                %299 = vst [vmem:[%s149 + $0x250] sm:$0xff] %v298
                %v300 = vld [vmem:[%s148 + $0x498] sm:$0xff]
                %301 = vst [vmem:[%s149 + $0x258] sm:$0xff] %v300
                %v302 = vld [vmem:[%s148 + $0x4a0] sm:$0xff]
                %303 = vst [vmem:[%s149 + $0x260] sm:$0xff] %v302
                %v304 = vld [vmem:[%s148 + $0x4a8] sm:$0xff]
                %305 = vst [vmem:[%s149 + $0x268] sm:$0xff] %v304
              $region41: #{mscp_forward.5} parent=35 // loop_footer
                %s147 = sadd.s32 1, %s143
              $region42: #{mscp_forward.5} parent=35 // loop_footer_branch
                %142 = sbr.rel target = $region38
              $region43: #{mscp_forward.5} parent=35 // loop_exit
                _
            $region36: #{mscp_forward.5} parent=31 // pred_fallthru
              _
            // Predicated region
            $region44: #{mscp_forward.5} parent=31 // pred_check
              _
            $region45: #{mscp_forward.5} parent=31 // pred_check_branch
              %307 = sbr.rel target = $region47
            $region46: #{mscp_forward.5} parent=31 // pred_region
              _
            $region47: #{mscp_forward.5} parent=31 // pred_fallthru
              _
          $region32: #{mscp_forward.5} parent=27 // pred_fallthru
            _
          %308 = vnop
        $region28: #{mscp_forward.5} parent=23 // pred_fallthru
          _
      $region24: #{mscp_forward.5} parent=5 // pred_fallthru
        _
      %p309 = scmp.le.s32.totalorder 1, %s9
      %p310 = scmp.lt.s32.totalorder %s9, 3
      %p311 = pnand %p309, %p310
      %p312 = pneg %p311
      // Predicated region
      $region48: #{mscp_forward.5} parent=5 // pred_check
        _
      $region49: #{mscp_forward.5} parent=5 // pred_check_branch
        %314 = sbr.rel (%p311) target = $region51
      $region50: #{mscp_forward.5} parent=5 // pred_region
        %s315 = ssub.s32 %s9, 1
        %s316 = sand.u32 %s64, 1
        %s317 = sand.u32 %s64, 1
        %s318 = smul.addr %s317, 624
        %s319 = scalar_lea.vmem [#allocation2], %s318
        // Predicated region
        $region52: #{mscp_forward.5} parent=50 // pred_check
          %p320 = pneg %p77
        $region53: #{mscp_forward.5} parent=50 // pred_check_branch
          %322 = sbr.rel (%p320) target = $region55
        $region54: #{mscp_forward.5} parent=50 // pred_region
          _
        $region55: #{mscp_forward.5} parent=50 // pred_fallthru
          _
        %p323 = pneg %p30
        %p324 = pneg %p27
        %p325 = pneg %p51
        %p326 = pneg %p48
        %s327 = sand.u32 %s64, 1
        %s328 = sand.u32 %s64, 1
        %s329 = smul.addr %s328, 624
        %s330 = scalar_lea.vmem [#allocation2], %s329
        %p331 = pneg %p77
        %p332 = pneg %p74
        %p333 = pneg %p103
        %p334 = pneg %p100
        %s335 = smul.u32 6, %s14
        %p336 = scmp.lt.s32.totalorder %s335, 11
        %s337 = scalar_select %p336, %s335, 11
        %s338 = smul.addr %s337, 4
        %s339 = scalar_lea.vmem %s3, %s338
        %s340 = smul.u32 6, %s14
        %s341 = smul.u32 6, %s14
        %p342 = scmp.lt.s32.totalorder %s341, 11
        %s343 = scalar_select %p342, %s341, 11
        %s344 = smul.addr %s343, 4
        %s345 = scalar_lea.vmem %s3, %s344
        %s346 = smul.u32 6, %s14
        %v347 = vld [vmem:[%s0] sm:$0xf]
        %v348 = vld [vmem:[%s319] sm:$0xff]
        %v349 = vld [vmem:[%s319 + $0x8] sm:$0xff]
        %v350 = vld [vmem:[%s319 + $0x10] sm:$0xff]
        %v351 = vld [vmem:[%s319 + $0x18] sm:$0xff]
        %v352 = vld [vmem:[%s319 + $0x20] sm:$0xff]
        %v353 = vld [vmem:[%s319 + $0x28] sm:$0xff]
        %v354 = vld [vmem:[%s319 + $0x30] sm:$0xff]
        %v355 = vld [vmem:[%s319 + $0x38] sm:$0xff]
        %v356 = vld [vmem:[%s319 + $0x40] sm:$0xff]
        %v357 = vld [vmem:[%s319 + $0x48] sm:$0xff]
        %v358 = vld [vmem:[%s319 + $0x50] sm:$0xff]
        %v359 = vld [vmem:[%s319 + $0x58] sm:$0xff]
        %v360 = vld [vmem:[%s319 + $0x60] sm:$0xff]
        %v361 = vld [vmem:[%s319 + $0x68] sm:$0xff]
        %v362 = vld [vmem:[%s319 + $0x70] sm:$0xff]
        %v363 = vld [vmem:[%s319 + $0x78] sm:$0xff]
        %v364 = vld [vmem:[%s319 + $0x80] sm:$0xff]
        %v365 = vld [vmem:[%s319 + $0x88] sm:$0xff]
        %v366 = vld [vmem:[%s319 + $0x90] sm:$0xff]
        %v367 = vld [vmem:[%s319 + $0x98] sm:$0xff]
        %v368 = vld [vmem:[%s319 + $0xa0] sm:$0xff]
        %v369 = vld [vmem:[%s319 + $0xa8] sm:$0xff]
        %v370 = vld [vmem:[%s319 + $0xb0] sm:$0xff]
        %v371 = vld [vmem:[%s319 + $0xb8] sm:$0xff]
        %v372 = vld [vmem:[%s319 + $0xc0] sm:$0xff]
        %v373 = vld [vmem:[%s319 + $0xc8] sm:$0xff]
        %v374 = vld [vmem:[%s319 + $0xd0] sm:$0xff]
        %v375 = vld [vmem:[%s319 + $0xd8] sm:$0xff]
        %v376 = vld [vmem:[%s319 + $0xe0] sm:$0xff]
        %v377 = vld [vmem:[%s319 + $0xe8] sm:$0xff]
        %v378 = vld [vmem:[%s319 + $0xf0] sm:$0xff]
        %v379 = vld [vmem:[%s319 + $0xf8] sm:$0xff]
        %v380 = vld [vmem:[%s319 + $0x100] sm:$0xff]
        %v381 = vld [vmem:[%s319 + $0x108] sm:$0xff]
        %v382 = vld [vmem:[%s319 + $0x110] sm:$0xff]
        %v383 = vld [vmem:[%s319 + $0x118] sm:$0xff]
        %v384 = vld [vmem:[%s319 + $0x120] sm:$0xff]
        %v385 = vld [vmem:[%s319 + $0x128] sm:$0xff]
        %v386 = vld [vmem:[%s319 + $0x130] sm:$0xff]
        %v387 = vld [vmem:[%s319 + $0x138] sm:$0xff]
        %v388 = vld [vmem:[%s319 + $0x140] sm:$0xff]
        %v389 = vld [vmem:[%s319 + $0x148] sm:$0xff]
        %v390 = vld [vmem:[%s319 + $0x150] sm:$0xff]
        %v391 = vld [vmem:[%s319 + $0x158] sm:$0xff]
        %v392 = vld [vmem:[%s319 + $0x160] sm:$0xff]
        %v393 = vld [vmem:[%s319 + $0x168] sm:$0xff]
        %v394 = vld [vmem:[%s319 + $0x170] sm:$0xff]
        %v395 = vld [vmem:[%s319 + $0x178] sm:$0xff]
        %v396 = vld [vmem:[%s319 + $0x180] sm:$0xff]
        %v397 = vld [vmem:[%s319 + $0x188] sm:$0xff]
        %v398 = vld [vmem:[%s319 + $0x190] sm:$0xff]
        %v399 = vld [vmem:[%s319 + $0x198] sm:$0xff]
        %v400 = vld [vmem:[%s319 + $0x1a0] sm:$0xff]
        %v401 = vld [vmem:[%s319 + $0x1a8] sm:$0xff]
        %v402 = vld [vmem:[%s319 + $0x1b0] sm:$0xff]
        %v403 = vld [vmem:[%s319 + $0x1b8] sm:$0xff]
        %v404 = vld [vmem:[%s319 + $0x1c0] sm:$0xff]
        %v405 = vld [vmem:[%s319 + $0x1c8] sm:$0xff]
        %v406 = vld [vmem:[%s319 + $0x1d0] sm:$0xff]
        %v407 = vld [vmem:[%s319 + $0x1d8] sm:$0xff]
        %v408 = vld [vmem:[%s319 + $0x1e0] sm:$0xff]
        %v409 = vld [vmem:[%s319 + $0x1e8] sm:$0xff]
        %v410 = vld [vmem:[%s319 + $0x1f0] sm:$0xff]
        %v411 = vld [vmem:[%s319 + $0x1f8] sm:$0xff]
        %v412 = vld [vmem:[%s319 + $0x200] sm:$0xff]
        %v413 = vld [vmem:[%s319 + $0x208] sm:$0xff]
        %v414 = vld [vmem:[%s319 + $0x210] sm:$0xff]
        %v415 = vld [vmem:[%s319 + $0x218] sm:$0xff]
        %v416 = vld [vmem:[%s319 + $0x220] sm:$0xff]
        %v417 = vld [vmem:[%s319 + $0x228] sm:$0xff]
        %v418 = vld [vmem:[%s319 + $0x230] sm:$0xff]
        %v419 = vld [vmem:[%s319 + $0x238] sm:$0xff]
        %v420 = vld [vmem:[%s319 + $0x240] sm:$0x7]
        %v421 = vld [vmem:[%s319 + $0x248] sm:$0x7]
        %v422 = vld [vmem:[%s319 + $0x250] sm:$0x7]
        %v423 = vld [vmem:[%s319 + $0x258] sm:$0x7]
        %v424 = vld [vmem:[%s319 + $0x260] sm:$0x7]
        %v425 = vld [vmem:[%s319 + $0x268] sm:$0x7]
        %v426 = vld [vmem:[%s1] sm:$0xf]
        %428 = vset.pattern.permute.xlu0 0
        %429 = vperm.xlu0 %428, %v426
        %v430 = vpop.permute.xlu0 %429
        %vm432 = vcmask 809984
        %v434 = vsel %vm432, %v347, 0
        %vm436 = vcmask 1042432
        %v438 = vsel %vm436, %v420, 0
        %v441 = vsel %vm436, %v421, 0
        %v444 = vsel %vm436, %v422, 0
        %v447 = vsel %vm436, %v423, 0
        %v450 = vsel %vm436, %v424, 0
        %v453 = vsel %vm436, %v425, 0
        %455 = vmatprep.subr.mxu0 0.0
        %456 = vmatpush1.msra.mxu0 0.0
        %457 = vmatprep.subr.mxu0 0.0
        %458 = vmatpush1.msra.mxu0 0.0
        %459 = vmatprep.subr.mxu0 0.0
        %460 = vmatpush1.msra.mxu0 0.0
        %461 = vmatprep.subr.mxu0 %v441
        %462 = vmatpush1.msra.mxu0 %v438
        %463 = vmatprep.subr.mxu0 %v415
        %464 = vmatpush1.msra.mxu0 %v414
        %465 = vmatprep.subr.mxu0 %v409
        %466 = vmatpush1.msra.mxu0 %v408
        %467 = vmatprep.subr.mxu0 %v403
        %468 = vmatpush1.msra.mxu0 %v402
        %469 = vmatprep.subr.mxu0 %v397
        %470 = vmatpush1.msra.mxu0 %v396
        %471 = vmatprep.subr.mxu0 %v391
        %472 = vmatpush1.msra.mxu0 %v390
        %473 = vmatprep.subr.mxu0 %v385
        %474 = vmatpush1.msra.mxu0 %v384
        %475 = vmatprep.subr.mxu0 %v379
        %476 = vmatpush1.msra.mxu0 %v378
        %477 = vmatprep.subr.mxu0 %v373
        %478 = vmatpush1.msra.mxu0 %v372
        %479 = vmatprep.subr.mxu0 %v367
        %480 = vmatpush1.msra.mxu0 %v366
        %481 = vmatprep.subr.mxu0 %v361
        %482 = vmatpush1.msra.mxu0 %v360
        %483 = vmatprep.subr.mxu0 %v355
        %484 = vmatpush1.msra.mxu0 %v354
        %485 = vmatprep.subr.mxu0 %v349
        %486 = vmatpush1.msra.mxu0 %v348
        %487 = vmatprep.subr.mxu0 0.0
        %488 = vmatpush2.msra.mxu0 0.0
        %489 = vmatprep.subr.mxu0 0.0
        %490 = vmatpush2.msra.mxu0 0.0
        %491 = vmatprep.subr.mxu0 0.0
        %492 = vmatpush2.msra.mxu0 0.0
        %493 = vmatprep.subr.mxu0 0.0
        %494 = vmatpush2.msra.mxu0 0.0
        %495 = vmatprep.subr.mxu0 0.0
        %496 = vmatpush2.msra.mxu0 0.0
        %497 = vmatprep.subr.mxu0 0.0
        %498 = vmatpush2.msra.mxu0 0.0
        %499 = vmatprep.subr.mxu0 0.0
        %500 = vmatpush2.msra.mxu0 0.0
        %501 = vmatprep.subr.mxu0 0.0
        %502 = vmatpush2.msra.mxu0 0.0
        %503 = vmatprep.subr.mxu0 0.0
        %504 = vmatpush2.msra.mxu0 0.0
        %505 = vmatprep.subr.mxu0 0.0
        %506 = vmatpush2.msra.mxu0 0.0
        %507 = vmatprep.subr.mxu0 0.0
        %508 = vmatpush2.msra.mxu0 0.0
        %509 = vmatprep.subr.mxu0 0.0
        %510 = vmatpush2.msra.mxu0 0.0
        %511 = vmatprep.subr.mxu0 0.0
        %512 = vmatpush2.msra.mxu0 0.0
        %513 = vmatprep.subr.mxu0 0.0
        %514 = vmatpush2.msra.mxu0 0.0
        %515 = vmatprep.subr.mxu0 0.0
        %516 = vmatpush2.msra.mxu0 0.0
        %517 = vmatprep.subr.mxu0 0.0
        %518 = vmatpush2.msra.mxu0 0.0
        %519 = vmatprep.mubr.f32.mxu0 0.0
        %520 = vmatmul.mubr.f32.gmra.mxu0 %v434
        %v521 = vpop.f32.mrf.mxu0
        %v522 = vadd.f32 %v430, %v521
        %v523 = vpop.f32.mrf.mxu0
        %v524 = vadd.f32 %v430, %v523
        %525 = vdwg.mxu0
        %526 = vmatprep.subr.mxu0 0.0
        %527 = vmatpush1.msra.mxu0 0.0
        %528 = vmatprep.subr.mxu0 0.0
        %529 = vmatpush1.msra.mxu0 0.0
        %530 = vmatprep.subr.mxu0 0.0
        %531 = vmatpush1.msra.mxu0 0.0
        %532 = vmatprep.subr.mxu0 %v447
        %533 = vmatpush1.msra.mxu0 %v444
        %534 = vmatprep.subr.mxu0 %v417
        %535 = vmatpush1.msra.mxu0 %v416
        %536 = vmatprep.subr.mxu0 %v411
        %537 = vmatpush1.msra.mxu0 %v410
        %538 = vmatprep.subr.mxu0 %v405
        %539 = vmatpush1.msra.mxu0 %v404
        %540 = vmatprep.subr.mxu0 %v399
        %541 = vmatpush1.msra.mxu0 %v398
        %542 = vmatprep.subr.mxu0 %v393
        %543 = vmatpush1.msra.mxu0 %v392
        %544 = vmatprep.subr.mxu0 %v387
        %545 = vmatpush1.msra.mxu0 %v386
        %546 = vmatprep.subr.mxu0 %v381
        %547 = vmatpush1.msra.mxu0 %v380
        %548 = vmatprep.subr.mxu0 %v375
        %549 = vmatpush1.msra.mxu0 %v374
        %550 = vmatprep.subr.mxu0 %v369
        %551 = vmatpush1.msra.mxu0 %v368
        %552 = vmatprep.subr.mxu0 %v363
        %553 = vmatpush1.msra.mxu0 %v362
        %554 = vmatprep.subr.mxu0 %v357
        %555 = vmatpush1.msra.mxu0 %v356
        %556 = vmatprep.subr.mxu0 %v351
        %557 = vmatpush1.msra.mxu0 %v350
        %558 = vmatprep.subr.mxu0 0.0
        %559 = vmatpush2.msra.mxu0 0.0
        %560 = vmatprep.subr.mxu0 0.0
        %561 = vmatpush2.msra.mxu0 0.0
        %562 = vmatprep.subr.mxu0 0.0
        %563 = vmatpush2.msra.mxu0 0.0
        %564 = vmatprep.subr.mxu0 0.0
        %565 = vmatpush2.msra.mxu0 0.0
        %566 = vmatprep.subr.mxu0 0.0
        %567 = vmatpush2.msra.mxu0 0.0
        %568 = vmatprep.subr.mxu0 0.0
        %569 = vmatpush2.msra.mxu0 0.0
        %570 = vmatprep.subr.mxu0 0.0
        %571 = vmatpush2.msra.mxu0 0.0
        %572 = vmatprep.subr.mxu0 0.0
        %573 = vmatpush2.msra.mxu0 0.0
        %574 = vmatprep.subr.mxu0 0.0
        %575 = vmatpush2.msra.mxu0 0.0
        %576 = vmatprep.subr.mxu0 0.0
        %577 = vmatpush2.msra.mxu0 0.0
        %578 = vmatprep.subr.mxu0 0.0
        %579 = vmatpush2.msra.mxu0 0.0
        %580 = vmatprep.subr.mxu0 0.0
        %581 = vmatpush2.msra.mxu0 0.0
        %582 = vmatprep.subr.mxu0 0.0
        %583 = vmatpush2.msra.mxu0 0.0
        %584 = vmatprep.subr.mxu0 0.0
        %585 = vmatpush2.msra.mxu0 0.0
        %586 = vmatprep.subr.mxu0 0.0
        %587 = vmatpush2.msra.mxu0 0.0
        %588 = vmatprep.subr.mxu0 0.0
        %589 = vmatpush2.msra.mxu0 0.0
        %590 = vmatprep.mubr.f32.mxu0 0.0
        %591 = vmatmul.mubr.f32.gmra.mxu0 %v434
        %v592 = vpop.f32.mrf.mxu0
        %v593 = vadd.f32 %v430, %v592
        %v594 = vpop.f32.mrf.mxu0
        %v595 = vadd.f32 %v430, %v594
        %596 = vdwg.mxu0
        %597 = vmatprep.subr.mxu0 0.0
        %598 = vmatpush1.msra.mxu0 0.0
        %599 = vmatprep.subr.mxu0 0.0
        %600 = vmatpush1.msra.mxu0 0.0
        %601 = vmatprep.subr.mxu0 0.0
        %602 = vmatpush1.msra.mxu0 0.0
        %603 = vmatprep.subr.mxu0 %v453
        %604 = vmatpush1.msra.mxu0 %v450
        %605 = vmatprep.subr.mxu0 %v419
        %606 = vmatpush1.msra.mxu0 %v418
        %607 = vmatprep.subr.mxu0 %v413
        %608 = vmatpush1.msra.mxu0 %v412
        %609 = vmatprep.subr.mxu0 %v407
        %610 = vmatpush1.msra.mxu0 %v406
        %611 = vmatprep.subr.mxu0 %v401
        %612 = vmatpush1.msra.mxu0 %v400
        %613 = vmatprep.subr.mxu0 %v395
        %614 = vmatpush1.msra.mxu0 %v394
        %615 = vmatprep.subr.mxu0 %v389
        %616 = vmatpush1.msra.mxu0 %v388
        %617 = vmatprep.subr.mxu0 %v383
        %618 = vmatpush1.msra.mxu0 %v382
        %619 = vmatprep.subr.mxu0 %v377
        %620 = vmatpush1.msra.mxu0 %v376
        %621 = vmatprep.subr.mxu0 %v371
        %622 = vmatpush1.msra.mxu0 %v370
        %623 = vmatprep.subr.mxu0 %v365
        %624 = vmatpush1.msra.mxu0 %v364
        %625 = vmatprep.subr.mxu0 %v359
        %626 = vmatpush1.msra.mxu0 %v358
        %627 = vmatprep.subr.mxu0 %v353
        %628 = vmatpush1.msra.mxu0 %v352
        %629 = vmatprep.subr.mxu0 0.0
        %630 = vmatpush2.msra.mxu0 0.0
        %631 = vmatprep.subr.mxu0 0.0
        %632 = vmatpush2.msra.mxu0 0.0
        %633 = vmatprep.subr.mxu0 0.0
        %634 = vmatpush2.msra.mxu0 0.0
        %635 = vmatprep.subr.mxu0 0.0
        %636 = vmatpush2.msra.mxu0 0.0
        %637 = vmatprep.subr.mxu0 0.0
        %638 = vmatpush2.msra.mxu0 0.0
        %639 = vmatprep.subr.mxu0 0.0
        %640 = vmatpush2.msra.mxu0 0.0
        %641 = vmatprep.subr.mxu0 0.0
        %642 = vmatpush2.msra.mxu0 0.0
        %643 = vmatprep.subr.mxu0 0.0
        %644 = vmatpush2.msra.mxu0 0.0
        %645 = vmatprep.subr.mxu0 0.0
        %646 = vmatpush2.msra.mxu0 0.0
        %647 = vmatprep.subr.mxu0 0.0
        %648 = vmatpush2.msra.mxu0 0.0
        %649 = vmatprep.subr.mxu0 0.0
        %650 = vmatpush2.msra.mxu0 0.0
        %651 = vmatprep.subr.mxu0 0.0
        %652 = vmatpush2.msra.mxu0 0.0
        %653 = vmatprep.subr.mxu0 0.0
        %654 = vmatpush2.msra.mxu0 0.0
        %655 = vmatprep.subr.mxu0 0.0
        %656 = vmatpush2.msra.mxu0 0.0
        %657 = vmatprep.subr.mxu0 0.0
        %658 = vmatpush2.msra.mxu0 0.0
        %659 = vmatprep.subr.mxu0 0.0
        %660 = vmatpush2.msra.mxu0 0.0
        %661 = vmatprep.mubr.f32.mxu0 0.0
        %662 = vmatmul.mubr.f32.gmra.mxu0 %v434
        %v663 = vpop.f32.mrf.mxu0
        %v664 = vadd.f32 %v430, %v663
        %v665 = vpop.f32.mrf.mxu0
        %v666 = vadd.f32 %v430, %v665
        %667 = vdwg.mxu0
        %v668 = vmax.f32 %v522, 0.0
        %v669 = vmax.f32 %v524, 0.0
        %v670 = vmax.f32 %v593, 0.0
        %v671 = vmax.f32 %v595, 0.0
        %v672 = vmax.f32 %v664, 0.0
        %v673 = vmax.f32 %v666, 0.0
        %v680 = vcombine.low %v668, %v669
        %v681 = vcombine.low %v670, %v671
        %v682 = vcombine.low %v672, %v673
        %686 = vst [vmem:[%s345] sm:$0xff] %v680
        %687 = vst [vmem:[%s345 + $0x8] sm:$0xff] %v681
        %688 = vst [vmem:[%s345 + $0x10] sm:$0xff] %v682
        %s689 = smul.u32 6, %s14
        %p690 = scmp.lt.s32.totalorder %s689, 11
        %s691 = scalar_select %p690, %s689, 11
        %s692 = smul.addr %s691, 4
        %s693 = scalar_lea.vmem %s3, %s692
        // Predicated region
        $region56: #{mscp_forward.5} parent=50 // pred_check
          %p694 = pneg %p100
        $region57: #{mscp_forward.5} parent=50 // pred_check_branch
          %696 = sbr.rel (%p694) target = $region59
        $region58: #{mscp_forward.5} parent=50 // pred_region
          %s697 = smul.u32 6, %s14
        $region59: #{mscp_forward.5} parent=50 // pred_fallthru
          _
      $region51: #{mscp_forward.5} parent=5 // pred_fallthru
        _
      %p698 = scmp.le.s32.totalorder 2, %s9
      // Predicated region
      $region60: #{mscp_forward.5} parent=5 // pred_check
        %p699 = pneg %p698
      $region61: #{mscp_forward.5} parent=5 // pred_check_branch
        %701 = sbr.rel (%p699) target = $region63
      $region62: #{mscp_forward.5} parent=5 // pred_region
        %s702 = ssub.s32 %s9, 2
        // Predicated region
        $region64: #{mscp_forward.5} parent=62 // pred_check
          %p703 = pneg %p106
        $region65: #{mscp_forward.5} parent=62 // pred_check_branch
          %705 = sbr.rel (%p703) target = $region67
        $region66: #{mscp_forward.5} parent=62 // pred_region
          %s706 = smul.u32 6, %s15
          %p707 = scmp.lt.s32.totalorder %s706, 11
          %s708 = scalar_select %p707, %s706, 11
          %s709 = smul.addr %s708, 4
          %s710 = scalar_lea.vmem %s3, %s709
        $region67: #{mscp_forward.5} parent=62 // pred_fallthru
          _
      $region63: #{mscp_forward.5} parent=5 // pred_fallthru
        _
    $region6: #{mscp_forward.5} parent=1 // loop_footer
      %s13 = sadd.s32 1, %s9
    $region7: #{mscp_forward.5} parent=1 // loop_footer_branch
      %8 = sbr.rel target = $region3
    $region8: #{mscp_forward.5} parent=1 // loop_exit
      _

// kernel: mscp_forward.6
$region0: #{mscp_forward.6}
  #allocation0 [shape = 'u32[]', space=smem, size = 0x4, offset = 0x4, fixed_abs, tag = 'smem constant byte address 0x4 - core index']
  #allocation1 [shape = 'u32[144,128]{1,0:T(1,128)}', space=vmem, size = 0x12000, scoped, tag = 'internal scratch']
  %s0 = inlined_call_operand.vmem [shape: f32[4,44], index: 0, kind: input, shape index: {}]
  %s1 = inlined_call_operand.vmem [shape: f32[4,1], index: 1, kind: input, shape index: {}]
  %s2 = inlined_call_operand.vmem [shape: f32[4,1], index: 2, kind: input, shape index: {}]
  %s3 = inlined_call_operand.vmem [shape: f32[4,1], index: 3, kind: input, shape index: {}]
  %s4 = inlined_call_operand.vmem [shape: f32[44,1408], index: 4, kind: input, shape index: {}]
  %s5 = inlined_call_operand.vmem [shape: f32[4,1408], index: 5, kind: output, shape index: {}]
  %s6 = sld [smem:[#allocation0]]
  $region30: #{mscp_forward.6} parent=0
    _
  %s8 = ssub.s32 1, %s6
  %s9 = scalar_select 0, %s8, %s6
  // Predicated region
  $region2: #{mscp_forward.6} parent=0 // pred_check
    _
  $region3: #{mscp_forward.6} parent=0 // pred_check_branch
    %11 = sbr.rel (0) target = $region5
  $region4: #{mscp_forward.6} parent=0 // pred_region
    _
  $region5: #{mscp_forward.6} parent=0 // pred_fallthru
    _
  // Predicated region
  $region6: #{mscp_forward.6} parent=0 // pred_check
    _
  $region7: #{mscp_forward.6} parent=0 // pred_check_branch
    %13 = sbr.rel (0) target = $region9
  $region8: #{mscp_forward.6} parent=0 // pred_region
    _
  $region9: #{mscp_forward.6} parent=0 // pred_fallthru
    _
  // Predicated region
  $region10: #{mscp_forward.6} parent=0 // pred_check
    _
  $region11: #{mscp_forward.6} parent=0 // pred_check_branch
    %15 = sbr.rel (0) target = $region13
  $region12: #{mscp_forward.6} parent=0 // pred_region
    _
  $region13: #{mscp_forward.6} parent=0 // pred_fallthru
    _
  // Predicated region
  $region14: #{mscp_forward.6} parent=0 // pred_check
    _
  $region15: #{mscp_forward.6} parent=0 // pred_check_branch
    %17 = sbr.rel (0) target = $region17
  $region16: #{mscp_forward.6} parent=0 // pred_region
    _
  $region17: #{mscp_forward.6} parent=0 // pred_fallthru
    _
  // Predicated region
  $region18: #{mscp_forward.6} parent=0 // pred_check
    _
  $region19: #{mscp_forward.6} parent=0 // pred_check_branch
    %19 = sbr.rel (0) target = $region21
  $region20: #{mscp_forward.6} parent=0 // pred_region
    _
  $region21: #{mscp_forward.6} parent=0 // pred_fallthru
    _
  %v20 = vld [vmem:[%s0] sm:$0xf]
  %v21 = vld [vmem:[%s4] sm:$0xff]
  %v22 = vld [vmem:[%s4 + $0x8] sm:$0xff]
  %v23 = vld [vmem:[%s4 + $0x10] sm:$0xff]
  %v24 = vld [vmem:[%s4 + $0x18] sm:$0xff]
  %v25 = vld [vmem:[%s4 + $0x20] sm:$0xff]
  %v26 = vld [vmem:[%s4 + $0x28] sm:$0xff]
  %v27 = vld [vmem:[%s4 + $0x30] sm:$0xff]
  %v28 = vld [vmem:[%s4 + $0x38] sm:$0xff]
  %v29 = vld [vmem:[%s4 + $0x40] sm:$0xff]
  %v30 = vld [vmem:[%s4 + $0x48] sm:$0xff]
  %v31 = vld [vmem:[%s4 + $0x50] sm:$0xff]
  %v32 = vld [vmem:[%s4 + $0x58] sm:$0xff]
  %v33 = vld [vmem:[%s4 + $0x60] sm:$0xff]
  %v34 = vld [vmem:[%s4 + $0x68] sm:$0xff]
  %v35 = vld [vmem:[%s4 + $0x70] sm:$0xff]
  %v36 = vld [vmem:[%s4 + $0x78] sm:$0xff]
  %v37 = vld [vmem:[%s4 + $0x80] sm:$0xff]
  %v38 = vld [vmem:[%s4 + $0x88] sm:$0xff]
  %v39 = vld [vmem:[%s4 + $0x90] sm:$0xff]
  %v40 = vld [vmem:[%s4 + $0x98] sm:$0xff]
  %v41 = vld [vmem:[%s4 + $0xa0] sm:$0xff]
  %v42 = vld [vmem:[%s4 + $0xa8] sm:$0xff]
  %v43 = vld [vmem:[%s4 + $0xb0] sm:$0xff]
  %v44 = vld [vmem:[%s4 + $0xb8] sm:$0xff]
  %v45 = vld [vmem:[%s4 + $0xc0] sm:$0xff]
  %v46 = vld [vmem:[%s4 + $0xc8] sm:$0xff]
  %v47 = vld [vmem:[%s4 + $0xd0] sm:$0xff]
  %v48 = vld [vmem:[%s4 + $0xd8] sm:$0xff]
  %v49 = vld [vmem:[%s4 + $0xe0] sm:$0xff]
  %v50 = vld [vmem:[%s4 + $0xe8] sm:$0xff]
  %v51 = vld [vmem:[%s4 + $0xf0] sm:$0xff]
  %v52 = vld [vmem:[%s4 + $0xf8] sm:$0xff]
  %v53 = vld [vmem:[%s4 + $0x100] sm:$0xff]
  %v54 = vld [vmem:[%s4 + $0x108] sm:$0xff]
  %v55 = vld [vmem:[%s4 + $0x110] sm:$0xff]
  %v56 = vld [vmem:[%s4 + $0x118] sm:$0xff]
  %v57 = vld [vmem:[%s4 + $0x120] sm:$0xff]
  %v58 = vld [vmem:[%s4 + $0x128] sm:$0xff]
  %v59 = vld [vmem:[%s4 + $0x130] sm:$0xff]
  %v60 = vld [vmem:[%s4 + $0x138] sm:$0xff]
  %v61 = vld [vmem:[%s4 + $0x140] sm:$0xff]
  %v62 = vld [vmem:[%s4 + $0x148] sm:$0xff]
  %v63 = vld [vmem:[%s4 + $0x150] sm:$0xff]
  %v64 = vld [vmem:[%s4 + $0x158] sm:$0xff]
  %v65 = vld [vmem:[%s4 + $0x160] sm:$0xff]
  %v66 = vld [vmem:[%s4 + $0x168] sm:$0xff]
  %v67 = vld [vmem:[%s4 + $0x170] sm:$0xff]
  %v68 = vld [vmem:[%s4 + $0x178] sm:$0xff]
  %v69 = vld [vmem:[%s4 + $0x180] sm:$0xff]
  %v70 = vld [vmem:[%s4 + $0x188] sm:$0xff]
  %v71 = vld [vmem:[%s4 + $0x190] sm:$0xff]
  %v72 = vld [vmem:[%s4 + $0x198] sm:$0xff]
  %v73 = vld [vmem:[%s4 + $0x1a0] sm:$0xff]
  %v74 = vld [vmem:[%s4 + $0x1a8] sm:$0xff]
  %v75 = vld [vmem:[%s4 + $0x1b0] sm:$0xff]
  %v76 = vld [vmem:[%s4 + $0x1b8] sm:$0xf]
  %v77 = vld [vmem:[%s4 + $0x1c0] sm:$0xf]
  %v78 = vld [vmem:[%s4 + $0x1c8] sm:$0xf]
  %v79 = vld [vmem:[%s4 + $0x1d0] sm:$0xf]
  %v80 = vld [vmem:[%s4 + $0x1d8] sm:$0xf]
  %v81 = vld [vmem:[%s4 + $0x1e0] sm:$0xf]
  %v82 = vld [vmem:[%s4 + $0x1e8] sm:$0xf]
  %v83 = vld [vmem:[%s4 + $0x1f0] sm:$0xf]
  %v84 = vld [vmem:[%s4 + $0x1f8] sm:$0xf]
  %v85 = vld [vmem:[%s4 + $0x200] sm:$0xf]
  %v86 = vld [vmem:[%s4 + $0x208] sm:$0xf]
  %v87 = vld [vmem:[%s1] sm:$0xf]
  %89 = vset.pattern.permute.xlu0 0
  %90 = vperm.xlu0 %89, %v87
  %v91 = vpop.permute.xlu0 %90
  %vm93 = vcmask 359424
  %v95 = vsel %vm93, %v20, 0
  %vm97 = vcmask 1043456
  %v99 = vsel %vm97, %v76, 0
  %v102 = vsel %vm97, %v77, 0
  %v105 = vsel %vm97, %v78, 0
  %v108 = vsel %vm97, %v79, 0
  %v111 = vsel %vm97, %v80, 0
  %v114 = vsel %vm97, %v81, 0
  %v117 = vsel %vm97, %v82, 0
  %v120 = vsel %vm97, %v83, 0
  %v123 = vsel %vm97, %v84, 0
  %v126 = vsel %vm97, %v85, 0
  %v129 = vsel %vm97, %v86, 0
  %131 = vmatprep.subr.mxu0 0.0
  %132 = vmatpush1.msra.mxu0 0.0
  %133 = vmatprep.subr.mxu0 0.0
  %134 = vmatpush1.msra.mxu0 0.0
  %135 = vmatprep.subr.mxu0 0.0
  %136 = vmatpush1.msra.mxu0 0.0
  %137 = vmatprep.subr.mxu0 0.0
  %138 = vmatpush1.msra.mxu0 0.0
  %139 = vmatprep.subr.mxu0 0.0
  %140 = vmatpush1.msra.mxu0 0.0
  %141 = vmatprep.subr.mxu0 0.0
  %142 = vmatpush1.msra.mxu0 0.0
  %143 = vmatprep.subr.mxu0 0.0
  %144 = vmatpush1.msra.mxu0 0.0
  %145 = vmatprep.subr.mxu0 0.0
  %146 = vmatpush1.msra.mxu0 0.0
  %147 = vmatprep.subr.mxu0 0.0
  %148 = vmatpush1.msra.mxu0 0.0
  %149 = vmatprep.subr.mxu0 0.0
  %150 = vmatpush1.msra.mxu0 0.0
  %151 = vmatprep.subr.mxu0 %v102
  %152 = vmatpush1.msra.mxu0 %v99
  %153 = vmatprep.subr.mxu0 %v66
  %154 = vmatpush1.msra.mxu0 %v65
  %155 = vmatprep.subr.mxu0 %v55
  %156 = vmatpush1.msra.mxu0 %v54
  %157 = vmatprep.subr.mxu0 %v44
  %158 = vmatpush1.msra.mxu0 %v43
  %159 = vmatprep.subr.mxu0 %v33
  %160 = vmatpush1.msra.mxu0 %v32
  %161 = vmatprep.subr.mxu0 %v22
  %162 = vmatpush1.msra.mxu0 %v21
  %163 = vmatprep.subr.mxu0 0.0
  %164 = vmatpush2.msra.mxu0 0.0
  %165 = vmatprep.subr.mxu0 0.0
  %166 = vmatpush2.msra.mxu0 0.0
  %167 = vmatprep.subr.mxu0 0.0
  %168 = vmatpush2.msra.mxu0 0.0
  %169 = vmatprep.subr.mxu0 0.0
  %170 = vmatpush2.msra.mxu0 0.0
  %171 = vmatprep.subr.mxu0 0.0
  %172 = vmatpush2.msra.mxu0 0.0
  %173 = vmatprep.subr.mxu0 0.0
  %174 = vmatpush2.msra.mxu0 0.0
  %175 = vmatprep.subr.mxu0 0.0
  %176 = vmatpush2.msra.mxu0 0.0
  %177 = vmatprep.subr.mxu0 0.0
  %178 = vmatpush2.msra.mxu0 0.0
  %179 = vmatprep.subr.mxu0 0.0
  %180 = vmatpush2.msra.mxu0 0.0
  %181 = vmatprep.subr.mxu0 0.0
  %182 = vmatpush2.msra.mxu0 0.0
  %183 = vmatprep.subr.mxu0 0.0
  %184 = vmatpush2.msra.mxu0 0.0
  %185 = vmatprep.subr.mxu0 0.0
  %186 = vmatpush2.msra.mxu0 0.0
  %187 = vmatprep.subr.mxu0 0.0
  %188 = vmatpush2.msra.mxu0 0.0
  %189 = vmatprep.subr.mxu0 0.0
  %190 = vmatpush2.msra.mxu0 0.0
  %191 = vmatprep.subr.mxu0 0.0
  %192 = vmatpush2.msra.mxu0 0.0
  %193 = vmatprep.subr.mxu0 0.0
  %194 = vmatpush2.msra.mxu0 0.0
  %195 = vmatprep.mubr.f32.mxu0 0.0
  %196 = vmatmul.mubr.f32.gmra.mxu0 %v95
  %v197 = vpop.f32.mrf.mxu0
  %v198 = vadd.f32 %v91, %v197
  %v199 = vpop.f32.mrf.mxu0
  %v200 = vadd.f32 %v91, %v199
  %201 = vdwg.mxu0
  %202 = vmatprep.subr.mxu0 0.0
  %203 = vmatpush1.msra.mxu0 0.0
  %204 = vmatprep.subr.mxu0 0.0
  %205 = vmatpush1.msra.mxu0 0.0
  %206 = vmatprep.subr.mxu0 0.0
  %207 = vmatpush1.msra.mxu0 0.0
  %208 = vmatprep.subr.mxu0 0.0
  %209 = vmatpush1.msra.mxu0 0.0
  %210 = vmatprep.subr.mxu0 0.0
  %211 = vmatpush1.msra.mxu0 0.0
  %212 = vmatprep.subr.mxu0 0.0
  %213 = vmatpush1.msra.mxu0 0.0
  %214 = vmatprep.subr.mxu0 0.0
  %215 = vmatpush1.msra.mxu0 0.0
  %216 = vmatprep.subr.mxu0 0.0
  %217 = vmatpush1.msra.mxu0 0.0
  %218 = vmatprep.subr.mxu0 0.0
  %219 = vmatpush1.msra.mxu0 0.0
  %220 = vmatprep.subr.mxu0 0.0
  %221 = vmatpush1.msra.mxu0 0.0
  %222 = vmatprep.subr.mxu0 %v108
  %223 = vmatpush1.msra.mxu0 %v105
  %224 = vmatprep.subr.mxu0 %v68
  %225 = vmatpush1.msra.mxu0 %v67
  %226 = vmatprep.subr.mxu0 %v57
  %227 = vmatpush1.msra.mxu0 %v56
  %228 = vmatprep.subr.mxu0 %v46
  %229 = vmatpush1.msra.mxu0 %v45
  %230 = vmatprep.subr.mxu0 %v35
  %231 = vmatpush1.msra.mxu0 %v34
  %232 = vmatprep.subr.mxu0 %v24
  %233 = vmatpush1.msra.mxu0 %v23
  %234 = vmatprep.subr.mxu0 0.0
  %235 = vmatpush2.msra.mxu0 0.0
  %236 = vmatprep.subr.mxu0 0.0
  %237 = vmatpush2.msra.mxu0 0.0
  %238 = vmatprep.subr.mxu0 0.0
  %239 = vmatpush2.msra.mxu0 0.0
  %240 = vmatprep.subr.mxu0 0.0
  %241 = vmatpush2.msra.mxu0 0.0
  %242 = vmatprep.subr.mxu0 0.0
  %243 = vmatpush2.msra.mxu0 0.0
  %244 = vmatprep.subr.mxu0 0.0
  %245 = vmatpush2.msra.mxu0 0.0
  %246 = vmatprep.subr.mxu0 0.0
  %247 = vmatpush2.msra.mxu0 0.0
  %248 = vmatprep.subr.mxu0 0.0
  %249 = vmatpush2.msra.mxu0 0.0
  %250 = vmatprep.subr.mxu0 0.0
  %251 = vmatpush2.msra.mxu0 0.0
  %252 = vmatprep.subr.mxu0 0.0
  %253 = vmatpush2.msra.mxu0 0.0
  %254 = vmatprep.subr.mxu0 0.0
  %255 = vmatpush2.msra.mxu0 0.0
  %256 = vmatprep.subr.mxu0 0.0
  %257 = vmatpush2.msra.mxu0 0.0
  %258 = vmatprep.subr.mxu0 0.0
  %259 = vmatpush2.msra.mxu0 0.0
  %260 = vmatprep.subr.mxu0 0.0
  %261 = vmatpush2.msra.mxu0 0.0
  %262 = vmatprep.subr.mxu0 0.0
  %263 = vmatpush2.msra.mxu0 0.0
  %264 = vmatprep.subr.mxu0 0.0
  %265 = vmatpush2.msra.mxu0 0.0
  %266 = vmatprep.mubr.f32.mxu0 0.0
  %267 = vmatmul.mubr.f32.gmra.mxu0 %v95
  %v268 = vpop.f32.mrf.mxu0
  %v269 = vadd.f32 %v91, %v268
  %v270 = vpop.f32.mrf.mxu0
  %v271 = vadd.f32 %v91, %v270
  %272 = vdwg.mxu0
  %273 = vmatprep.subr.mxu0 0.0
  %274 = vmatpush1.msra.mxu0 0.0
  %275 = vmatprep.subr.mxu0 0.0
  %276 = vmatpush1.msra.mxu0 0.0
  %277 = vmatprep.subr.mxu0 0.0
  %278 = vmatpush1.msra.mxu0 0.0
  %279 = vmatprep.subr.mxu0 0.0
  %280 = vmatpush1.msra.mxu0 0.0
  %281 = vmatprep.subr.mxu0 0.0
  %282 = vmatpush1.msra.mxu0 0.0
  %283 = vmatprep.subr.mxu0 0.0
  %284 = vmatpush1.msra.mxu0 0.0
  %285 = vmatprep.subr.mxu0 0.0
  %286 = vmatpush1.msra.mxu0 0.0
  %287 = vmatprep.subr.mxu0 0.0
  %288 = vmatpush1.msra.mxu0 0.0
  %289 = vmatprep.subr.mxu0 0.0
  %290 = vmatpush1.msra.mxu0 0.0
  %291 = vmatprep.subr.mxu0 0.0
  %292 = vmatpush1.msra.mxu0 0.0
  %293 = vmatprep.subr.mxu0 %v114
  %294 = vmatpush1.msra.mxu0 %v111
  %295 = vmatprep.subr.mxu0 %v70
  %296 = vmatpush1.msra.mxu0 %v69
  %297 = vmatprep.subr.mxu0 %v59
  %298 = vmatpush1.msra.mxu0 %v58
  %299 = vmatprep.subr.mxu0 %v48
  %300 = vmatpush1.msra.mxu0 %v47
  %301 = vmatprep.subr.mxu0 %v37
  %302 = vmatpush1.msra.mxu0 %v36
  %303 = vmatprep.subr.mxu0 %v26
  %304 = vmatpush1.msra.mxu0 %v25
  %305 = vmatprep.subr.mxu0 0.0
  %306 = vmatpush2.msra.mxu0 0.0
  %307 = vmatprep.subr.mxu0 0.0
  %308 = vmatpush2.msra.mxu0 0.0
  %309 = vmatprep.subr.mxu0 0.0
  %310 = vmatpush2.msra.mxu0 0.0
  %311 = vmatprep.subr.mxu0 0.0
  %312 = vmatpush2.msra.mxu0 0.0
  %313 = vmatprep.subr.mxu0 0.0
  %314 = vmatpush2.msra.mxu0 0.0
  %315 = vmatprep.subr.mxu0 0.0
  %316 = vmatpush2.msra.mxu0 0.0
  %317 = vmatprep.subr.mxu0 0.0
  %318 = vmatpush2.msra.mxu0 0.0
  %319 = vmatprep.subr.mxu0 0.0
  %320 = vmatpush2.msra.mxu0 0.0
  %321 = vmatprep.subr.mxu0 0.0
  %322 = vmatpush2.msra.mxu0 0.0
  %323 = vmatprep.subr.mxu0 0.0
  %324 = vmatpush2.msra.mxu0 0.0
  %325 = vmatprep.subr.mxu0 0.0
  %326 = vmatpush2.msra.mxu0 0.0
  %327 = vmatprep.subr.mxu0 0.0
  %328 = vmatpush2.msra.mxu0 0.0
  %329 = vmatprep.subr.mxu0 0.0
  %330 = vmatpush2.msra.mxu0 0.0
  %331 = vmatprep.subr.mxu0 0.0
  %332 = vmatpush2.msra.mxu0 0.0
  %333 = vmatprep.subr.mxu0 0.0
  %334 = vmatpush2.msra.mxu0 0.0
  %335 = vmatprep.subr.mxu0 0.0
  %336 = vmatpush2.msra.mxu0 0.0
  %337 = vmatprep.mubr.f32.mxu0 0.0
  %338 = vmatmul.mubr.f32.gmra.mxu0 %v95
  %v339 = vpop.f32.mrf.mxu0
  %v340 = vadd.f32 %v91, %v339
  %v341 = vpop.f32.mrf.mxu0
  %v342 = vadd.f32 %v91, %v341
  %343 = vdwg.mxu0
  %344 = vmatprep.subr.mxu0 0.0
  %345 = vmatpush1.msra.mxu0 0.0
  %346 = vmatprep.subr.mxu0 0.0
  %347 = vmatpush1.msra.mxu0 0.0
  %348 = vmatprep.subr.mxu0 0.0
  %349 = vmatpush1.msra.mxu0 0.0
  %350 = vmatprep.subr.mxu0 0.0
  %351 = vmatpush1.msra.mxu0 0.0
  %352 = vmatprep.subr.mxu0 0.0
  %353 = vmatpush1.msra.mxu0 0.0
  %354 = vmatprep.subr.mxu0 0.0
  %355 = vmatpush1.msra.mxu0 0.0
  %356 = vmatprep.subr.mxu0 0.0
  %357 = vmatpush1.msra.mxu0 0.0
  %358 = vmatprep.subr.mxu0 0.0
  %359 = vmatpush1.msra.mxu0 0.0
  %360 = vmatprep.subr.mxu0 0.0
  %361 = vmatpush1.msra.mxu0 0.0
  %362 = vmatprep.subr.mxu0 0.0
  %363 = vmatpush1.msra.mxu0 0.0
  %364 = vmatprep.subr.mxu0 %v120
  %365 = vmatpush1.msra.mxu0 %v117
  %366 = vmatprep.subr.mxu0 %v72
  %367 = vmatpush1.msra.mxu0 %v71
  %368 = vmatprep.subr.mxu0 %v61
  %369 = vmatpush1.msra.mxu0 %v60
  %370 = vmatprep.subr.mxu0 %v50
  %371 = vmatpush1.msra.mxu0 %v49
  %372 = vmatprep.subr.mxu0 %v39
  %373 = vmatpush1.msra.mxu0 %v38
  %374 = vmatprep.subr.mxu0 %v28
  %375 = vmatpush1.msra.mxu0 %v27
  %376 = vmatprep.subr.mxu0 0.0
  %377 = vmatpush2.msra.mxu0 0.0
  %378 = vmatprep.subr.mxu0 0.0
  %379 = vmatpush2.msra.mxu0 0.0
  %380 = vmatprep.subr.mxu0 0.0
  %381 = vmatpush2.msra.mxu0 0.0
  %382 = vmatprep.subr.mxu0 0.0
  %383 = vmatpush2.msra.mxu0 0.0
  %384 = vmatprep.subr.mxu0 0.0
  %385 = vmatpush2.msra.mxu0 0.0
  %386 = vmatprep.subr.mxu0 0.0
  %387 = vmatpush2.msra.mxu0 0.0
  %388 = vmatprep.subr.mxu0 0.0
  %389 = vmatpush2.msra.mxu0 0.0
  %390 = vmatprep.subr.mxu0 0.0
  %391 = vmatpush2.msra.mxu0 0.0
  %392 = vmatprep.subr.mxu0 0.0
  %393 = vmatpush2.msra.mxu0 0.0
  %394 = vmatprep.subr.mxu0 0.0
  %395 = vmatpush2.msra.mxu0 0.0
  %396 = vmatprep.subr.mxu0 0.0
  %397 = vmatpush2.msra.mxu0 0.0
  %398 = vmatprep.subr.mxu0 0.0
  %399 = vmatpush2.msra.mxu0 0.0
  %400 = vmatprep.subr.mxu0 0.0
  %401 = vmatpush2.msra.mxu0 0.0
  %402 = vmatprep.subr.mxu0 0.0
  %403 = vmatpush2.msra.mxu0 0.0
  %404 = vmatprep.subr.mxu0 0.0
  %405 = vmatpush2.msra.mxu0 0.0
  %406 = vmatprep.subr.mxu0 0.0
  %407 = vmatpush2.msra.mxu0 0.0
  %408 = vmatprep.mubr.f32.mxu0 0.0
  %409 = vmatmul.mubr.f32.gmra.mxu0 %v95
  %v410 = vpop.f32.mrf.mxu0
  %v411 = vadd.f32 %v91, %v410
  %v412 = vpop.f32.mrf.mxu0
  %v413 = vadd.f32 %v91, %v412
  %414 = vdwg.mxu0
  %415 = vmatprep.subr.mxu0 0.0
  %416 = vmatpush1.msra.mxu0 0.0
  %417 = vmatprep.subr.mxu0 0.0
  %418 = vmatpush1.msra.mxu0 0.0
  %419 = vmatprep.subr.mxu0 0.0
  %420 = vmatpush1.msra.mxu0 0.0
  %421 = vmatprep.subr.mxu0 0.0
  %422 = vmatpush1.msra.mxu0 0.0
  %423 = vmatprep.subr.mxu0 0.0
  %424 = vmatpush1.msra.mxu0 0.0
  %425 = vmatprep.subr.mxu0 0.0
  %426 = vmatpush1.msra.mxu0 0.0
  %427 = vmatprep.subr.mxu0 0.0
  %428 = vmatpush1.msra.mxu0 0.0
  %429 = vmatprep.subr.mxu0 0.0
  %430 = vmatpush1.msra.mxu0 0.0
  %431 = vmatprep.subr.mxu0 0.0
  %432 = vmatpush1.msra.mxu0 0.0
  %433 = vmatprep.subr.mxu0 0.0
  %434 = vmatpush1.msra.mxu0 0.0
  %435 = vmatprep.subr.mxu0 %v126
  %436 = vmatpush1.msra.mxu0 %v123
  %437 = vmatprep.subr.mxu0 %v74
  %438 = vmatpush1.msra.mxu0 %v73
  %439 = vmatprep.subr.mxu0 %v63
  %440 = vmatpush1.msra.mxu0 %v62
  %441 = vmatprep.subr.mxu0 %v52
  %442 = vmatpush1.msra.mxu0 %v51
  %443 = vmatprep.subr.mxu0 %v41
  %444 = vmatpush1.msra.mxu0 %v40
  %445 = vmatprep.subr.mxu0 %v30
  %446 = vmatpush1.msra.mxu0 %v29
  %447 = vmatprep.subr.mxu0 0.0
  %448 = vmatpush2.msra.mxu0 0.0
  %449 = vmatprep.subr.mxu0 0.0
  %450 = vmatpush2.msra.mxu0 0.0
  %451 = vmatprep.subr.mxu0 0.0
  %452 = vmatpush2.msra.mxu0 0.0
  %453 = vmatprep.subr.mxu0 0.0
  %454 = vmatpush2.msra.mxu0 0.0
  %455 = vmatprep.subr.mxu0 0.0
  %456 = vmatpush2.msra.mxu0 0.0
  %457 = vmatprep.subr.mxu0 0.0
  %458 = vmatpush2.msra.mxu0 0.0
  %459 = vmatprep.subr.mxu0 0.0
  %460 = vmatpush2.msra.mxu0 0.0
  %461 = vmatprep.subr.mxu0 0.0
  %462 = vmatpush2.msra.mxu0 0.0
  %463 = vmatprep.subr.mxu0 0.0
  %464 = vmatpush2.msra.mxu0 0.0
  %465 = vmatprep.subr.mxu0 0.0
  %466 = vmatpush2.msra.mxu0 0.0
  %467 = vmatprep.subr.mxu0 0.0
  %468 = vmatpush2.msra.mxu0 0.0
  %469 = vmatprep.subr.mxu0 0.0
  %470 = vmatpush2.msra.mxu0 0.0
  %471 = vmatprep.subr.mxu0 0.0
  %472 = vmatpush2.msra.mxu0 0.0
  %473 = vmatprep.subr.mxu0 0.0
  %474 = vmatpush2.msra.mxu0 0.0
  %475 = vmatprep.subr.mxu0 0.0
  %476 = vmatpush2.msra.mxu0 0.0
  %477 = vmatprep.subr.mxu0 0.0
  %478 = vmatpush2.msra.mxu0 0.0
  %479 = vmatprep.mubr.f32.mxu0 0.0
  %480 = vmatmul.mubr.f32.gmra.mxu0 %v95
  %v481 = vpop.f32.mrf.mxu0
  %v482 = vadd.f32 %v91, %v481
  %v483 = vpop.f32.mrf.mxu0
  %v484 = vadd.f32 %v91, %v483
  %485 = vdwg.mxu0
  %486 = vmatprep.subr.mxu0 0.0
  %487 = vmatpush1.msra.mxu0 0.0
  %488 = vmatprep.subr.mxu0 0.0
  %489 = vmatpush1.msra.mxu0 0.0
  %490 = vmatprep.subr.mxu0 0.0
  %491 = vmatpush1.msra.mxu0 0.0
  %492 = vmatprep.subr.mxu0 0.0
  %493 = vmatpush1.msra.mxu0 0.0
  %494 = vmatprep.subr.mxu0 0.0
  %495 = vmatpush1.msra.mxu0 0.0
  %496 = vmatprep.subr.mxu0 0.0
  %497 = vmatpush1.msra.mxu0 0.0
  %498 = vmatprep.subr.mxu0 0.0
  %499 = vmatpush1.msra.mxu0 0.0
  %500 = vmatprep.subr.mxu0 0.0
  %501 = vmatpush1.msra.mxu0 0.0
  %502 = vmatprep.subr.mxu0 0.0
  %503 = vmatpush1.msra.mxu0 0.0
  %504 = vmatprep.subr.mxu0 0.0
  %505 = vmatpush1.msra.mxu0 0.0
  %506 = vmatprep.subr.mxu0 0.0
  %507 = vmatpush1.msra.mxu0 %v129
  %508 = vmatprep.subr.mxu0 0.0
  %509 = vmatpush1.msra.mxu0 %v75
  %510 = vmatprep.subr.mxu0 0.0
  %511 = vmatpush1.msra.mxu0 %v64
  %512 = vmatprep.subr.mxu0 0.0
  %513 = vmatpush1.msra.mxu0 %v53
  %514 = vmatprep.subr.mxu0 0.0
  %515 = vmatpush1.msra.mxu0 %v42
  %516 = vmatprep.subr.mxu0 0.0
  %517 = vmatpush1.msra.mxu0 %v31
  %518 = vmatprep.subr.mxu0 0.0
  %519 = vmatpush2.msra.mxu0 0.0
  %520 = vmatprep.subr.mxu0 0.0
  %521 = vmatpush2.msra.mxu0 0.0
  %522 = vmatprep.subr.mxu0 0.0
  %523 = vmatpush2.msra.mxu0 0.0
  %524 = vmatprep.subr.mxu0 0.0
  %525 = vmatpush2.msra.mxu0 0.0
  %526 = vmatprep.subr.mxu0 0.0
  %527 = vmatpush2.msra.mxu0 0.0
  %528 = vmatprep.subr.mxu0 0.0
  %529 = vmatpush2.msra.mxu0 0.0
  %530 = vmatprep.subr.mxu0 0.0
  %531 = vmatpush2.msra.mxu0 0.0
  %532 = vmatprep.subr.mxu0 0.0
  %533 = vmatpush2.msra.mxu0 0.0
  %534 = vmatprep.subr.mxu0 0.0
  %535 = vmatpush2.msra.mxu0 0.0
  %536 = vmatprep.subr.mxu0 0.0
  %537 = vmatpush2.msra.mxu0 0.0
  %538 = vmatprep.subr.mxu0 0.0
  %539 = vmatpush2.msra.mxu0 0.0
  %540 = vmatprep.subr.mxu0 0.0
  %541 = vmatpush2.msra.mxu0 0.0
  %542 = vmatprep.subr.mxu0 0.0
  %543 = vmatpush2.msra.mxu0 0.0
  %544 = vmatprep.subr.mxu0 0.0
  %545 = vmatpush2.msra.mxu0 0.0
  %546 = vmatprep.subr.mxu0 0.0
  %547 = vmatpush2.msra.mxu0 0.0
  %548 = vmatprep.subr.mxu0 0.0
  %549 = vmatpush2.msra.mxu0 0.0
  %550 = vmatprep.mubr.f32.mxu0 0.0
  %551 = vmatmul.mubr.f32.gmra.mxu0 %v95
  %v552 = vpop.f32.mrf.mxu0
  %v553 = vadd.f32 %v91, %v552
  %v554 = vpop.f32.mrf.mxu0
  %555 = vdwg.mxu0
  %v556 = vsel %vm97, %v198, 0.0
  %v557 = vsel %vm97, %v200, 0.0
  %v558 = vadd.f32 %v556, %v557
  %v559 = vsel %vm97, %v269, 0.0
  %v560 = vadd.f32 %v558, %v559
  %v561 = vsel %vm97, %v271, 0.0
  %v562 = vadd.f32 %v560, %v561
  %v563 = vsel %vm97, %v340, 0.0
  %v564 = vadd.f32 %v562, %v563
  %v565 = vsel %vm97, %v342, 0.0
  %v566 = vadd.f32 %v564, %v565
  %v567 = vsel %vm97, %v411, 0.0
  %v568 = vadd.f32 %v566, %v567
  %v569 = vsel %vm97, %v413, 0.0
  %v570 = vadd.f32 %v568, %v569
  %v571 = vsel %vm97, %v482, 0.0
  %v572 = vadd.f32 %v570, %v571
  %v573 = vsel %vm97, %v484, 0.0
  %v574 = vadd.f32 %v572, %v573
  %v575 = vsel %vm97, %v553, 0.0
  %v576 = vadd.f32 %v574, %v575
  %577 = vadd.xlane.f32.xlu0 %v576
  %v578 = vpop.xlane.xlu0 %577
  %v579 = vmul.f32 %v578, 0.0007102273
  %v580 = vmul.f32 %v198, %v198
  %v581 = vmul.f32 %v200, %v200
  %v582 = vmul.f32 %v269, %v269
  %v583 = vmul.f32 %v271, %v271
  %v584 = vmul.f32 %v340, %v340
  %v585 = vmul.f32 %v342, %v342
  %v586 = vmul.f32 %v411, %v411
  %v587 = vmul.f32 %v413, %v413
  %v588 = vmul.f32 %v482, %v482
  %v589 = vmul.f32 %v484, %v484
  %v590 = vmul.f32 %v553, %v553
  %v591 = vsel %vm97, %v580, 0.0
  %v592 = vsel %vm97, %v581, 0.0
  %v593 = vadd.f32 %v591, %v592
  %v594 = vsel %vm97, %v582, 0.0
  %v595 = vadd.f32 %v593, %v594
  %v596 = vsel %vm97, %v583, 0.0
  %v597 = vadd.f32 %v595, %v596
  %v598 = vsel %vm97, %v584, 0.0
  %v599 = vadd.f32 %v597, %v598
  %v600 = vsel %vm97, %v585, 0.0
  %v601 = vadd.f32 %v599, %v600
  %v602 = vsel %vm97, %v586, 0.0
  %v603 = vadd.f32 %v601, %v602
  %v604 = vsel %vm97, %v587, 0.0
  %v605 = vadd.f32 %v603, %v604
  %v606 = vsel %vm97, %v588, 0.0
  %v607 = vadd.f32 %v605, %v606
  %v608 = vsel %vm97, %v589, 0.0
  %v609 = vadd.f32 %v607, %v608
  %v610 = vsel %vm97, %v590, 0.0
  %v611 = vadd.f32 %v609, %v610
  %612 = vadd.xlane.f32.xlu0 %v611
  %v613 = vpop.xlane.xlu0 %612
  %v614 = vmul.f32 %v613, 0.0007102273
  %v615 = vmul.f32 %v579, %v579
  %v616 = vsub.f32 %v614, %v615
  %v617 = vadd.f32 %v616, 1e-05
  %v618 = vrsqrt.pop %v617
  %v619 = vld [vmem:[%s2] sm:$0xf]
  %v620 = vmul.f32 %v618, %v619
  %v621 = vsub.f32 %v198, %v579
  %v622 = vsub.f32 %v200, %v579
  %v623 = vsub.f32 %v269, %v579
  %v624 = vsub.f32 %v271, %v579
  %v625 = vsub.f32 %v340, %v579
  %v626 = vsub.f32 %v342, %v579
  %v627 = vsub.f32 %v411, %v579
  %v628 = vsub.f32 %v413, %v579
  %v629 = vsub.f32 %v482, %v579
  %v630 = vsub.f32 %v484, %v579
  %v631 = vsub.f32 %v553, %v579
  %633 = vset.pattern.permute.xlu0 0
  %634 = vperm.xlu0 %633, %v620
  %v635 = vpop.permute.xlu0 %634
  %v637 = vmul.f32 %v621, %v635
  %v638 = vmul.f32 %v622, %v635
  %v639 = vmul.f32 %v623, %v635
  %v640 = vmul.f32 %v624, %v635
  %v641 = vmul.f32 %v625, %v635
  %v642 = vmul.f32 %v626, %v635
  %v643 = vmul.f32 %v627, %v635
  %v644 = vmul.f32 %v628, %v635
  %v645 = vmul.f32 %v629, %v635
  %v646 = vmul.f32 %v630, %v635
  %v647 = vmul.f32 %v631, %v635
  %v648 = vld [vmem:[%s3] sm:$0xf]
  %650 = vset.pattern.permute.xlu0 0
  %651 = vperm.xlu0 %650, %v648
  %v652 = vpop.permute.xlu0 %651
  %v654 = vadd.f32 %v637, %v652
  %v655 = vadd.f32 %v638, %v652
  %v656 = vadd.f32 %v639, %v652
  %v657 = vadd.f32 %v640, %v652
  %v658 = vadd.f32 %v641, %v652
  %v659 = vadd.f32 %v642, %v652
  %v660 = vadd.f32 %v643, %v652
  %v661 = vadd.f32 %v644, %v652
  %v662 = vadd.f32 %v645, %v652
  %v663 = vadd.f32 %v646, %v652
  %v664 = vadd.f32 %v647, %v652
  %v665 = vmax.f32 %v654, 0.0
  %v666 = vmax.f32 %v655, 0.0
  %v667 = vmax.f32 %v656, 0.0
  %v668 = vmax.f32 %v657, 0.0
  %v669 = vmax.f32 %v658, 0.0
  %v670 = vmax.f32 %v659, 0.0
  %v671 = vmax.f32 %v660, 0.0
  %v672 = vmax.f32 %v661, 0.0
  %v673 = vmax.f32 %v662, 0.0
  %v674 = vmax.f32 %v663, 0.0
  %v675 = vmax.f32 %v664, 0.0
  %v686 = vcombine.low %v665, %v666
  %v687 = vcombine.low %v667, %v668
  %v688 = vcombine.low %v669, %v670
  %v689 = vcombine.low %v671, %v672
  %v690 = vcombine.low %v673, %v674
  %696 = vst [vmem:[%s5] sm:$0xff] %v686
  %697 = vst [vmem:[%s5 + $0x8] sm:$0xff] %v687
  %698 = vst [vmem:[%s5 + $0x10] sm:$0xff] %v688
  %699 = vst [vmem:[%s5 + $0x18] sm:$0xff] %v689
  %700 = vst [vmem:[%s5 + $0x20] sm:$0xff] %v690
  %701 = vst [vmem:[%s5 + $0x28] sm:$0xf] %v675
  // Predicated region
  $region22: #{mscp_forward.6} parent=0 // pred_check
    _
  $region23: #{mscp_forward.6} parent=0 // pred_check_branch
    %703 = sbr.rel (0) target = $region25
  $region24: #{mscp_forward.6} parent=0 // pred_region
    _
  $region25: #{mscp_forward.6} parent=0 // pred_fallthru
    _
  // Predicated region
  $region26: #{mscp_forward.6} parent=0 // pred_check
    _
  $region27: #{mscp_forward.6} parent=0 // pred_check_branch
    %705 = sbr.rel (0) target = $region29
  $region28: #{mscp_forward.6} parent=0 // pred_region
    _
  $region29: #{mscp_forward.6} parent=0 // pred_fallthru
    _

// kernel: mscp_forward.7
$region0: #{mscp_forward.7}
  #allocation0 [shape = 'u32[]', space=smem, size = 0x4, offset = 0x4, fixed_abs, tag = 'smem constant byte address 0x4 - core index']
  #allocation1 [shape = 'u32[144,128]{1,0:T(1,128)}', space=vmem, size = 0x12000, scoped, tag = 'internal scratch']
  %s0 = inlined_call_operand.vmem [shape: f32[8,324], index: 0, kind: input, shape index: {}]
  %s1 = inlined_call_operand.vmem [shape: f32[8,1], index: 1, kind: input, shape index: {}]
  %s2 = inlined_call_operand.vmem [shape: f32[324,384], index: 2, kind: input, shape index: {}]
  %s3 = inlined_call_operand.vmem [shape: f32[8,384], index: 3, kind: output, shape index: {}]
  %s4 = sld [smem:[#allocation0]]
  $region22: #{mscp_forward.7} parent=0
    _
  %s6 = ssub.s32 1, %s4
  %s7 = scalar_select 0, %s6, %s4
  // Predicated region
  $region2: #{mscp_forward.7} parent=0 // pred_check
    _
  $region3: #{mscp_forward.7} parent=0 // pred_check_branch
    %9 = sbr.rel (0) target = $region5
  $region4: #{mscp_forward.7} parent=0 // pred_region
    _
  $region5: #{mscp_forward.7} parent=0 // pred_fallthru
    _
  // Predicated region
  $region6: #{mscp_forward.7} parent=0 // pred_check
    _
  $region7: #{mscp_forward.7} parent=0 // pred_check_branch
    %11 = sbr.rel (0) target = $region9
  $region8: #{mscp_forward.7} parent=0 // pred_region
    _
  $region9: #{mscp_forward.7} parent=0 // pred_fallthru
    _
  // Predicated region
  $region10: #{mscp_forward.7} parent=0 // pred_check
    _
  $region11: #{mscp_forward.7} parent=0 // pred_check_branch
    %13 = sbr.rel (0) target = $region13
  $region12: #{mscp_forward.7} parent=0 // pred_region
    _
  $region13: #{mscp_forward.7} parent=0 // pred_fallthru
    _
  %v14 = vld [vmem:[%s0] sm:$0xff]
  %v15 = vld [vmem:[%s0 + $0x8] sm:$0xff]
  %v16 = vld [vmem:[%s0 + $0x10] sm:$0xff]
  %v17 = vld [vmem:[%s2] sm:$0xff]
  %v18 = vld [vmem:[%s2 + $0x8] sm:$0xff]
  %v19 = vld [vmem:[%s2 + $0x10] sm:$0xff]
  %v20 = vld [vmem:[%s2 + $0x18] sm:$0xff]
  %v21 = vld [vmem:[%s2 + $0x20] sm:$0xff]
  %v22 = vld [vmem:[%s2 + $0x28] sm:$0xff]
  %v23 = vld [vmem:[%s2 + $0x30] sm:$0xff]
  %v24 = vld [vmem:[%s2 + $0x38] sm:$0xff]
  %v25 = vld [vmem:[%s2 + $0x40] sm:$0xff]
  %v26 = vld [vmem:[%s2 + $0x48] sm:$0xff]
  %v27 = vld [vmem:[%s2 + $0x50] sm:$0xff]
  %v28 = vld [vmem:[%s2 + $0x58] sm:$0xff]
  %v29 = vld [vmem:[%s2 + $0x60] sm:$0xff]
  %v30 = vld [vmem:[%s2 + $0x68] sm:$0xff]
  %v31 = vld [vmem:[%s2 + $0x70] sm:$0xff]
  %v32 = vld [vmem:[%s2 + $0x78] sm:$0xff]
  %v33 = vld [vmem:[%s2 + $0x80] sm:$0xff]
  %v34 = vld [vmem:[%s2 + $0x88] sm:$0xff]
  %v35 = vld [vmem:[%s2 + $0x90] sm:$0xff]
  %v36 = vld [vmem:[%s2 + $0x98] sm:$0xff]
  %v37 = vld [vmem:[%s2 + $0xa0] sm:$0xff]
  %v38 = vld [vmem:[%s2 + $0xa8] sm:$0xff]
  %v39 = vld [vmem:[%s2 + $0xb0] sm:$0xff]
  %v40 = vld [vmem:[%s2 + $0xb8] sm:$0xff]
  %v41 = vld [vmem:[%s2 + $0xc0] sm:$0xff]
  %v42 = vld [vmem:[%s2 + $0xc8] sm:$0xff]
  %v43 = vld [vmem:[%s2 + $0xd0] sm:$0xff]
  %v44 = vld [vmem:[%s2 + $0xd8] sm:$0xff]
  %v45 = vld [vmem:[%s2 + $0xe0] sm:$0xff]
  %v46 = vld [vmem:[%s2 + $0xe8] sm:$0xff]
  %v47 = vld [vmem:[%s2 + $0xf0] sm:$0xff]
  %v48 = vld [vmem:[%s2 + $0xf8] sm:$0xff]
  %v49 = vld [vmem:[%s2 + $0x100] sm:$0xff]
  %v50 = vld [vmem:[%s2 + $0x108] sm:$0xff]
  %v51 = vld [vmem:[%s2 + $0x110] sm:$0xff]
  %v52 = vld [vmem:[%s2 + $0x118] sm:$0xff]
  %v53 = vld [vmem:[%s2 + $0x120] sm:$0xff]
  %v54 = vld [vmem:[%s2 + $0x128] sm:$0xff]
  %v55 = vld [vmem:[%s2 + $0x130] sm:$0xff]
  %v56 = vld [vmem:[%s2 + $0x138] sm:$0xff]
  %v57 = vld [vmem:[%s2 + $0x140] sm:$0xff]
  %v58 = vld [vmem:[%s2 + $0x148] sm:$0xff]
  %v59 = vld [vmem:[%s2 + $0x150] sm:$0xff]
  %v60 = vld [vmem:[%s2 + $0x158] sm:$0xff]
  %v61 = vld [vmem:[%s2 + $0x160] sm:$0xff]
  %v62 = vld [vmem:[%s2 + $0x168] sm:$0xff]
  %v63 = vld [vmem:[%s2 + $0x170] sm:$0xff]
  %v64 = vld [vmem:[%s2 + $0x178] sm:$0xff]
  %v65 = vld [vmem:[%s2 + $0x180] sm:$0xff]
  %v66 = vld [vmem:[%s2 + $0x188] sm:$0xff]
  %v67 = vld [vmem:[%s2 + $0x190] sm:$0xff]
  %v68 = vld [vmem:[%s2 + $0x198] sm:$0xff]
  %v69 = vld [vmem:[%s2 + $0x1a0] sm:$0xff]
  %v70 = vld [vmem:[%s2 + $0x1a8] sm:$0xff]
  %v71 = vld [vmem:[%s2 + $0x1b0] sm:$0xff]
  %v72 = vld [vmem:[%s2 + $0x1b8] sm:$0xff]
  %v73 = vld [vmem:[%s2 + $0x1c0] sm:$0xff]
  %v74 = vld [vmem:[%s2 + $0x1c8] sm:$0xff]
  %v75 = vld [vmem:[%s2 + $0x1d0] sm:$0xff]
  %v76 = vld [vmem:[%s2 + $0x1d8] sm:$0xff]
  %v77 = vld [vmem:[%s2 + $0x1e0] sm:$0xff]
  %v78 = vld [vmem:[%s2 + $0x1e8] sm:$0xff]
  %v79 = vld [vmem:[%s2 + $0x1f0] sm:$0xff]
  %v80 = vld [vmem:[%s2 + $0x1f8] sm:$0xff]
  %v81 = vld [vmem:[%s2 + $0x200] sm:$0xff]
  %v82 = vld [vmem:[%s2 + $0x208] sm:$0xff]
  %v83 = vld [vmem:[%s2 + $0x210] sm:$0xff]
  %v84 = vld [vmem:[%s2 + $0x218] sm:$0xff]
  %v85 = vld [vmem:[%s2 + $0x220] sm:$0xff]
  %v86 = vld [vmem:[%s2 + $0x228] sm:$0xff]
  %v87 = vld [vmem:[%s2 + $0x230] sm:$0xff]
  %v88 = vld [vmem:[%s2 + $0x238] sm:$0xff]
  %v89 = vld [vmem:[%s2 + $0x240] sm:$0xff]
  %v90 = vld [vmem:[%s2 + $0x248] sm:$0xff]
  %v91 = vld [vmem:[%s2 + $0x250] sm:$0xff]
  %v92 = vld [vmem:[%s2 + $0x258] sm:$0xff]
  %v93 = vld [vmem:[%s2 + $0x260] sm:$0xff]
  %v94 = vld [vmem:[%s2 + $0x268] sm:$0xff]
  %v95 = vld [vmem:[%s2 + $0x270] sm:$0xff]
  %v96 = vld [vmem:[%s2 + $0x278] sm:$0xff]
  %v97 = vld [vmem:[%s2 + $0x280] sm:$0xff]
  %v98 = vld [vmem:[%s2 + $0x288] sm:$0xff]
  %v99 = vld [vmem:[%s2 + $0x290] sm:$0xff]
  %v100 = vld [vmem:[%s2 + $0x298] sm:$0xff]
  %v101 = vld [vmem:[%s2 + $0x2a0] sm:$0xff]
  %v102 = vld [vmem:[%s2 + $0x2a8] sm:$0xff]
  %v103 = vld [vmem:[%s2 + $0x2b0] sm:$0xff]
  %v104 = vld [vmem:[%s2 + $0x2b8] sm:$0xff]
  %v105 = vld [vmem:[%s2 + $0x2c0] sm:$0xff]
  %v106 = vld [vmem:[%s2 + $0x2c8] sm:$0xff]
  %v107 = vld [vmem:[%s2 + $0x2d0] sm:$0xff]
  %v108 = vld [vmem:[%s2 + $0x2d8] sm:$0xff]
  %v109 = vld [vmem:[%s2 + $0x2e0] sm:$0xff]
  %v110 = vld [vmem:[%s2 + $0x2e8] sm:$0xff]
  %v111 = vld [vmem:[%s2 + $0x2f0] sm:$0xff]
  %v112 = vld [vmem:[%s2 + $0x2f8] sm:$0xff]
  %v113 = vld [vmem:[%s2 + $0x300] sm:$0xff]
  %v114 = vld [vmem:[%s2 + $0x308] sm:$0xff]
  %v115 = vld [vmem:[%s2 + $0x310] sm:$0xff]
  %v116 = vld [vmem:[%s2 + $0x318] sm:$0xff]
  %v117 = vld [vmem:[%s2 + $0x320] sm:$0xff]
  %v118 = vld [vmem:[%s2 + $0x328] sm:$0xff]
  %v119 = vld [vmem:[%s2 + $0x330] sm:$0xff]
  %v120 = vld [vmem:[%s2 + $0x338] sm:$0xff]
  %v121 = vld [vmem:[%s2 + $0x340] sm:$0xff]
  %v122 = vld [vmem:[%s2 + $0x348] sm:$0xff]
  %v123 = vld [vmem:[%s2 + $0x350] sm:$0xff]
  %v124 = vld [vmem:[%s2 + $0x358] sm:$0xff]
  %v125 = vld [vmem:[%s2 + $0x360] sm:$0xff]
  %v126 = vld [vmem:[%s2 + $0x368] sm:$0xff]
  %v127 = vld [vmem:[%s2 + $0x370] sm:$0xff]
  %v128 = vld [vmem:[%s2 + $0x378] sm:$0xff]
  %v129 = vld [vmem:[%s2 + $0x380] sm:$0xff]
  %v130 = vld [vmem:[%s2 + $0x388] sm:$0xff]
  %v131 = vld [vmem:[%s2 + $0x390] sm:$0xff]
  %v132 = vld [vmem:[%s2 + $0x398] sm:$0xff]
  %v133 = vld [vmem:[%s2 + $0x3a0] sm:$0xff]
  %v134 = vld [vmem:[%s2 + $0x3a8] sm:$0xff]
  %v135 = vld [vmem:[%s2 + $0x3b0] sm:$0xff]
  %v136 = vld [vmem:[%s2 + $0x3b8] sm:$0xff]
  %v137 = vld [vmem:[%s2 + $0x3c0] sm:$0xf]
  %v138 = vld [vmem:[%s2 + $0x3c8] sm:$0xf]
  %v139 = vld [vmem:[%s2 + $0x3d0] sm:$0xf]
  %v140 = vld [vmem:[%s1] sm:$0xff]
  %142 = vset.pattern.permute.xlu0 0
  %143 = vperm.xlu0 %142, %v140
  %v144 = vpop.permute.xlu0 %143
  %vm146 = vcmask 556032
  %v148 = vsel %vm146, %v16, 0
  %vm150 = vcmask 1043456
  %v152 = vsel %vm150, %v137, 0
  %v155 = vsel %vm150, %v138, 0
  %v158 = vsel %vm150, %v139, 0
  %160 = vmatprep.subr.mxu0 %v63
  %161 = vmatpush1.msra.mxu0 %v62
  %162 = vmatprep.subr.mxu0 %v60
  %163 = vmatpush1.msra.mxu0 %v59
  %164 = vmatprep.subr.mxu0 %v57
  %165 = vmatpush1.msra.mxu0 %v56
  %166 = vmatprep.subr.mxu0 %v54
  %167 = vmatpush1.msra.mxu0 %v53
  %168 = vmatprep.subr.mxu0 %v51
  %169 = vmatpush1.msra.mxu0 %v50
  %170 = vmatprep.subr.mxu0 %v48
  %171 = vmatpush1.msra.mxu0 %v47
  %172 = vmatprep.subr.mxu0 %v45
  %173 = vmatpush1.msra.mxu0 %v44
  %174 = vmatprep.subr.mxu0 %v42
  %175 = vmatpush1.msra.mxu0 %v41
  %176 = vmatprep.subr.mxu0 %v39
  %177 = vmatpush1.msra.mxu0 %v38
  %178 = vmatprep.subr.mxu0 %v36
  %179 = vmatpush1.msra.mxu0 %v35
  %180 = vmatprep.subr.mxu0 %v33
  %181 = vmatpush1.msra.mxu0 %v32
  %182 = vmatprep.subr.mxu0 %v30
  %183 = vmatpush1.msra.mxu0 %v29
  %184 = vmatprep.subr.mxu0 %v27
  %185 = vmatpush1.msra.mxu0 %v26
  %186 = vmatprep.subr.mxu0 %v24
  %187 = vmatpush1.msra.mxu0 %v23
  %188 = vmatprep.subr.mxu0 %v21
  %189 = vmatpush1.msra.mxu0 %v20
  %190 = vmatprep.subr.mxu0 %v18
  %191 = vmatpush1.msra.mxu0 %v17
  %192 = vmatprep.subr.mxu0 %v111
  %193 = vmatpush2.msra.mxu0 %v110
  %194 = vmatprep.subr.mxu0 %v108
  %195 = vmatpush2.msra.mxu0 %v107
  %196 = vmatprep.subr.mxu0 %v105
  %197 = vmatpush2.msra.mxu0 %v104
  %198 = vmatprep.subr.mxu0 %v102
  %199 = vmatpush2.msra.mxu0 %v101
  %200 = vmatprep.subr.mxu0 %v99
  %201 = vmatpush2.msra.mxu0 %v98
  %202 = vmatprep.subr.mxu0 %v96
  %203 = vmatpush2.msra.mxu0 %v95
  %204 = vmatprep.subr.mxu0 %v93
  %205 = vmatpush2.msra.mxu0 %v92
  %206 = vmatprep.subr.mxu0 %v90
  %207 = vmatpush2.msra.mxu0 %v89
  %208 = vmatprep.subr.mxu0 %v87
  %209 = vmatpush2.msra.mxu0 %v86
  %210 = vmatprep.subr.mxu0 %v84
  %211 = vmatpush2.msra.mxu0 %v83
  %212 = vmatprep.subr.mxu0 %v81
  %213 = vmatpush2.msra.mxu0 %v80
  %214 = vmatprep.subr.mxu0 %v78
  %215 = vmatpush2.msra.mxu0 %v77
  %216 = vmatprep.subr.mxu0 %v75
  %217 = vmatpush2.msra.mxu0 %v74
  %218 = vmatprep.subr.mxu0 %v72
  %219 = vmatpush2.msra.mxu0 %v71
  %220 = vmatprep.subr.mxu0 %v69
  %221 = vmatpush2.msra.mxu0 %v68
  %222 = vmatprep.subr.mxu0 %v66
  %223 = vmatpush2.msra.mxu0 %v65
  %224 = vmatprep.mubr.f32.mxu0 %v15
  %225 = vmatmul.mubr.f32.gmra.mxu0 %v14
  %v226 = vpop.f32.mrf.mxu0
  %v227 = vadd.f32 %v144, %v226
  %v228 = vpop.f32.mrf.mxu0
  %v229 = vadd.f32 %v144, %v228
  %230 = vdwg.mxu0
  %231 = vmatprep.subr.mxu0 0.0
  %232 = vmatpush1.msra.mxu0 0.0
  %233 = vmatprep.subr.mxu0 0.0
  %234 = vmatpush1.msra.mxu0 0.0
  %235 = vmatprep.subr.mxu0 0.0
  %236 = vmatpush1.msra.mxu0 0.0
  %237 = vmatprep.subr.mxu0 0.0
  %238 = vmatpush1.msra.mxu0 0.0
  %239 = vmatprep.subr.mxu0 0.0
  %240 = vmatpush1.msra.mxu0 0.0
  %241 = vmatprep.subr.mxu0 0.0
  %242 = vmatpush1.msra.mxu0 0.0
  %243 = vmatprep.subr.mxu0 0.0
  %244 = vmatpush1.msra.mxu0 0.0
  %245 = vmatprep.subr.mxu0 %v155
  %246 = vmatpush1.msra.mxu0 %v152
  %247 = vmatprep.subr.mxu0 %v135
  %248 = vmatpush1.msra.mxu0 %v134
  %249 = vmatprep.subr.mxu0 %v132
  %250 = vmatpush1.msra.mxu0 %v131
  %251 = vmatprep.subr.mxu0 %v129
  %252 = vmatpush1.msra.mxu0 %v128
  %253 = vmatprep.subr.mxu0 %v126
  %254 = vmatpush1.msra.mxu0 %v125
  %255 = vmatprep.subr.mxu0 %v123
  %256 = vmatpush1.msra.mxu0 %v122
  %257 = vmatprep.subr.mxu0 %v120
  %258 = vmatpush1.msra.mxu0 %v119
  %259 = vmatprep.subr.mxu0 %v117
  %260 = vmatpush1.msra.mxu0 %v116
  %261 = vmatprep.subr.mxu0 %v114
  %262 = vmatpush1.msra.mxu0 %v113
  %263 = vmatprep.subr.mxu0 0.0
  %264 = vmatpush2.msra.mxu0 0.0
  %265 = vmatprep.subr.mxu0 0.0
  %266 = vmatpush2.msra.mxu0 0.0
  %267 = vmatprep.subr.mxu0 0.0
  %268 = vmatpush2.msra.mxu0 0.0
  %269 = vmatprep.subr.mxu0 0.0
  %270 = vmatpush2.msra.mxu0 0.0
  %271 = vmatprep.subr.mxu0 0.0
  %272 = vmatpush2.msra.mxu0 0.0
  %273 = vmatprep.subr.mxu0 0.0
  %274 = vmatpush2.msra.mxu0 0.0
  %275 = vmatprep.subr.mxu0 0.0
  %276 = vmatpush2.msra.mxu0 0.0
  %277 = vmatprep.subr.mxu0 0.0
  %278 = vmatpush2.msra.mxu0 0.0
  %279 = vmatprep.subr.mxu0 0.0
  %280 = vmatpush2.msra.mxu0 0.0
  %281 = vmatprep.subr.mxu0 0.0
  %282 = vmatpush2.msra.mxu0 0.0
  %283 = vmatprep.subr.mxu0 0.0
  %284 = vmatpush2.msra.mxu0 0.0
  %285 = vmatprep.subr.mxu0 0.0
  %286 = vmatpush2.msra.mxu0 0.0
  %287 = vmatprep.subr.mxu0 0.0
  %288 = vmatpush2.msra.mxu0 0.0
  %289 = vmatprep.subr.mxu0 0.0
  %290 = vmatpush2.msra.mxu0 0.0
  %291 = vmatprep.subr.mxu0 0.0
  %292 = vmatpush2.msra.mxu0 0.0
  %293 = vmatprep.subr.mxu0 0.0
  %294 = vmatpush2.msra.mxu0 0.0
  %295 = vmatprep.mubr.f32.mxu0 0.0
  %296 = vmatmul.mubr.f32.gmra.mxu0 %v148
  %v297 = vpop.f32.mrf.mxu0
  %v298 = vadd.f32 %v227, %v297
  %v299 = vpop.f32.mrf.mxu0
  %v300 = vadd.f32 %v229, %v299
  %301 = vdwg.mxu0
  %302 = vmatprep.subr.mxu0 0.0
  %303 = vmatpush1.msra.mxu0 %v64
  %304 = vmatprep.subr.mxu0 0.0
  %305 = vmatpush1.msra.mxu0 %v61
  %306 = vmatprep.subr.mxu0 0.0
  %307 = vmatpush1.msra.mxu0 %v58
  %308 = vmatprep.subr.mxu0 0.0
  %309 = vmatpush1.msra.mxu0 %v55
  %310 = vmatprep.subr.mxu0 0.0
  %311 = vmatpush1.msra.mxu0 %v52
  %312 = vmatprep.subr.mxu0 0.0
  %313 = vmatpush1.msra.mxu0 %v49
  %314 = vmatprep.subr.mxu0 0.0
  %315 = vmatpush1.msra.mxu0 %v46
  %316 = vmatprep.subr.mxu0 0.0
  %317 = vmatpush1.msra.mxu0 %v43
  %318 = vmatprep.subr.mxu0 0.0
  %319 = vmatpush1.msra.mxu0 %v40
  %320 = vmatprep.subr.mxu0 0.0
  %321 = vmatpush1.msra.mxu0 %v37
  %322 = vmatprep.subr.mxu0 0.0
  %323 = vmatpush1.msra.mxu0 %v34
  %324 = vmatprep.subr.mxu0 0.0
  %325 = vmatpush1.msra.mxu0 %v31
  %326 = vmatprep.subr.mxu0 0.0
  %327 = vmatpush1.msra.mxu0 %v28
  %328 = vmatprep.subr.mxu0 0.0
  %329 = vmatpush1.msra.mxu0 %v25
  %330 = vmatprep.subr.mxu0 0.0
  %331 = vmatpush1.msra.mxu0 %v22
  %332 = vmatprep.subr.mxu0 0.0
  %333 = vmatpush1.msra.mxu0 %v19
  %334 = vmatprep.subr.mxu0 0.0
  %335 = vmatpush2.msra.mxu0 %v112
  %336 = vmatprep.subr.mxu0 0.0
  %337 = vmatpush2.msra.mxu0 %v109
  %338 = vmatprep.subr.mxu0 0.0
  %339 = vmatpush2.msra.mxu0 %v106
  %340 = vmatprep.subr.mxu0 0.0
  %341 = vmatpush2.msra.mxu0 %v103
  %342 = vmatprep.subr.mxu0 0.0
  %343 = vmatpush2.msra.mxu0 %v100
  %344 = vmatprep.subr.mxu0 0.0
  %345 = vmatpush2.msra.mxu0 %v97
  %346 = vmatprep.subr.mxu0 0.0
  %347 = vmatpush2.msra.mxu0 %v94
  %348 = vmatprep.subr.mxu0 0.0
  %349 = vmatpush2.msra.mxu0 %v91
  %350 = vmatprep.subr.mxu0 0.0
  %351 = vmatpush2.msra.mxu0 %v88
  %352 = vmatprep.subr.mxu0 0.0
  %353 = vmatpush2.msra.mxu0 %v85
  %354 = vmatprep.subr.mxu0 0.0
  %355 = vmatpush2.msra.mxu0 %v82
  %356 = vmatprep.subr.mxu0 0.0
  %357 = vmatpush2.msra.mxu0 %v79
  %358 = vmatprep.subr.mxu0 0.0
  %359 = vmatpush2.msra.mxu0 %v76
  %360 = vmatprep.subr.mxu0 0.0
  %361 = vmatpush2.msra.mxu0 %v73
  %362 = vmatprep.subr.mxu0 0.0
  %363 = vmatpush2.msra.mxu0 %v70
  %364 = vmatprep.subr.mxu0 0.0
  %365 = vmatpush2.msra.mxu0 %v67
  %366 = vmatprep.mubr.f32.mxu0 %v15
  %367 = vmatmul.mubr.f32.gmra.mxu0 %v14
  %v368 = vpop.f32.mrf.mxu0
  %v369 = vadd.f32 %v144, %v368
  %v370 = vpop.f32.mrf.mxu0
  %371 = vdwg.mxu0
  %372 = vmatprep.subr.mxu0 0.0
  %373 = vmatpush1.msra.mxu0 0.0
  %374 = vmatprep.subr.mxu0 0.0
  %375 = vmatpush1.msra.mxu0 0.0
  %376 = vmatprep.subr.mxu0 0.0
  %377 = vmatpush1.msra.mxu0 0.0
  %378 = vmatprep.subr.mxu0 0.0
  %379 = vmatpush1.msra.mxu0 0.0
  %380 = vmatprep.subr.mxu0 0.0
  %381 = vmatpush1.msra.mxu0 0.0
  %382 = vmatprep.subr.mxu0 0.0
  %383 = vmatpush1.msra.mxu0 0.0
  %384 = vmatprep.subr.mxu0 0.0
  %385 = vmatpush1.msra.mxu0 0.0
  %386 = vmatprep.subr.mxu0 0.0
  %387 = vmatpush1.msra.mxu0 %v158
  %388 = vmatprep.subr.mxu0 0.0
  %389 = vmatpush1.msra.mxu0 %v136
  %390 = vmatprep.subr.mxu0 0.0
  %391 = vmatpush1.msra.mxu0 %v133
  %392 = vmatprep.subr.mxu0 0.0
  %393 = vmatpush1.msra.mxu0 %v130
  %394 = vmatprep.subr.mxu0 0.0
  %395 = vmatpush1.msra.mxu0 %v127
  %396 = vmatprep.subr.mxu0 0.0
  %397 = vmatpush1.msra.mxu0 %v124
  %398 = vmatprep.subr.mxu0 0.0
  %399 = vmatpush1.msra.mxu0 %v121
  %400 = vmatprep.subr.mxu0 0.0
  %401 = vmatpush1.msra.mxu0 %v118
  %402 = vmatprep.subr.mxu0 0.0
  %403 = vmatpush1.msra.mxu0 %v115
  %404 = vmatprep.subr.mxu0 0.0
  %405 = vmatpush2.msra.mxu0 0.0
  %406 = vmatprep.subr.mxu0 0.0
  %407 = vmatpush2.msra.mxu0 0.0
  %408 = vmatprep.subr.mxu0 0.0
  %409 = vmatpush2.msra.mxu0 0.0
  %410 = vmatprep.subr.mxu0 0.0
  %411 = vmatpush2.msra.mxu0 0.0
  %412 = vmatprep.subr.mxu0 0.0
  %413 = vmatpush2.msra.mxu0 0.0
  %414 = vmatprep.subr.mxu0 0.0
  %415 = vmatpush2.msra.mxu0 0.0
  %416 = vmatprep.subr.mxu0 0.0
  %417 = vmatpush2.msra.mxu0 0.0
  %418 = vmatprep.subr.mxu0 0.0
  %419 = vmatpush2.msra.mxu0 0.0
  %420 = vmatprep.subr.mxu0 0.0
  %421 = vmatpush2.msra.mxu0 0.0
  %422 = vmatprep.subr.mxu0 0.0
  %423 = vmatpush2.msra.mxu0 0.0
  %424 = vmatprep.subr.mxu0 0.0
  %425 = vmatpush2.msra.mxu0 0.0
  %426 = vmatprep.subr.mxu0 0.0
  %427 = vmatpush2.msra.mxu0 0.0
  %428 = vmatprep.subr.mxu0 0.0
  %429 = vmatpush2.msra.mxu0 0.0
  %430 = vmatprep.subr.mxu0 0.0
  %431 = vmatpush2.msra.mxu0 0.0
  %432 = vmatprep.subr.mxu0 0.0
  %433 = vmatpush2.msra.mxu0 0.0
  %434 = vmatprep.subr.mxu0 0.0
  %435 = vmatpush2.msra.mxu0 0.0
  %436 = vmatprep.mubr.f32.mxu0 0.0
  %437 = vmatmul.mubr.f32.gmra.mxu0 %v148
  %v438 = vpop.f32.mrf.mxu0
  %v439 = vadd.f32 %v369, %v438
  %v440 = vpop.f32.mrf.mxu0
  %441 = vdwg.mxu0
  %v442 = vmax.f32 %v298, 0.0
  %v443 = vmax.f32 %v300, 0.0
  %v444 = vmax.f32 %v439, 0.0
  %445 = vst [vmem:[%s3] sm:$0xff] %v442
  %446 = vst [vmem:[%s3 + $0x8] sm:$0xff] %v443
  %447 = vst [vmem:[%s3 + $0x10] sm:$0xff] %v444
  // Predicated region
  $region14: #{mscp_forward.7} parent=0 // pred_check
    _
  $region15: #{mscp_forward.7} parent=0 // pred_check_branch
    %449 = sbr.rel (0) target = $region17
  $region16: #{mscp_forward.7} parent=0 // pred_region
    _
  $region17: #{mscp_forward.7} parent=0 // pred_fallthru
    _
  // Predicated region
  $region18: #{mscp_forward.7} parent=0 // pred_check
    _
  $region19: #{mscp_forward.7} parent=0 // pred_check_branch
    %451 = sbr.rel (0) target = $region21
  $region20: #{mscp_forward.7} parent=0 // pred_region
    _
  $region21: #{mscp_forward.7} parent=0 // pred_fallthru
    _

// kernel: mscp_forward.8
$region0: #{mscp_forward.8}
  #allocation0 [shape = 'u32[]', space=smem, size = 0x4, offset = 0x4, fixed_abs, tag = 'smem constant byte address 0x4 - core index']
  #allocation1 [shape = 'u32[144,128]{1,0:T(1,128)}', space=vmem, size = 0x12000, scoped, tag = 'internal scratch']
  %s0 = inlined_call_operand.vmem [shape: f32[8,88], index: 0, kind: input, shape index: {}]
  %s1 = inlined_call_operand.vmem [shape: f32[8,1], index: 1, kind: input, shape index: {}]
  %s2 = inlined_call_operand.vmem [shape: f32[88,384], index: 2, kind: input, shape index: {}]
  %s3 = inlined_call_operand.vmem [shape: f32[8,384], index: 3, kind: output, shape index: {}]
  %s4 = sld [smem:[#allocation0]]
  $region22: #{mscp_forward.8} parent=0
    _
  %s6 = ssub.s32 1, %s4
  %s7 = scalar_select 0, %s6, %s4
  // Predicated region
  $region2: #{mscp_forward.8} parent=0 // pred_check
    _
  $region3: #{mscp_forward.8} parent=0 // pred_check_branch
    %9 = sbr.rel (0) target = $region5
  $region4: #{mscp_forward.8} parent=0 // pred_region
    _
  $region5: #{mscp_forward.8} parent=0 // pred_fallthru
    _
  // Predicated region
  $region6: #{mscp_forward.8} parent=0 // pred_check
    _
  $region7: #{mscp_forward.8} parent=0 // pred_check_branch
    %11 = sbr.rel (0) target = $region9
  $region8: #{mscp_forward.8} parent=0 // pred_region
    _
  $region9: #{mscp_forward.8} parent=0 // pred_fallthru
    _
  // Predicated region
  $region10: #{mscp_forward.8} parent=0 // pred_check
    _
  $region11: #{mscp_forward.8} parent=0 // pred_check_branch
    %13 = sbr.rel (0) target = $region13
  $region12: #{mscp_forward.8} parent=0 // pred_region
    _
  $region13: #{mscp_forward.8} parent=0 // pred_fallthru
    _
  %v14 = vld [vmem:[%s0] sm:$0xff]
  %v15 = vld [vmem:[%s2] sm:$0xff]
  %v16 = vld [vmem:[%s2 + $0x8] sm:$0xff]
  %v17 = vld [vmem:[%s2 + $0x10] sm:$0xff]
  %v18 = vld [vmem:[%s2 + $0x18] sm:$0xff]
  %v19 = vld [vmem:[%s2 + $0x20] sm:$0xff]
  %v20 = vld [vmem:[%s2 + $0x28] sm:$0xff]
  %v21 = vld [vmem:[%s2 + $0x30] sm:$0xff]
  %v22 = vld [vmem:[%s2 + $0x38] sm:$0xff]
  %v23 = vld [vmem:[%s2 + $0x40] sm:$0xff]
  %v24 = vld [vmem:[%s2 + $0x48] sm:$0xff]
  %v25 = vld [vmem:[%s2 + $0x50] sm:$0xff]
  %v26 = vld [vmem:[%s2 + $0x58] sm:$0xff]
  %v27 = vld [vmem:[%s2 + $0x60] sm:$0xff]
  %v28 = vld [vmem:[%s2 + $0x68] sm:$0xff]
  %v29 = vld [vmem:[%s2 + $0x70] sm:$0xff]
  %v30 = vld [vmem:[%s2 + $0x78] sm:$0xff]
  %v31 = vld [vmem:[%s2 + $0x80] sm:$0xff]
  %v32 = vld [vmem:[%s2 + $0x88] sm:$0xff]
  %v33 = vld [vmem:[%s2 + $0x90] sm:$0xff]
  %v34 = vld [vmem:[%s2 + $0x98] sm:$0xff]
  %v35 = vld [vmem:[%s2 + $0xa0] sm:$0xff]
  %v36 = vld [vmem:[%s2 + $0xa8] sm:$0xff]
  %v37 = vld [vmem:[%s2 + $0xb0] sm:$0xff]
  %v38 = vld [vmem:[%s2 + $0xb8] sm:$0xff]
  %v39 = vld [vmem:[%s2 + $0xc0] sm:$0xff]
  %v40 = vld [vmem:[%s2 + $0xc8] sm:$0xff]
  %v41 = vld [vmem:[%s2 + $0xd0] sm:$0xff]
  %v42 = vld [vmem:[%s2 + $0xd8] sm:$0xff]
  %v43 = vld [vmem:[%s2 + $0xe0] sm:$0xff]
  %v44 = vld [vmem:[%s2 + $0xe8] sm:$0xff]
  %v45 = vld [vmem:[%s2 + $0xf0] sm:$0xff]
  %v46 = vld [vmem:[%s2 + $0xf8] sm:$0xff]
  %v47 = vld [vmem:[%s2 + $0x100] sm:$0xff]
  %v48 = vld [vmem:[%s1] sm:$0xff]
  %50 = vset.pattern.permute.xlu0 0
  %51 = vperm.xlu0 %50, %v48
  %v52 = vpop.permute.xlu0 %51
  %vm54 = vcmask 719872
  %v56 = vsel %vm54, %v14, 0
  %58 = vmatprep.subr.mxu0 0.0
  %59 = vmatpush1.msra.mxu0 0.0
  %60 = vmatprep.subr.mxu0 0.0
  %61 = vmatpush1.msra.mxu0 0.0
  %62 = vmatprep.subr.mxu0 0.0
  %63 = vmatpush1.msra.mxu0 0.0
  %64 = vmatprep.subr.mxu0 0.0
  %65 = vmatpush1.msra.mxu0 0.0
  %66 = vmatprep.subr.mxu0 0.0
  %67 = vmatpush1.msra.mxu0 0.0
  %68 = vmatprep.subr.mxu0 %v46
  %69 = vmatpush1.msra.mxu0 %v45
  %70 = vmatprep.subr.mxu0 %v43
  %71 = vmatpush1.msra.mxu0 %v42
  %72 = vmatprep.subr.mxu0 %v40
  %73 = vmatpush1.msra.mxu0 %v39
  %74 = vmatprep.subr.mxu0 %v37
  %75 = vmatpush1.msra.mxu0 %v36
  %76 = vmatprep.subr.mxu0 %v34
  %77 = vmatpush1.msra.mxu0 %v33
  %78 = vmatprep.subr.mxu0 %v31
  %79 = vmatpush1.msra.mxu0 %v30
  %80 = vmatprep.subr.mxu0 %v28
  %81 = vmatpush1.msra.mxu0 %v27
  %82 = vmatprep.subr.mxu0 %v25
  %83 = vmatpush1.msra.mxu0 %v24
  %84 = vmatprep.subr.mxu0 %v22
  %85 = vmatpush1.msra.mxu0 %v21
  %86 = vmatprep.subr.mxu0 %v19
  %87 = vmatpush1.msra.mxu0 %v18
  %88 = vmatprep.subr.mxu0 %v16
  %89 = vmatpush1.msra.mxu0 %v15
  %90 = vmatprep.subr.mxu0 0.0
  %91 = vmatpush2.msra.mxu0 0.0
  %92 = vmatprep.subr.mxu0 0.0
  %93 = vmatpush2.msra.mxu0 0.0
  %94 = vmatprep.subr.mxu0 0.0
  %95 = vmatpush2.msra.mxu0 0.0
  %96 = vmatprep.subr.mxu0 0.0
  %97 = vmatpush2.msra.mxu0 0.0
  %98 = vmatprep.subr.mxu0 0.0
  %99 = vmatpush2.msra.mxu0 0.0
  %100 = vmatprep.subr.mxu0 0.0
  %101 = vmatpush2.msra.mxu0 0.0
  %102 = vmatprep.subr.mxu0 0.0
  %103 = vmatpush2.msra.mxu0 0.0
  %104 = vmatprep.subr.mxu0 0.0
  %105 = vmatpush2.msra.mxu0 0.0
  %106 = vmatprep.subr.mxu0 0.0
  %107 = vmatpush2.msra.mxu0 0.0
  %108 = vmatprep.subr.mxu0 0.0
  %109 = vmatpush2.msra.mxu0 0.0
  %110 = vmatprep.subr.mxu0 0.0
  %111 = vmatpush2.msra.mxu0 0.0
  %112 = vmatprep.subr.mxu0 0.0
  %113 = vmatpush2.msra.mxu0 0.0
  %114 = vmatprep.subr.mxu0 0.0
  %115 = vmatpush2.msra.mxu0 0.0
  %116 = vmatprep.subr.mxu0 0.0
  %117 = vmatpush2.msra.mxu0 0.0
  %118 = vmatprep.subr.mxu0 0.0
  %119 = vmatpush2.msra.mxu0 0.0
  %120 = vmatprep.subr.mxu0 0.0
  %121 = vmatpush2.msra.mxu0 0.0
  %122 = vmatprep.mubr.f32.mxu0 0.0
  %123 = vmatmul.mubr.f32.gmra.mxu0 %v56
  %v124 = vpop.f32.mrf.mxu0
  %v125 = vadd.f32 %v52, %v124
  %v126 = vpop.f32.mrf.mxu0
  %v127 = vadd.f32 %v52, %v126
  %128 = vdwg.mxu0
  %129 = vmatprep.subr.mxu0 0.0
  %130 = vmatpush1.msra.mxu0 0.0
  %131 = vmatprep.subr.mxu0 0.0
  %132 = vmatpush1.msra.mxu0 0.0
  %133 = vmatprep.subr.mxu0 0.0
  %134 = vmatpush1.msra.mxu0 0.0
  %135 = vmatprep.subr.mxu0 0.0
  %136 = vmatpush1.msra.mxu0 0.0
  %137 = vmatprep.subr.mxu0 0.0
  %138 = vmatpush1.msra.mxu0 0.0
  %139 = vmatprep.subr.mxu0 0.0
  %140 = vmatpush1.msra.mxu0 %v47
  %141 = vmatprep.subr.mxu0 0.0
  %142 = vmatpush1.msra.mxu0 %v44
  %143 = vmatprep.subr.mxu0 0.0
  %144 = vmatpush1.msra.mxu0 %v41
  %145 = vmatprep.subr.mxu0 0.0
  %146 = vmatpush1.msra.mxu0 %v38
  %147 = vmatprep.subr.mxu0 0.0
  %148 = vmatpush1.msra.mxu0 %v35
  %149 = vmatprep.subr.mxu0 0.0
  %150 = vmatpush1.msra.mxu0 %v32
  %151 = vmatprep.subr.mxu0 0.0
  %152 = vmatpush1.msra.mxu0 %v29
  %153 = vmatprep.subr.mxu0 0.0
  %154 = vmatpush1.msra.mxu0 %v26
  %155 = vmatprep.subr.mxu0 0.0
  %156 = vmatpush1.msra.mxu0 %v23
  %157 = vmatprep.subr.mxu0 0.0
  %158 = vmatpush1.msra.mxu0 %v20
  %159 = vmatprep.subr.mxu0 0.0
  %160 = vmatpush1.msra.mxu0 %v17
  %161 = vmatprep.subr.mxu0 0.0
  %162 = vmatpush2.msra.mxu0 0.0
  %163 = vmatprep.subr.mxu0 0.0
  %164 = vmatpush2.msra.mxu0 0.0
  %165 = vmatprep.subr.mxu0 0.0
  %166 = vmatpush2.msra.mxu0 0.0
  %167 = vmatprep.subr.mxu0 0.0
  %168 = vmatpush2.msra.mxu0 0.0
  %169 = vmatprep.subr.mxu0 0.0
  %170 = vmatpush2.msra.mxu0 0.0
  %171 = vmatprep.subr.mxu0 0.0
  %172 = vmatpush2.msra.mxu0 0.0
  %173 = vmatprep.subr.mxu0 0.0
  %174 = vmatpush2.msra.mxu0 0.0
  %175 = vmatprep.subr.mxu0 0.0
  %176 = vmatpush2.msra.mxu0 0.0
  %177 = vmatprep.subr.mxu0 0.0
  %178 = vmatpush2.msra.mxu0 0.0
  %179 = vmatprep.subr.mxu0 0.0
  %180 = vmatpush2.msra.mxu0 0.0
  %181 = vmatprep.subr.mxu0 0.0
  %182 = vmatpush2.msra.mxu0 0.0
  %183 = vmatprep.subr.mxu0 0.0
  %184 = vmatpush2.msra.mxu0 0.0
  %185 = vmatprep.subr.mxu0 0.0
  %186 = vmatpush2.msra.mxu0 0.0
  %187 = vmatprep.subr.mxu0 0.0
  %188 = vmatpush2.msra.mxu0 0.0
  %189 = vmatprep.subr.mxu0 0.0
  %190 = vmatpush2.msra.mxu0 0.0
  %191 = vmatprep.subr.mxu0 0.0
  %192 = vmatpush2.msra.mxu0 0.0
  %193 = vmatprep.mubr.f32.mxu0 0.0
  %194 = vmatmul.mubr.f32.gmra.mxu0 %v56
  %v195 = vpop.f32.mrf.mxu0
  %v196 = vadd.f32 %v52, %v195
  %v197 = vpop.f32.mrf.mxu0
  %198 = vdwg.mxu0
  %v199 = vmax.f32 %v125, 0.0
  %v200 = vmax.f32 %v127, 0.0
  %v201 = vmax.f32 %v196, 0.0
  %202 = vst [vmem:[%s3] sm:$0xff] %v199
  %203 = vst [vmem:[%s3 + $0x8] sm:$0xff] %v200
  %204 = vst [vmem:[%s3 + $0x10] sm:$0xff] %v201
  // Predicated region
  $region14: #{mscp_forward.8} parent=0 // pred_check
    _
  $region15: #{mscp_forward.8} parent=0 // pred_check_branch
    %206 = sbr.rel (0) target = $region17
  $region16: #{mscp_forward.8} parent=0 // pred_region
    _
  $region17: #{mscp_forward.8} parent=0 // pred_fallthru
    _
  // Predicated region
  $region18: #{mscp_forward.8} parent=0 // pred_check
    _
  $region19: #{mscp_forward.8} parent=0 // pred_check_branch
    %208 = sbr.rel (0) target = $region21
  $region20: #{mscp_forward.8} parent=0 // pred_region
    _
  $region21: #{mscp_forward.8} parent=0 // pred_fallthru
    _

// kernel: mscp_forward.9
$region0: #{mscp_forward.9}
  #allocation0 [shape = 'u32[]', space=smem, size = 0x4, offset = 0x4, fixed_abs, tag = 'smem constant byte address 0x4 - core index']
  #allocation1 [shape = 'u32[144,128]{1,0:T(1,128)}', space=vmem, size = 0x12000, scoped, tag = 'internal scratch']
  %s0 = inlined_call_operand.vmem [shape: f32[8,88], index: 0, kind: input, shape index: {}]
  %s1 = inlined_call_operand.vmem [shape: f32[8,1], index: 1, kind: input, shape index: {}]
  %s2 = inlined_call_operand.vmem [shape: f32[8,1], index: 2, kind: input, shape index: {}]
  %s3 = inlined_call_operand.vmem [shape: f32[8,1], index: 3, kind: input, shape index: {}]
  %s4 = inlined_call_operand.vmem [shape: f32[8,8], index: 4, kind: input, shape index: {}]
  %s5 = inlined_call_operand.vmem [shape: f32[8,1], index: 5, kind: input, shape index: {}]
  %s6 = inlined_call_operand.vmem [shape: f32[88,384], index: 6, kind: input, shape index: {}]
  %s7 = inlined_call_operand.vmem [shape: f32[8,384], index: 7, kind: output, shape index: {}]
  %s8 = sld [smem:[#allocation0]]
  $region38: #{mscp_forward.9} parent=0
    _
  %s10 = ssub.s32 1, %s8
  %s11 = scalar_select 0, %s10, %s8
  // Predicated region
  $region2: #{mscp_forward.9} parent=0 // pred_check
    _
  $region3: #{mscp_forward.9} parent=0 // pred_check_branch
    %13 = sbr.rel (0) target = $region5
  $region4: #{mscp_forward.9} parent=0 // pred_region
    _
  $region5: #{mscp_forward.9} parent=0 // pred_fallthru
    _
  // Predicated region
  $region6: #{mscp_forward.9} parent=0 // pred_check
    _
  $region7: #{mscp_forward.9} parent=0 // pred_check_branch
    %15 = sbr.rel (0) target = $region9
  $region8: #{mscp_forward.9} parent=0 // pred_region
    _
  $region9: #{mscp_forward.9} parent=0 // pred_fallthru
    _
  // Predicated region
  $region10: #{mscp_forward.9} parent=0 // pred_check
    _
  $region11: #{mscp_forward.9} parent=0 // pred_check_branch
    %17 = sbr.rel (0) target = $region13
  $region12: #{mscp_forward.9} parent=0 // pred_region
    _
  $region13: #{mscp_forward.9} parent=0 // pred_fallthru
    _
  // Predicated region
  $region14: #{mscp_forward.9} parent=0 // pred_check
    _
  $region15: #{mscp_forward.9} parent=0 // pred_check_branch
    %19 = sbr.rel (0) target = $region17
  $region16: #{mscp_forward.9} parent=0 // pred_region
    _
  $region17: #{mscp_forward.9} parent=0 // pred_fallthru
    _
  // Predicated region
  $region18: #{mscp_forward.9} parent=0 // pred_check
    _
  $region19: #{mscp_forward.9} parent=0 // pred_check_branch
    %21 = sbr.rel (0) target = $region21
  $region20: #{mscp_forward.9} parent=0 // pred_region
    _
  $region21: #{mscp_forward.9} parent=0 // pred_fallthru
    _
  // Predicated region
  $region22: #{mscp_forward.9} parent=0 // pred_check
    _
  $region23: #{mscp_forward.9} parent=0 // pred_check_branch
    %23 = sbr.rel (0) target = $region25
  $region24: #{mscp_forward.9} parent=0 // pred_region
    _
  $region25: #{mscp_forward.9} parent=0 // pred_fallthru
    _
  // Predicated region
  $region26: #{mscp_forward.9} parent=0 // pred_check
    _
  $region27: #{mscp_forward.9} parent=0 // pred_check_branch
    %25 = sbr.rel (0) target = $region29
  $region28: #{mscp_forward.9} parent=0 // pred_region
    _
  $region29: #{mscp_forward.9} parent=0 // pred_fallthru
    _
  %v26 = vld [vmem:[%s0] sm:$0xff]
  %v27 = vld [vmem:[%s6] sm:$0xff]
  %v28 = vld [vmem:[%s6 + $0x8] sm:$0xff]
  %v29 = vld [vmem:[%s6 + $0x10] sm:$0xff]
  %v30 = vld [vmem:[%s6 + $0x18] sm:$0xff]
  %v31 = vld [vmem:[%s6 + $0x20] sm:$0xff]
  %v32 = vld [vmem:[%s6 + $0x28] sm:$0xff]
  %v33 = vld [vmem:[%s6 + $0x30] sm:$0xff]
  %v34 = vld [vmem:[%s6 + $0x38] sm:$0xff]
  %v35 = vld [vmem:[%s6 + $0x40] sm:$0xff]
  %v36 = vld [vmem:[%s6 + $0x48] sm:$0xff]
  %v37 = vld [vmem:[%s6 + $0x50] sm:$0xff]
  %v38 = vld [vmem:[%s6 + $0x58] sm:$0xff]
  %v39 = vld [vmem:[%s6 + $0x60] sm:$0xff]
  %v40 = vld [vmem:[%s6 + $0x68] sm:$0xff]
  %v41 = vld [vmem:[%s6 + $0x70] sm:$0xff]
  %v42 = vld [vmem:[%s6 + $0x78] sm:$0xff]
  %v43 = vld [vmem:[%s6 + $0x80] sm:$0xff]
  %v44 = vld [vmem:[%s6 + $0x88] sm:$0xff]
  %v45 = vld [vmem:[%s6 + $0x90] sm:$0xff]
  %v46 = vld [vmem:[%s6 + $0x98] sm:$0xff]
  %v47 = vld [vmem:[%s6 + $0xa0] sm:$0xff]
  %v48 = vld [vmem:[%s6 + $0xa8] sm:$0xff]
  %v49 = vld [vmem:[%s6 + $0xb0] sm:$0xff]
  %v50 = vld [vmem:[%s6 + $0xb8] sm:$0xff]
  %v51 = vld [vmem:[%s6 + $0xc0] sm:$0xff]
  %v52 = vld [vmem:[%s6 + $0xc8] sm:$0xff]
  %v53 = vld [vmem:[%s6 + $0xd0] sm:$0xff]
  %v54 = vld [vmem:[%s6 + $0xd8] sm:$0xff]
  %v55 = vld [vmem:[%s6 + $0xe0] sm:$0xff]
  %v56 = vld [vmem:[%s6 + $0xe8] sm:$0xff]
  %v57 = vld [vmem:[%s6 + $0xf0] sm:$0xff]
  %v58 = vld [vmem:[%s6 + $0xf8] sm:$0xff]
  %v59 = vld [vmem:[%s6 + $0x100] sm:$0xff]
  %v60 = vld [vmem:[%s1] sm:$0xff]
  %62 = vset.pattern.permute.xlu0 0
  %63 = vperm.xlu0 %62, %v60
  %v64 = vpop.permute.xlu0 %63
  %vm66 = vcmask 719872
  %v68 = vsel %vm66, %v26, 0
  %70 = vmatprep.subr.mxu0 0.0
  %71 = vmatpush1.msra.mxu0 0.0
  %72 = vmatprep.subr.mxu0 0.0
  %73 = vmatpush1.msra.mxu0 0.0
  %74 = vmatprep.subr.mxu0 0.0
  %75 = vmatpush1.msra.mxu0 0.0
  %76 = vmatprep.subr.mxu0 0.0
  %77 = vmatpush1.msra.mxu0 0.0
  %78 = vmatprep.subr.mxu0 0.0
  %79 = vmatpush1.msra.mxu0 0.0
  %80 = vmatprep.subr.mxu0 %v58
  %81 = vmatpush1.msra.mxu0 %v57
  %82 = vmatprep.subr.mxu0 %v55
  %83 = vmatpush1.msra.mxu0 %v54
  %84 = vmatprep.subr.mxu0 %v52
  %85 = vmatpush1.msra.mxu0 %v51
  %86 = vmatprep.subr.mxu0 %v49
  %87 = vmatpush1.msra.mxu0 %v48
  %88 = vmatprep.subr.mxu0 %v46
  %89 = vmatpush1.msra.mxu0 %v45
  %90 = vmatprep.subr.mxu0 %v43
  %91 = vmatpush1.msra.mxu0 %v42
  %92 = vmatprep.subr.mxu0 %v40
  %93 = vmatpush1.msra.mxu0 %v39
  %94 = vmatprep.subr.mxu0 %v37
  %95 = vmatpush1.msra.mxu0 %v36
  %96 = vmatprep.subr.mxu0 %v34
  %97 = vmatpush1.msra.mxu0 %v33
  %98 = vmatprep.subr.mxu0 %v31
  %99 = vmatpush1.msra.mxu0 %v30
  %100 = vmatprep.subr.mxu0 %v28
  %101 = vmatpush1.msra.mxu0 %v27
  %102 = vmatprep.subr.mxu0 0.0
  %103 = vmatpush2.msra.mxu0 0.0
  %104 = vmatprep.subr.mxu0 0.0
  %105 = vmatpush2.msra.mxu0 0.0
  %106 = vmatprep.subr.mxu0 0.0
  %107 = vmatpush2.msra.mxu0 0.0
  %108 = vmatprep.subr.mxu0 0.0
  %109 = vmatpush2.msra.mxu0 0.0
  %110 = vmatprep.subr.mxu0 0.0
  %111 = vmatpush2.msra.mxu0 0.0
  %112 = vmatprep.subr.mxu0 0.0
  %113 = vmatpush2.msra.mxu0 0.0
  %114 = vmatprep.subr.mxu0 0.0
  %115 = vmatpush2.msra.mxu0 0.0
  %116 = vmatprep.subr.mxu0 0.0
  %117 = vmatpush2.msra.mxu0 0.0
  %118 = vmatprep.subr.mxu0 0.0
  %119 = vmatpush2.msra.mxu0 0.0
  %120 = vmatprep.subr.mxu0 0.0
  %121 = vmatpush2.msra.mxu0 0.0
  %122 = vmatprep.subr.mxu0 0.0
  %123 = vmatpush2.msra.mxu0 0.0
  %124 = vmatprep.subr.mxu0 0.0
  %125 = vmatpush2.msra.mxu0 0.0
  %126 = vmatprep.subr.mxu0 0.0
  %127 = vmatpush2.msra.mxu0 0.0
  %128 = vmatprep.subr.mxu0 0.0
  %129 = vmatpush2.msra.mxu0 0.0
  %130 = vmatprep.subr.mxu0 0.0
  %131 = vmatpush2.msra.mxu0 0.0
  %132 = vmatprep.subr.mxu0 0.0
  %133 = vmatpush2.msra.mxu0 0.0
  %134 = vmatprep.mubr.f32.mxu0 0.0
  %135 = vmatmul.mubr.f32.gmra.mxu0 %v68
  %v136 = vpop.f32.mrf.mxu0
  %v137 = vadd.f32 %v64, %v136
  %v138 = vpop.f32.mrf.mxu0
  %v139 = vadd.f32 %v64, %v138
  %140 = vdwg.mxu0
  %141 = vmatprep.subr.mxu0 0.0
  %142 = vmatpush1.msra.mxu0 0.0
  %143 = vmatprep.subr.mxu0 0.0
  %144 = vmatpush1.msra.mxu0 0.0
  %145 = vmatprep.subr.mxu0 0.0
  %146 = vmatpush1.msra.mxu0 0.0
  %147 = vmatprep.subr.mxu0 0.0
  %148 = vmatpush1.msra.mxu0 0.0
  %149 = vmatprep.subr.mxu0 0.0
  %150 = vmatpush1.msra.mxu0 0.0
  %151 = vmatprep.subr.mxu0 0.0
  %152 = vmatpush1.msra.mxu0 %v59
  %153 = vmatprep.subr.mxu0 0.0
  %154 = vmatpush1.msra.mxu0 %v56
  %155 = vmatprep.subr.mxu0 0.0
  %156 = vmatpush1.msra.mxu0 %v53
  %157 = vmatprep.subr.mxu0 0.0
  %158 = vmatpush1.msra.mxu0 %v50
  %159 = vmatprep.subr.mxu0 0.0
  %160 = vmatpush1.msra.mxu0 %v47
  %161 = vmatprep.subr.mxu0 0.0
  %162 = vmatpush1.msra.mxu0 %v44
  %163 = vmatprep.subr.mxu0 0.0
  %164 = vmatpush1.msra.mxu0 %v41
  %165 = vmatprep.subr.mxu0 0.0
  %166 = vmatpush1.msra.mxu0 %v38
  %167 = vmatprep.subr.mxu0 0.0
  %168 = vmatpush1.msra.mxu0 %v35
  %169 = vmatprep.subr.mxu0 0.0
  %170 = vmatpush1.msra.mxu0 %v32
  %171 = vmatprep.subr.mxu0 0.0
  %172 = vmatpush1.msra.mxu0 %v29
  %173 = vmatprep.subr.mxu0 0.0
  %174 = vmatpush2.msra.mxu0 0.0
  %175 = vmatprep.subr.mxu0 0.0
  %176 = vmatpush2.msra.mxu0 0.0
  %177 = vmatprep.subr.mxu0 0.0
  %178 = vmatpush2.msra.mxu0 0.0
  %179 = vmatprep.subr.mxu0 0.0
  %180 = vmatpush2.msra.mxu0 0.0
  %181 = vmatprep.subr.mxu0 0.0
  %182 = vmatpush2.msra.mxu0 0.0
  %183 = vmatprep.subr.mxu0 0.0
  %184 = vmatpush2.msra.mxu0 0.0
  %185 = vmatprep.subr.mxu0 0.0
  %186 = vmatpush2.msra.mxu0 0.0
  %187 = vmatprep.subr.mxu0 0.0
  %188 = vmatpush2.msra.mxu0 0.0
  %189 = vmatprep.subr.mxu0 0.0
  %190 = vmatpush2.msra.mxu0 0.0
  %191 = vmatprep.subr.mxu0 0.0
  %192 = vmatpush2.msra.mxu0 0.0
  %193 = vmatprep.subr.mxu0 0.0
  %194 = vmatpush2.msra.mxu0 0.0
  %195 = vmatprep.subr.mxu0 0.0
  %196 = vmatpush2.msra.mxu0 0.0
  %197 = vmatprep.subr.mxu0 0.0
  %198 = vmatpush2.msra.mxu0 0.0
  %199 = vmatprep.subr.mxu0 0.0
  %200 = vmatpush2.msra.mxu0 0.0
  %201 = vmatprep.subr.mxu0 0.0
  %202 = vmatpush2.msra.mxu0 0.0
  %203 = vmatprep.subr.mxu0 0.0
  %204 = vmatpush2.msra.mxu0 0.0
  %205 = vmatprep.mubr.f32.mxu0 0.0
  %206 = vmatmul.mubr.f32.gmra.mxu0 %v68
  %v207 = vpop.f32.mrf.mxu0
  %v208 = vadd.f32 %v64, %v207
  %v209 = vpop.f32.mrf.mxu0
  %210 = vdwg.mxu0
  %v211 = vadd.f32 %v137, %v139
  %v212 = vadd.f32 %v211, %v208
  %213 = vadd.xlane.f32.xlu0 %v212
  %v214 = vpop.xlane.xlu0 %213
  %v215 = vmul.f32 %v214, 0.0026041667
  %v216 = vmul.f32 %v137, %v137
  %v217 = vmul.f32 %v139, %v139
  %v218 = vmul.f32 %v208, %v208
  %v219 = vadd.f32 %v216, %v217
  %v220 = vadd.f32 %v219, %v218
  %221 = vadd.xlane.f32.xlu0 %v220
  %v222 = vpop.xlane.xlu0 %221
  %v223 = vmul.f32 %v222, 0.0026041667
  %v224 = vmul.f32 %v215, %v215
  %v225 = vsub.f32 %v223, %v224
  %v226 = vadd.f32 %v225, 1e-05
  %v227 = vrsqrt.pop %v226
  %v228 = vld [vmem:[%s2] sm:$0xff]
  %v229 = vmul.f32 %v227, %v228
  %v230 = vsub.f32 %v137, %v215
  %v231 = vsub.f32 %v139, %v215
  %v232 = vsub.f32 %v208, %v215
  %234 = vset.pattern.permute.xlu0 0
  %235 = vperm.xlu0 %234, %v229
  %v236 = vpop.permute.xlu0 %235
  %v238 = vmul.f32 %v230, %v236
  %v239 = vmul.f32 %v231, %v236
  %v240 = vmul.f32 %v232, %v236
  %v241 = vld [vmem:[%s3] sm:$0xff]
  %243 = vset.pattern.permute.xlu0 0
  %244 = vperm.xlu0 %243, %v241
  %v245 = vpop.permute.xlu0 %244
  %v247 = vadd.f32 %v238, %v245
  %v248 = vadd.f32 %v239, %v245
  %v249 = vadd.f32 %v240, %v245
  %v250 = vmax.f32 %v247, 0.0
  %v251 = vmax.f32 %v248, 0.0
  %v252 = vmax.f32 %v249, 0.0
  %v253 = vld [vmem:[%s4] sm:$0xff]
  %v254 = vld [vmem:[%s5] sm:$0xff]
  %256 = vset.pattern.permute.xlu0 0
  %257 = vperm.xlu0 %256, %v254
  %v258 = vpop.permute.xlu0 %257
  %vm260 = vcmask 64512
  %v262 = vsel %vm260, %v253, 0
  %264 = vmatprep.subr.mxu0 0.0
  %265 = vmatpush1.msra.mxu0 0.0
  %266 = vmatprep.subr.mxu0 0.0
  %267 = vmatpush1.msra.mxu0 0.0
  %268 = vmatprep.subr.mxu0 0.0
  %269 = vmatpush1.msra.mxu0 0.0
  %270 = vmatprep.subr.mxu0 0.0
  %271 = vmatpush1.msra.mxu0 0.0
  %272 = vmatprep.subr.mxu0 0.0
  %273 = vmatpush1.msra.mxu0 0.0
  %274 = vmatprep.subr.mxu0 0.0
  %275 = vmatpush1.msra.mxu0 0.0
  %276 = vmatprep.subr.mxu0 0.0
  %277 = vmatpush1.msra.mxu0 0.0
  %278 = vmatprep.subr.mxu0 0.0
  %279 = vmatpush1.msra.mxu0 0.0
  %280 = vmatprep.subr.mxu0 0.0
  %281 = vmatpush1.msra.mxu0 0.0
  %282 = vmatprep.subr.mxu0 0.0
  %283 = vmatpush1.msra.mxu0 0.0
  %284 = vmatprep.subr.mxu0 0.0
  %285 = vmatpush1.msra.mxu0 0.0
  %286 = vmatprep.subr.mxu0 0.0
  %287 = vmatpush1.msra.mxu0 0.0
  %288 = vmatprep.subr.mxu0 0.0
  %289 = vmatpush1.msra.mxu0 0.0
  %290 = vmatprep.subr.mxu0 0.0
  %291 = vmatpush1.msra.mxu0 0.0
  %292 = vmatprep.subr.mxu0 0.0
  %293 = vmatpush1.msra.mxu0 0.0
  %294 = vmatprep.subr.mxu0 %v251
  %295 = vmatpush1.msra.mxu0 %v250
  %296 = vmatprep.subr.mxu0 0.0
  %297 = vmatpush2.msra.mxu0 0.0
  %298 = vmatprep.subr.mxu0 0.0
  %299 = vmatpush2.msra.mxu0 0.0
  %300 = vmatprep.subr.mxu0 0.0
  %301 = vmatpush2.msra.mxu0 0.0
  %302 = vmatprep.subr.mxu0 0.0
  %303 = vmatpush2.msra.mxu0 0.0
  %304 = vmatprep.subr.mxu0 0.0
  %305 = vmatpush2.msra.mxu0 0.0
  %306 = vmatprep.subr.mxu0 0.0
  %307 = vmatpush2.msra.mxu0 0.0
  %308 = vmatprep.subr.mxu0 0.0
  %309 = vmatpush2.msra.mxu0 0.0
  %310 = vmatprep.subr.mxu0 0.0
  %311 = vmatpush2.msra.mxu0 0.0
  %312 = vmatprep.subr.mxu0 0.0
  %313 = vmatpush2.msra.mxu0 0.0
  %314 = vmatprep.subr.mxu0 0.0
  %315 = vmatpush2.msra.mxu0 0.0
  %316 = vmatprep.subr.mxu0 0.0
  %317 = vmatpush2.msra.mxu0 0.0
  %318 = vmatprep.subr.mxu0 0.0
  %319 = vmatpush2.msra.mxu0 0.0
  %320 = vmatprep.subr.mxu0 0.0
  %321 = vmatpush2.msra.mxu0 0.0
  %322 = vmatprep.subr.mxu0 0.0
  %323 = vmatpush2.msra.mxu0 0.0
  %324 = vmatprep.subr.mxu0 0.0
  %325 = vmatpush2.msra.mxu0 0.0
  %326 = vmatprep.subr.mxu0 0.0
  %327 = vmatpush2.msra.mxu0 0.0
  %328 = vmatprep.mubr.f32.mxu0 0.0
  %329 = vmatmul.mubr.f32.gmra.mxu0 %v262
  %v330 = vpop.f32.mrf.mxu0
  %v331 = vadd.f32 %v258, %v330
  %v332 = vpop.f32.mrf.mxu0
  %v333 = vadd.f32 %v258, %v332
  %334 = vdwg.mxu0
  %335 = vmatprep.subr.mxu0 0.0
  %336 = vmatpush1.msra.mxu0 0.0
  %337 = vmatprep.subr.mxu0 0.0
  %338 = vmatpush1.msra.mxu0 0.0
  %339 = vmatprep.subr.mxu0 0.0
  %340 = vmatpush1.msra.mxu0 0.0
  %341 = vmatprep.subr.mxu0 0.0
  %342 = vmatpush1.msra.mxu0 0.0
  %343 = vmatprep.subr.mxu0 0.0
  %344 = vmatpush1.msra.mxu0 0.0
  %345 = vmatprep.subr.mxu0 0.0
  %346 = vmatpush1.msra.mxu0 0.0
  %347 = vmatprep.subr.mxu0 0.0
  %348 = vmatpush1.msra.mxu0 0.0
  %349 = vmatprep.subr.mxu0 0.0
  %350 = vmatpush1.msra.mxu0 0.0
  %351 = vmatprep.subr.mxu0 0.0
  %352 = vmatpush1.msra.mxu0 0.0
  %353 = vmatprep.subr.mxu0 0.0
  %354 = vmatpush1.msra.mxu0 0.0
  %355 = vmatprep.subr.mxu0 0.0
  %356 = vmatpush1.msra.mxu0 0.0
  %357 = vmatprep.subr.mxu0 0.0
  %358 = vmatpush1.msra.mxu0 0.0
  %359 = vmatprep.subr.mxu0 0.0
  %360 = vmatpush1.msra.mxu0 0.0
  %361 = vmatprep.subr.mxu0 0.0
  %362 = vmatpush1.msra.mxu0 0.0
  %363 = vmatprep.subr.mxu0 0.0
  %364 = vmatpush1.msra.mxu0 0.0
  %365 = vmatprep.subr.mxu0 0.0
  %366 = vmatpush1.msra.mxu0 %v252
  %367 = vmatprep.subr.mxu0 0.0
  %368 = vmatpush2.msra.mxu0 0.0
  %369 = vmatprep.subr.mxu0 0.0
  %370 = vmatpush2.msra.mxu0 0.0
  %371 = vmatprep.subr.mxu0 0.0
  %372 = vmatpush2.msra.mxu0 0.0
  %373 = vmatprep.subr.mxu0 0.0
  %374 = vmatpush2.msra.mxu0 0.0
  %375 = vmatprep.subr.mxu0 0.0
  %376 = vmatpush2.msra.mxu0 0.0
  %377 = vmatprep.subr.mxu0 0.0
  %378 = vmatpush2.msra.mxu0 0.0
  %379 = vmatprep.subr.mxu0 0.0
  %380 = vmatpush2.msra.mxu0 0.0
  %381 = vmatprep.subr.mxu0 0.0
  %382 = vmatpush2.msra.mxu0 0.0
  %383 = vmatprep.subr.mxu0 0.0
  %384 = vmatpush2.msra.mxu0 0.0
  %385 = vmatprep.subr.mxu0 0.0
  %386 = vmatpush2.msra.mxu0 0.0
  %387 = vmatprep.subr.mxu0 0.0
  %388 = vmatpush2.msra.mxu0 0.0
  %389 = vmatprep.subr.mxu0 0.0
  %390 = vmatpush2.msra.mxu0 0.0
  %391 = vmatprep.subr.mxu0 0.0
  %392 = vmatpush2.msra.mxu0 0.0
  %393 = vmatprep.subr.mxu0 0.0
  %394 = vmatpush2.msra.mxu0 0.0
  %395 = vmatprep.subr.mxu0 0.0
  %396 = vmatpush2.msra.mxu0 0.0
  %397 = vmatprep.subr.mxu0 0.0
  %398 = vmatpush2.msra.mxu0 0.0
  %399 = vmatprep.mubr.f32.mxu0 0.0
  %400 = vmatmul.mubr.f32.gmra.mxu0 %v262
  %v401 = vpop.f32.mrf.mxu0
  %v402 = vadd.f32 %v258, %v401
  %v403 = vpop.f32.mrf.mxu0
  %404 = vdwg.mxu0
  %v405 = vmul.f32 %v331, 0.5
  %v406 = vmul.f32 %v333, 0.5
  %v407 = vmul.f32 %v402, 0.5
  %v408 = vmul.f32 %v331, 0.70710677
  %v409 = vmul.f32 %v333, 0.70710677
  %v410 = vmul.f32 %v402, 0.70710677
  %v411 = vand.u32 2147483647, %v408
  %v412 = vand.u32 2147483647, %v409
  %v413 = vand.u32 2147483647, %v410
  %v414 = vmul.f32 %v411, 0.3275911
  %v415 = vmul.f32 %v412, 0.3275911
  %v416 = vmul.f32 %v413, 0.3275911
  %v417 = vadd.f32 %v414, 1.0
  %v418 = vadd.f32 %v415, 1.0
  %v419 = vadd.f32 %v416, 1.0
  %v420 = vrcp.pop %v417
  %v421 = vmul.f32 1.0, %v420
  %v422 = vrcp.pop %v418
  %v423 = vmul.f32 1.0, %v422
  %v424 = vrcp.pop %v419
  %v425 = vmul.f32 1.0, %v424
  %v426 = vmul.f32 %v421, 1.0614054
  %v427 = vmul.f32 %v423, 1.0614054
  %v428 = vmul.f32 %v425, 1.0614054
  %v429 = vadd.f32 %v426, -1.4531521
  %v430 = vadd.f32 %v427, -1.4531521
  %v431 = vadd.f32 %v428, -1.4531521
  %v432 = vmul.f32 %v421, %v429
  %v433 = vmul.f32 %v423, %v430
  %v434 = vmul.f32 %v425, %v431
  %v435 = vadd.f32 %v432, 1.4214138
  %v436 = vadd.f32 %v433, 1.4214138
  %v437 = vadd.f32 %v434, 1.4214138
  %v438 = vmul.f32 %v421, %v435
  %v439 = vmul.f32 %v423, %v436
  %v440 = vmul.f32 %v425, %v437
  %v441 = vadd.f32 %v438, -0.28449672
  %v442 = vadd.f32 %v439, -0.28449672
  %v443 = vadd.f32 %v440, -0.28449672
  %v444 = vmul.f32 %v421, %v441
  %v445 = vmul.f32 %v423, %v442
  %v446 = vmul.f32 %v425, %v443
  %v447 = vadd.f32 %v444, 0.2548296
  %v448 = vadd.f32 %v445, 0.2548296
  %v449 = vadd.f32 %v446, 0.2548296
  %v450 = vmul.f32 %v421, %v447
  %v451 = vmul.f32 %v423, %v448
  %v452 = vmul.f32 %v425, %v449
  %v453 = vsub.f32 0.0, %v411
  %v454 = vsub.f32 0.0, %v412
  %v455 = vsub.f32 0.0, %v413
  %v456 = vmul.f32 %v453, %v411
  %v457 = vmul.f32 %v454, %v412
  %v458 = vmul.f32 %v455, %v413
  %v459 = vmul.f32 %v456, 1.442695
  %v460 = vpow.pop %v459
  %v461 = vmul.f32 %v457, 1.442695
  %v462 = vpow.pop %v461
  %v463 = vmul.f32 %v458, 1.442695
  %v464 = vpow.pop %v463
  %v465 = vmul.f32 %v450, %v460
  %v466 = vmul.f32 %v451, %v462
  %v467 = vmul.f32 %v452, %v464
  %v468 = vsub.f32 1.0, %v465
  %v469 = vsub.f32 1.0, %v466
  %v470 = vsub.f32 1.0, %v467
  %vm471 = vcmp.ge.f32.partialorder %v408, 0.0
  %vm472 = vcmp.ge.f32.partialorder %v409, 0.0
  %vm473 = vcmp.ge.f32.partialorder %v410, 0.0
  %v474 = vsub.f32 0.0, %v468
  %v475 = vsub.f32 0.0, %v469
  %v476 = vsub.f32 0.0, %v470
  %v477 = vsel %vm471, %v468, %v474
  %v478 = vsel %vm472, %v469, %v475
  %v479 = vsel %vm473, %v470, %v476
  %v480 = vadd.f32 %v477, 1.0
  %v481 = vadd.f32 %v478, 1.0
  %v482 = vadd.f32 %v479, 1.0
  %v483 = vmul.f32 %v405, %v480
  %v484 = vmul.f32 %v406, %v481
  %v485 = vmul.f32 %v407, %v482
  %486 = vst [vmem:[%s7] sm:$0xff] %v483
  %487 = vst [vmem:[%s7 + $0x8] sm:$0xff] %v484
  %488 = vst [vmem:[%s7 + $0x10] sm:$0xff] %v485
  // Predicated region
  $region30: #{mscp_forward.9} parent=0 // pred_check
    _
  $region31: #{mscp_forward.9} parent=0 // pred_check_branch
    %490 = sbr.rel (0) target = $region33
  $region32: #{mscp_forward.9} parent=0 // pred_region
    _
  $region33: #{mscp_forward.9} parent=0 // pred_fallthru
    _
  // Predicated region
  $region34: #{mscp_forward.9} parent=0 // pred_check
    _
  $region35: #{mscp_forward.9} parent=0 // pred_check_branch
    %492 = sbr.rel (0) target = $region37
  $region36: #{mscp_forward.9} parent=0 // pred_region
    _
  $region37: #{mscp_forward.9} parent=0 // pred_fallthru
    _

</llo_original>
